<compile_context>
chip_gen: v5e
topology: v5e:2x2
jax: 0.10.0
libtpu: 0.0.40
codegen_flags: <defaults>
</compile_context>

<pallas_src>
import functools

import jax
import jax.numpy as jnp
import numpy as np
from jax.experimental import pallas as pl
from jax.experimental.pallas import tpu as pltpu

EXPANSION = 1      # BasicBlock expansion
CP = 128           # every channel dim is padded to one lane width


# ----------------------------------------------------------------------------
# "ext-flat" activation layout helpers
#
# Per image, the zero-padded (H+2, W+2, CP) grid is flattened row-major into
# (Gh*Gw, CP) and padded with P zero rows on both ends.  With the grid border
# kept at zero, every 3x3 tap of a stride-1 conv is a contiguous row-slice of
# this buffer at a static offset (kh-1)*Gw + (kw-1).
# ----------------------------------------------------------------------------
def _geom(h, w):
    gh, gw = h + 2, w + 2
    pad = gw + 8                      # >= gw+1 keeps all tap offsets in bounds
    return gh, gw, gh * gw, pad


def _make_mask(gh, gw):
    """(Gh*Gw, 1) f32 mask: 1.0 on interior grid rows (real conv outputs)."""
    m = np.zeros((gh, gw), np.float32)
    m[1:gh - 1, 1:gw - 1] = 1.0
    return jnp.asarray(m.reshape(gh * gw, 1))


def _to_ext_flat(img, pad):
    """(N, H, W, CP) -> (N, pad + (H+2)(W+2) + pad, CP), zero border & pads."""
    n, h, w, c = img.shape
    g = jnp.pad(img, ((0, 0), (1, 1), (1, 1), (0, 0)))
    flat = g.reshape(n, (h + 2) * (w + 2), c)
    return jnp.pad(flat, ((0, 0), (pad, pad), (0, 0)))


def _build_phases(act_ext, gh, gw, p_in, goh, gow, p_out):
    """Even/odd row x col phases of the padded input grid, ext-flattened on the
    stride-2 output grid.  Plain-JAX glue, 1x the activation bytes."""
    n = act_ext.shape[0]
    grid = act_ext[:, p_in:p_in + gh * gw, :].reshape(n, gh, gw, CP)
    grid = jnp.pad(grid, ((0, 0), (0, 2 * goh - gh), (0, 2 * gow - gw), (0, 0)))
    phases = [grid[:, pp::2, qq::2, :].reshape(n, goh * gow, CP)
              for pp in range(2) for qq in range(2)]
    ph = jnp.stack(phases, axis=1)                     # (N, 4, Goh*Gow, CP)
    return jnp.pad(ph, ((0, 0), (0, 0), (p_out, p_out), (0, 0)))


# ----------------------------------------------------------------------------
# Pallas kernels
# ----------------------------------------------------------------------------
def _conv_taps(slice_fn, w_ref, mg):
    """Sum of 9 tap matmuls, f32 accumulation (bf16 operands -> MXU)."""
    acc = jnp.zeros((mg, CP), jnp.float32)
    for k in range(9):
        acc += jnp.dot(slice_fn(k), w_ref[k], preferred_element_type=jnp.float32)
    return acc


def _conv0_kernel(x_ref, w_ref, b_ref, m_ref, o_ref, *, gw, mg, p, mext):
    """layer0: 3x3 conv (stride 1) + folded BN bias + ReLU."""
    def tap(k):
        kh, kw = divmod(k, 3)
        d = (kh - 1) * gw + (kw - 1)
        return x_ref[0, p + d: p + d + mg, :]

    acc = _conv_taps(tap, w_ref, mg)
    y = jnp.maximum(acc + b_ref[...], 0.0) * m_ref[...]
    o_ref[0, 0:p, :] = jnp.zeros((p, CP), jnp.bfloat16)
    o_ref[0, p:p + mg, :] = y.astype(jnp.bfloat16)
    o_ref[0, p + mg:mext, :] = jnp.zeros((mext - p - mg, CP), jnp.bfloat16)


def _block_s1_kernel(x_ref, w1_ref, b1_ref, w2_ref, b2_ref, m_ref,
                     o_ref, h1_ref, *, gw, mg, p, mext):
    """Fused stride-1 BasicBlock (identity shortcut)."""
    def tap1(k):
        kh, kw = divmod(k, 3)
        d = (kh - 1) * gw + (kw - 1)
        return x_ref[0, p + d: p + d + mg, :]

    acc1 = _conv_taps(tap1, w1_ref, mg)
    h1 = (jnp.maximum(acc1 + b1_ref[...], 0.0) * m_ref[...]).astype(jnp.bfloat16)
    h1_ref[0:p, :] = jnp.zeros((p, CP), jnp.bfloat16)
    h1_ref[p:p + mg, :] = h1
    h1_ref[p + mg:mext, :] = jnp.zeros((mext - p - mg, CP), jnp.bfloat16)

    def tap2(k):
        kh, kw = divmod(k, 3)
        d = (kh - 1) * gw + (kw - 1)
        return h1_ref[p + d: p + d + mg, :]

    acc2 = _conv_taps(tap2, w2_ref, mg)
    res = x_ref[0, p:p + mg, :].astype(jnp.float32)
    y = jnp.maximum(acc2 + b2_ref[...] + res, 0.0) * m_ref[...]
    o_ref[0, 0:p, :] = jnp.zeros((p, CP), jnp.bfloat16)
    o_ref[0, p:p + mg, :] = y.astype(jnp.bfloat16)
    o_ref[0, p + mg:mext, :] = jnp.zeros((mext - p - mg, CP), jnp.bfloat16)


def _block_s2_kernel(ph_ref, w1_ref, b1_ref, w2_ref, b2_ref, wd_ref, bd_ref,
                     m_ref, o_ref, h1_ref, *, gow, mg, p, mext):
    """Fused stride-2 BasicBlock with 1x1 stride-2 downsample projection."""
    # conv1 (stride 2): taps read the phase-decomposed input grid
    def tap1(k):
        kh, kw = divmod(k, 3)
        phase = (kh & 1) * 2 + (kw & 1)
        d = ((kh >> 1) - 1) * gow + ((kw >> 1) - 1)
        return ph_ref[0, phase, p + d: p + d + mg, :]

    acc1 = _conv_taps(tap1, w1_ref, mg)
    h1 = (jnp.maximum(acc1 + b1_ref[...], 0.0) * m_ref[...]).astype(jnp.bfloat16)
    h1_ref[0:p, :] = jnp.zeros((p, CP), jnp.bfloat16)
    h1_ref[p:p + mg, :] = h1
    h1_ref[p + mg:mext, :] = jnp.zeros((mext - p - mg, CP), jnp.bfloat16)

    # conv2 (stride 1) on the VMEM-resident intermediate
    def tap2(k):
        kh, kw = divmod(k, 3)
        d = (kh - 1) * gow + (kw - 1)
        return h1_ref[p + d: p + d + mg, :]

    acc2 = _conv_taps(tap2, w2_ref, mg)

    # 1x1 stride-2 downsample identity = odd/odd phase, shifted by one grid row
    ident = jnp.dot(ph_ref[0, 3, p - gow - 1: p - gow - 1 + mg, :], wd_ref[...],
                    preferred_element_type=jnp.float32) + bd_ref[...]

    y = jnp.maximum(acc2 + b2_ref[...] + ident, 0.0) * m_ref[...]
    o_ref[0, 0:p, :] = jnp.zeros((p, CP), jnp.bfloat16)
    o_ref[0, p:p + mg, :] = y.astype(jnp.bfloat16)
    o_ref[0, p + mg:mext, :] = jnp.zeros((mext - p - mg, CP), jnp.bfloat16)


def _pool_fc_kernel(x_ref, w_ref, o_ref, *, inv_hw):
    # borders / pads of the ext-flat activation are zero, so a full-row sum
    # equals the sum over real pixels.
    pooled = jnp.sum(x_ref[...].astype(jnp.float32), axis=1) * inv_hw   # (N, CP)
    o_ref[...] = jnp.dot(pooled, w_ref[...], preferred_element_type=jnp.float32)


# ----------------------------------------------------------------------------
# pallas_call wrappers
# ----------------------------------------------------------------------------
_CPARAMS = pltpu.CompilerParams(dimension_semantics=("parallel",),
                                vmem_limit_bytes=32 * 1024 * 1024)


def conv0_call(x_ext, w, b, mask, gw, mg, p):
    n, mext, _ = x_ext.shape
    kern = functools.partial(_conv0_kernel, gw=gw, mg=mg, p=p, mext=mext)
    return pl.pallas_call(
        kern,
        out_shape=jax.ShapeDtypeStruct((n, mext, CP), jnp.bfloat16),
        grid=(n,),
        in_specs=[
            pl.BlockSpec((1, mext, CP), lambda i: (i, 0, 0)),
            pl.BlockSpec((9, CP, CP), lambda i: (0, 0, 0)),
            pl.BlockSpec((1, CP), lambda i: (0, 0)),
            pl.BlockSpec((mg, 1), lambda i: (0, 0)),
        ],
        out_specs=pl.BlockSpec((1, mext, CP), lambda i: (i, 0, 0)),
        compiler_params=_CPARAMS,
    )(x_ext, w, b, mask)


def block_s1_call(x_ext, w1, b1, w2, b2, mask, gw, mg, p):
    n, mext, _ = x_ext.shape
    kern = functools.partial(_block_s1_kernel, gw=gw, mg=mg, p=p, mext=mext)
    return pl.pallas_call(
        kern,
        out_shape=jax.ShapeDtypeStruct((n, mext, CP), jnp.bfloat16),
        grid=(n,),
        in_specs=[
            pl.BlockSpec((1, mext, CP), lambda i: (i, 0, 0)),
            pl.BlockSpec((9, CP, CP), lambda i: (0, 0, 0)),
            pl.BlockSpec((1, CP), lambda i: (0, 0)),
            pl.BlockSpec((9, CP, CP), lambda i: (0, 0, 0)),
            pl.BlockSpec((1, CP), lambda i: (0, 0)),
            pl.BlockSpec((mg, 1), lambda i: (0, 0)),
        ],
        out_specs=pl.BlockSpec((1, mext, CP), lambda i: (i, 0, 0)),
        scratch_shapes=[pltpu.VMEM((mext, CP), jnp.bfloat16)],
        compiler_params=_CPARAMS,
    )(x_ext, w1, b1, w2, b2, mask)


def block_s2_call(phases, w1, b1, w2, b2, wd, bd, mask, gow, mg, p):
    n, _, mext, _ = phases.shape
    kern = functools.partial(_block_s2_kernel, gow=gow, mg=mg, p=p, mext=mext)
    return pl.pallas_call(
        kern,
        out_shape=jax.ShapeDtypeStruct((n, mext, CP), jnp.bfloat16),
        grid=(n,),
        in_specs=[
            pl.BlockSpec((1, 4, mext, CP), lambda i: (i, 0, 0, 0)),
            pl.BlockSpec((9, CP, CP), lambda i: (0, 0, 0)),
            pl.BlockSpec((1, CP), lambda i: (0, 0)),
            pl.BlockSpec((9, CP, CP), lambda i: (0, 0, 0)),
            pl.BlockSpec((1, CP), lambda i: (0, 0)),
            pl.BlockSpec((CP, CP), lambda i: (0, 0)),
            pl.BlockSpec((1, CP), lambda i: (0, 0)),
            pl.BlockSpec((mg, 1), lambda i: (0, 0)),
        ],
        out_specs=pl.BlockSpec((1, mext, CP), lambda i: (i, 0, 0)),
        scratch_shapes=[pltpu.VMEM((mext, CP), jnp.bfloat16)],
        compiler_params=_CPARAMS,
    )(phases, w1, b1, w2, b2, wd, bd, mask)


def pool_fc_call(act_ext, w_fc, inv_hw):
    n = act_ext.shape[0]
    vmem = pl.BlockSpec(memory_space=pltpu.MemorySpace.VMEM)
    kern = functools.partial(_pool_fc_kernel, inv_hw=inv_hw)
    return pl.pallas_call(
        kern,
        out_shape=jax.ShapeDtypeStruct((n, CP), jnp.float32),
        in_specs=[vmem, vmem],
        out_specs=vmem,
    )(act_ext, w_fc)


# ----------------------------------------------------------------------------
# Parameter folding (BN scale -> weights, zero-pad channels to 128, cast bf16)
# ----------------------------------------------------------------------------
def _fold_conv3x3(w, bn):
    scale, bias = bn
    cin, cout = w.shape[2], w.shape[3]
    wf = (w * scale[None, None, None, :]).reshape(9, cin, cout)
    wf = jnp.pad(wf, ((0, 0), (0, CP - cin), (0, CP - cout)))
    b = jnp.pad(bias, (0, CP - cout)).reshape(1, CP)
    return wf.astype(jnp.bfloat16), b.astype(jnp.float32)


def _fold_1x1(w, bn):
    scale, bias = bn
    cin, cout = w.shape
    wf = jnp.pad(w * scale[None, :], ((0, CP - cin), (0, CP - cout)))
    b = jnp.pad(bias, (0, CP - cout)).reshape(1, CP)
    return wf.astype(jnp.bfloat16), b.astype(jnp.float32)


# ----------------------------------------------------------------------------
# Forward pass
# ----------------------------------------------------------------------------
def resnet_forward(params, x_nchw):
    n_classes = params['fc_w'].shape[1]
    x = jnp.transpose(x_nchw, (0, 2, 3, 1)).astype(jnp.float32)   # NCHW -> NHWC
    n, h, w, cin = x.shape
    x = jnp.pad(x, ((0, 0), (0, 0), (0, 0), (0, CP - cin))).astype(jnp.bfloat16)

    gh, gw, mg, p = _geom(h, w)
    act = _to_ext_flat(x, p)
    w0, b0 = _fold_conv3x3(params['layer0']['w'], params['layer0']['bn'])
    act = conv0_call(act, w0, b0, _make_mask(gh, gw), gw, mg, p)

    for blocks in params['layers']:
        for blk in blocks:
            w1, b1 = _fold_conv3x3(blk['conv1_w'], blk['bn1'])
            w2, b2 = _fold_conv3x3(blk['conv2_w'], blk['bn2'])
            if blk['stride'] == 1:
                # TODO(synk): stride-1 projection shortcut not needed for this
                # architecture (in_planes == out_planes whenever stride == 1).
                assert blk['downsample'] is None
                act = block_s1_call(act, w1, b1, w2, b2,
                                    _make_mask(gh, gw), gw, mg, p)
            else:
                assert h % 2 == 0 and w % 2 == 0
                ho, wo = h // 2, w // 2
                goh, gow, mg2, p2 = _geom(ho, wo)
                phases = _build_phases(act, gh, gw, p, goh, gow, p2)
                wd, bd = _fold_1x1(blk['downsample']['w'], blk['downsample']['bn'])
                act = block_s2_call(phases, w1, b1, w2, b2, wd, bd,
                                    _make_mask(goh, gow), gow, mg2, p2)
                h, w, gh, gw, mg, p = ho, wo, goh, gow, mg2, p2

    fc = jnp.pad(params['fc_w'],
                 ((0, CP - params['fc_w'].shape[0]),
                  (0, CP - params['fc_w'].shape[1]))).astype(jnp.float32)
    logits = pool_fc_call(act, fc, 1.0 / float(h * w))
    return logits[:, :n_classes]


# ----------------------------------------------------------------------------
# Parameter init (deterministic, in-script)
# ----------------------------------------------------------------------------
def _init_bn(key, c, eps=1e-5):
    k1, k2, k3, k4 = jax.random.split(key, 4)
    gamma = jax.random.uniform(k1, (c,), minval=0.5, maxval=1.5)
    beta = 0.1 * jax.random.normal(k2, (c,))
    mean = 0.1 * jax.random.normal(k3, (c,))
    var = jax.random.uniform(k4, (c,), minval=0.5, maxval=1.5)
    scale = gamma / jnp.sqrt(var + eps)
    bias = beta - mean * scale
    return (scale.astype(jnp.float32), bias.astype(jnp.float32))


def _init_conv3x3(key, cin, cout):
    fan_in = 9 * cin
    w = jax.random.normal(key, (3, 3, cin, cout)) * jnp.sqrt(2.0 / fan_in)
    return w.astype(jnp.float32)


def init_resnet(key, n_blocks, n_output_planes, n_classes):
    assert len(n_blocks) == 4 and len(n_output_planes) == 4
    keys = iter(jax.random.split(key, 512))
    params = {}
    c0 = n_output_planes[0]
    params['layer0'] = {'w': _init_conv3x3(next(keys), 3, c0),
                        'bn': _init_bn(next(keys), c0)}
    in_planes = c0
    layers = []
    for li, (nb, cout) in enumerate(zip(n_blocks, n_output_planes)):
        layer_stride = 1 if li == 0 else 2
        blocks = []
        for bi in range(nb):
            s = layer_stride if bi == 0 else 1
            blk = {
                'stride': s,
                'conv1_w': _init_conv3x3(next(keys), in_planes, cout),
                'bn1': _init_bn(next(keys), cout),
                'conv2_w': _init_conv3x3(next(keys), cout, cout),
                'bn2': _init_bn(next(keys), cout),
                'downsample': None,
            }
            if s != 1 or in_planes != cout * EXPANSION:
                wd = jax.random.normal(next(keys), (in_planes, cout * EXPANSION))
                blk['downsample'] = {
                    'w': (wd * jnp.sqrt(2.0 / in_planes)).astype(jnp.float32),
                    'bn': _init_bn(next(keys), cout * EXPANSION),
                }
            in_planes = cout * EXPANSION
            blocks.append(blk)
        layers.append(blocks)
    params['layers'] = layers
    params['fc_w'] = (jax.random.normal(next(keys), (in_planes, n_classes))
                      * jnp.sqrt(1.0 / in_planes)).astype(jnp.float32)
    return params


# ----------------------------------------------------------------------------
# Pure-JAX f32 reference (sanity check only)
# ----------------------------------------------------------------------------
def _ref_conv3x3(x, w, bn, stride, relu, residual=None):
    y = jax.lax.conv_general_dilated(x, w, (stride, stride), ((1, 1), (1, 1)),
                                     dimension_numbers=('NHWC', 'HWIO', 'NHWC'))
    y = y * bn[0] + bn[1]
    if residual is not None:
        y = y + residual
    return jnp.maximum(y, 0.0) if relu else y


def _ref_forward(params, x_nchw):
    x = jnp.transpose(x_nchw, (0, 2, 3, 1)).astype(jnp.float32)
    x = _ref_conv3x3(x, params['layer0']['w'], params['layer0']['bn'], 1, True)
    for blocks in params['layers']:
        for blk in blocks:
            s = blk['stride']
            if blk['downsample'] is not None:
                xs = x[:, ::s, ::s, :]
                ident = xs @ blk['downsample']['w']
                ident = ident * blk['downsample']['bn'][0] + blk['downsample']['bn'][1]
            else:
                ident = x
            out = _ref_conv3x3(x, blk['conv1_w'], blk['bn1'], s, True)
            x = _ref_conv3x3(out, blk['conv2_w'], blk['bn2'], 1, True, ident)
    pooled = jnp.mean(x, axis=(1, 2))
    return pooled @ params['fc_w']


# ----------------------------------------------------------------------------
if __name__ == "__main__":
    key = jax.random.PRNGKey(0)
    k_param, k_in = jax.random.split(key)

    # ResNet(BasicBlock, n_blocks=[1,1,1,1], n_output_planes=[8,16,32,64], n_classes=10)
    n_blocks = [1, 1, 1, 1]
    n_output_planes = [8, 16, 32, 64]
    n_classes = 10
    params = init_resnet(k_param, n_blocks, n_output_planes, n_classes)

    # PyTorch-style NCHW input: batch=2, channels=3 (RGB), spatial 16x16
    x = jax.random.normal(k_in, (2, 3, 16, 16), dtype=jnp.float32)

    out = jax.block_until_ready(resnet_forward(params, x))
    assert out.shape == (2, n_classes), out.shape

    ref = jax.block_until_ready(_ref_forward(params, x))
    # bf16 matmul operands (f32 accumulate) vs. an all-f32 reference.
    rel_err = float(jnp.max(jnp.abs(out - ref)) / (jnp.max(jnp.abs(ref)) + 1e-6))
    assert rel_err < 3e-2, f"mismatch vs reference: rel_err={rel_err}"

    print("KERNEL_OK")
</pallas_src>

<mosaic_0001>
module attributes {stable_mosaic.version = 11 : i64} {
  func.func @_conv0_kernel(%arg0: i32, %arg1: memref<1x376x128xbf16, #tpu.memory_space<vmem>>, %arg2: memref<9x128x128xbf16, #tpu.memory_space<vmem>>, %arg3: memref<1x128xf32, #tpu.memory_space<vmem>>, %arg4: memref<324x1xf32, #tpu.memory_space<vmem>>, %arg5: memref<1x376x128xbf16, #tpu.memory_space<vmem>>) attributes {dimension_semantics = [#tpu.dimension_semantics<parallel>], iteration_bounds = array<i64: 2>, scalar_prefetch = 0 : i64, scratch_operands = 0 : i64, tpu.core_type = #tpu.core_type<tc>, window_params = [{transform_indices = @transform_0, window_bounds = array<i64: 1, 376, 128>}, {pipeline_mode = #tpu.pipeline_mode<synchronous>, transform_indices = @transform_1, window_bounds = array<i64: 9, 128, 128>}, {pipeline_mode = #tpu.pipeline_mode<synchronous>, transform_indices = @transform_2, window_bounds = array<i64: 1, 128>}, {pipeline_mode = #tpu.pipeline_mode<synchronous>, transform_indices = @transform_3, window_bounds = array<i64: 324, 1>}, {transform_indices = @transform_4, window_bounds = array<i64: 1, 376, 128>}]} {
    %cst = arith.constant 0.000000e+00 : f32
    %0 = vector.broadcast %cst : f32 to vector<324x128xf32>
    %c0 = arith.constant 0 : index
    %c7 = arith.constant 7 : index
    %c0_0 = arith.constant 0 : index
    %1 = vector.load %arg1[%c0, %c7, %c0_0] : memref<1x376x128xbf16, #tpu.memory_space<vmem>>, vector<1x324x128xbf16>
    %2 = vector.shape_cast %1 : vector<1x324x128xbf16> to vector<324x128xbf16>
    %c0_1 = arith.constant 0 : index
    %c0_2 = arith.constant 0 : index
    %c0_3 = arith.constant 0 : index
    %3 = vector.load %arg2[%c0_1, %c0_2, %c0_3] : memref<9x128x128xbf16, #tpu.memory_space<vmem>>, vector<1x128x128xbf16>
    %4 = vector.shape_cast %3 : vector<1x128x128xbf16> to vector<128x128xbf16>
    %cst_4 = arith.constant dense<0.000000e+00> : vector<324x128xf32>
    %5 = tpu.matmul %2, %4, %cst_4 {dimension_numbers = #tpu.dot_dimension_numbers<[1], [0], [0], [1], [0, 0, 1, 1], [], []>} : vector<324x128xbf16>, vector<128x128xbf16>, vector<324x128xf32> -> vector<324x128xf32>
    %6 = arith.addf %0, %5 : vector<324x128xf32>
    %c0_5 = arith.constant 0 : index
    %c8 = arith.constant 8 : index
    %c0_6 = arith.constant 0 : index
    %7 = vector.load %arg1[%c0_5, %c8, %c0_6] : memref<1x376x128xbf16, #tpu.memory_space<vmem>>, vector<1x324x128xbf16>
    %8 = vector.shape_cast %7 : vector<1x324x128xbf16> to vector<324x128xbf16>
    %c1 = arith.constant 1 : index
    %c0_7 = arith.constant 0 : index
    %c0_8 = arith.constant 0 : index
    %9 = vector.load %arg2[%c1, %c0_7, %c0_8] : memref<9x128x128xbf16, #tpu.memory_space<vmem>>, vector<1x128x128xbf16>
    %10 = vector.shape_cast %9 : vector<1x128x128xbf16> to vector<128x128xbf16>
    %cst_9 = arith.constant dense<0.000000e+00> : vector<324x128xf32>
    %11 = tpu.matmul %8, %10, %cst_9 {dimension_numbers = #tpu.dot_dimension_numbers<[1], [0], [0], [1], [0, 0, 1, 1], [], []>} : vector<324x128xbf16>, vector<128x128xbf16>, vector<324x128xf32> -> vector<324x128xf32>
    %12 = arith.addf %6, %11 : vector<324x128xf32>
    %c0_10 = arith.constant 0 : index
    %c9 = arith.constant 9 : index
    %c0_11 = arith.constant 0 : index
    %13 = vector.load %arg1[%c0_10, %c9, %c0_11] : memref<1x376x128xbf16, #tpu.memory_space<vmem>>, vector<1x324x128xbf16>
    %14 = vector.shape_cast %13 : vector<1x324x128xbf16> to vector<324x128xbf16>
    %c2 = arith.constant 2 : index
    %c0_12 = arith.constant 0 : index
    %c0_13 = arith.constant 0 : index
    %15 = vector.load %arg2[%c2, %c0_12, %c0_13] : memref<9x128x128xbf16, #tpu.memory_space<vmem>>, vector<1x128x128xbf16>
    %16 = vector.shape_cast %15 : vector<1x128x128xbf16> to vector<128x128xbf16>
    %cst_14 = arith.constant dense<0.000000e+00> : vector<324x128xf32>
    %17 = tpu.matmul %14, %16, %cst_14 {dimension_numbers = #tpu.dot_dimension_numbers<[1], [0], [0], [1], [0, 0, 1, 1], [], []>} : vector<324x128xbf16>, vector<128x128xbf16>, vector<324x128xf32> -> vector<324x128xf32>
    %18 = arith.addf %12, %17 : vector<324x128xf32>
    %c0_15 = arith.constant 0 : index
    %c25 = arith.constant 25 : index
    %c0_16 = arith.constant 0 : index
    %19 = vector.load %arg1[%c0_15, %c25, %c0_16] : memref<1x376x128xbf16, #tpu.memory_space<vmem>>, vector<1x324x128xbf16>
    %20 = vector.shape_cast %19 : vector<1x324x128xbf16> to vector<324x128xbf16>
    %c3 = arith.constant 3 : index
    %c0_17 = arith.constant 0 : index
    %c0_18 = arith.constant 0 : index
    %21 = vector.load %arg2[%c3, %c0_17, %c0_18] : memref<9x128x128xbf16, #tpu.memory_space<vmem>>, vector<1x128x128xbf16>
    %22 = vector.shape_cast %21 : vector<1x128x128xbf16> to vector<128x128xbf16>
    %cst_19 = arith.constant dense<0.000000e+00> : vector<324x128xf32>
    %23 = tpu.matmul %20, %22, %cst_19 {dimension_numbers = #tpu.dot_dimension_numbers<[1], [0], [0], [1], [0, 0, 1, 1], [], []>} : vector<324x128xbf16>, vector<128x128xbf16>, vector<324x128xf32> -> vector<324x128xf32>
    %24 = arith.addf %18, %23 : vector<324x128xf32>
    %c0_20 = arith.constant 0 : index
    %c26 = arith.constant 26 : index
    %c0_21 = arith.constant 0 : index
    %25 = vector.load %arg1[%c0_20, %c26, %c0_21] : memref<1x376x128xbf16, #tpu.memory_space<vmem>>, vector<1x324x128xbf16>
    %26 = vector.shape_cast %25 : vector<1x324x128xbf16> to vector<324x128xbf16>
    %c4 = arith.constant 4 : index
    %c0_22 = arith.constant 0 : index
    %c0_23 = arith.constant 0 : index
    %27 = vector.load %arg2[%c4, %c0_22, %c0_23] : memref<9x128x128xbf16, #tpu.memory_space<vmem>>, vector<1x128x128xbf16>
    %28 = vector.shape_cast %27 : vector<1x128x128xbf16> to vector<128x128xbf16>
    %cst_24 = arith.constant dense<0.000000e+00> : vector<324x128xf32>
    %29 = tpu.matmul %26, %28, %cst_24 {dimension_numbers = #tpu.dot_dimension_numbers<[1], [0], [0], [1], [0, 0, 1, 1], [], []>} : vector<324x128xbf16>, vector<128x128xbf16>, vector<324x128xf32> -> vector<324x128xf32>
    %30 = arith.addf %24, %29 : vector<324x128xf32>
    %c0_25 = arith.constant 0 : index
    %c27 = arith.constant 27 : index
    %c0_26 = arith.constant 0 : index
    %31 = vector.load %arg1[%c0_25, %c27, %c0_26] : memref<1x376x128xbf16, #tpu.memory_space<vmem>>, vector<1x324x128xbf16>
    %32 = vector.shape_cast %31 : vector<1x324x128xbf16> to vector<324x128xbf16>
    %c5 = arith.constant 5 : index
    %c0_27 = arith.constant 0 : index
    %c0_28 = arith.constant 0 : index
    %33 = vector.load %arg2[%c5, %c0_27, %c0_28] : memref<9x128x128xbf16, #tpu.memory_space<vmem>>, vector<1x128x128xbf16>
    %34 = vector.shape_cast %33 : vector<1x128x128xbf16> to vector<128x128xbf16>
    %cst_29 = arith.constant dense<0.000000e+00> : vector<324x128xf32>
    %35 = tpu.matmul %32, %34, %cst_29 {dimension_numbers = #tpu.dot_dimension_numbers<[1], [0], [0], [1], [0, 0, 1, 1], [], []>} : vector<324x128xbf16>, vector<128x128xbf16>, vector<324x128xf32> -> vector<324x128xf32>
    %36 = arith.addf %30, %35 : vector<324x128xf32>
    %c0_30 = arith.constant 0 : index
    %c43 = arith.constant 43 : index
    %c0_31 = arith.constant 0 : index
    %37 = vector.load %arg1[%c0_30, %c43, %c0_31] : memref<1x376x128xbf16, #tpu.memory_space<vmem>>, vector<1x324x128xbf16>
    %38 = vector.shape_cast %37 : vector<1x324x128xbf16> to vector<324x128xbf16>
    %c6 = arith.constant 6 : index
    %c0_32 = arith.constant 0 : index
    %c0_33 = arith.constant 0 : index
    %39 = vector.load %arg2[%c6, %c0_32, %c0_33] : memref<9x128x128xbf16, #tpu.memory_space<vmem>>, vector<1x128x128xbf16>
    %40 = vector.shape_cast %39 : vector<1x128x128xbf16> to vector<128x128xbf16>
    %cst_34 = arith.constant dense<0.000000e+00> : vector<324x128xf32>
    %41 = tpu.matmul %38, %40, %cst_34 {dimension_numbers = #tpu.dot_dimension_numbers<[1], [0], [0], [1], [0, 0, 1, 1], [], []>} : vector<324x128xbf16>, vector<128x128xbf16>, vector<324x128xf32> -> vector<324x128xf32>
    %42 = arith.addf %36, %41 : vector<324x128xf32>
    %c0_35 = arith.constant 0 : index
    %c44 = arith.constant 44 : index
    %c0_36 = arith.constant 0 : index
    %43 = vector.load %arg1[%c0_35, %c44, %c0_36] : memref<1x376x128xbf16, #tpu.memory_space<vmem>>, vector<1x324x128xbf16>
    %44 = vector.shape_cast %43 : vector<1x324x128xbf16> to vector<324x128xbf16>
    %c7_37 = arith.constant 7 : index
    %c0_38 = arith.constant 0 : index
    %c0_39 = arith.constant 0 : index
    %45 = vector.load %arg2[%c7_37, %c0_38, %c0_39] : memref<9x128x128xbf16, #tpu.memory_space<vmem>>, vector<1x128x128xbf16>
    %46 = vector.shape_cast %45 : vector<1x128x128xbf16> to vector<128x128xbf16>
    %cst_40 = arith.constant dense<0.000000e+00> : vector<324x128xf32>
    %47 = tpu.matmul %44, %46, %cst_40 {dimension_numbers = #tpu.dot_dimension_numbers<[1], [0], [0], [1], [0, 0, 1, 1], [], []>} : vector<324x128xbf16>, vector<128x128xbf16>, vector<324x128xf32> -> vector<324x128xf32>
    %48 = arith.addf %42, %47 : vector<324x128xf32>
    %c0_41 = arith.constant 0 : index
    %c45 = arith.constant 45 : index
    %c0_42 = arith.constant 0 : index
    %49 = vector.load %arg1[%c0_41, %c45, %c0_42] : memref<1x376x128xbf16, #tpu.memory_space<vmem>>, vector<1x324x128xbf16>
    %50 = vector.shape_cast %49 : vector<1x324x128xbf16> to vector<324x128xbf16>
    %c8_43 = arith.constant 8 : index
    %c0_44 = arith.constant 0 : index
    %c0_45 = arith.constant 0 : index
    %51 = vector.load %arg2[%c8_43, %c0_44, %c0_45] : memref<9x128x128xbf16, #tpu.memory_space<vmem>>, vector<1x128x128xbf16>
    %52 = vector.shape_cast %51 : vector<1x128x128xbf16> to vector<128x128xbf16>
    %cst_46 = arith.constant dense<0.000000e+00> : vector<324x128xf32>
    %53 = tpu.matmul %50, %52, %cst_46 {dimension_numbers = #tpu.dot_dimension_numbers<[1], [0], [0], [1], [0, 0, 1, 1], [], []>} : vector<324x128xbf16>, vector<128x128xbf16>, vector<324x128xf32> -> vector<324x128xf32>
    %54 = arith.addf %48, %53 : vector<324x128xf32>
    %c0_47 = arith.constant 0 : index
    %c0_48 = arith.constant 0 : index
    %55 = vector.load %arg3[%c0_47, %c0_48] : memref<1x128xf32, #tpu.memory_space<vmem>>, vector<1x128xf32>
    %56 = vector.broadcast %55 : vector<1x128xf32> to vector<324x128xf32>
    %57 = arith.addf %54, %56 : vector<324x128xf32>
    %cst_49 = arith.constant 0.000000e+00 : f32
    %58 = vector.broadcast %cst_49 : f32 to vector<324x128xf32>
    %59 = arith.maximumf %57, %58 : vector<324x128xf32>
    %c0_50 = arith.constant 0 : index
    %c0_51 = arith.constant 0 : index
    %60 = vector.load %arg4[%c0_50, %c0_51] : memref<324x1xf32, #tpu.memory_space<vmem>>, vector<324x1xf32>
    %61 = vector.broadcast %60 : vector<324x1xf32> to vector<324x128xf32>
    %62 = arith.mulf %59, %61 : vector<324x128xf32>
    %cst_52 = arith.constant 0.000000e+00 : bf16
    %63 = vector.broadcast %cst_52 : bf16 to vector<26x128xbf16>
    %c0_53 = arith.constant 0 : index
    %c0_54 = arith.constant 0 : index
    %c0_55 = arith.constant 0 : index
    %64 = vector.load %arg5[%c0_53, %c0_54, %c0_55] : memref<1x376x128xbf16, #tpu.memory_space<vmem>>, vector<1x26x128xbf16>
    %65 = vector.shape_cast %64 : vector<1x26x128xbf16> to vector<26x128xbf16>
    %66 = vector.shape_cast %63 : vector<26x128xbf16> to vector<1x26x128xbf16>
    tpu.vector_store %arg5[%c0_53, %c0_54, %c0_55], %66 {strides = array<i32>} : memref<1x376x128xbf16, #tpu.memory_space<vmem>>, vector<1x26x128xbf16>,
    %67 = arith.truncf %62 : vector<324x128xf32> to vector<324x128xbf16>
    %c0_56 = arith.constant 0 : index
    %c26_57 = arith.constant 26 : index
    %c0_58 = arith.constant 0 : index
    %68 = vector.load %arg5[%c0_56, %c26_57, %c0_58] : memref<1x376x128xbf16, #tpu.memory_space<vmem>>, vector<1x324x128xbf16>
    %69 = vector.shape_cast %68 : vector<1x324x128xbf16> to vector<324x128xbf16>
    %70 = vector.shape_cast %67 : vector<324x128xbf16> to vector<1x324x128xbf16>
    tpu.vector_store %arg5[%c0_56, %c26_57, %c0_58], %70 {strides = array<i32>} : memref<1x376x128xbf16, #tpu.memory_space<vmem>>, vector<1x324x128xbf16>,
    %cst_59 = arith.constant 0.000000e+00 : bf16
    %71 = vector.broadcast %cst_59 : bf16 to vector<26x128xbf16>
    %c0_60 = arith.constant 0 : index
    %c350 = arith.constant 350 : index
    %c0_61 = arith.constant 0 : index
    %72 = vector.load %arg5[%c0_60, %c350, %c0_61] : memref<1x376x128xbf16, #tpu.memory_space<vmem>>, vector<1x26x128xbf16>
    %73 = vector.shape_cast %72 : vector<1x26x128xbf16> to vector<26x128xbf16>
    %74 = vector.shape_cast %71 : vector<26x128xbf16> to vector<1x26x128xbf16>
    tpu.vector_store %arg5[%c0_60, %c350, %c0_61], %74 {strides = array<i32>} : memref<1x376x128xbf16, #tpu.memory_space<vmem>>, vector<1x26x128xbf16>,
    return
  }
  func.func @transform_0(%arg0: i32) -> (i32, i32, i32) {
    %c0_i32 = arith.constant 0 : i32
    %c0_i32_0 = arith.constant 0 : i32
    %c0_i32_1 = arith.constant 0 : i32
    return %arg0, %c0_i32, %c0_i32_0 : i32, i32, i32
  }
  func.func @transform_1(%arg0: i32) -> (i32, i32, i32) {
    %c0_i32 = arith.constant 0 : i32
    %c0_i32_0 = arith.constant 0 : i32
    %c0_i32_1 = arith.constant 0 : i32
    %c0_i32_2 = arith.constant 0 : i32
    return %c0_i32, %c0_i32_0, %c0_i32_1 : i32, i32, i32
  }
  func.func @transform_2(%arg0: i32) -> (i32, i32) {
    %c0_i32 = arith.constant 0 : i32
    %c0_i32_0 = arith.constant 0 : i32
    %c0_i32_1 = arith.constant 0 : i32
    return %c0_i32, %c0_i32_0 : i32, i32
  }
  func.func @transform_3(%arg0: i32) -> (i32, i32) {
    %c0_i32 = arith.constant 0 : i32
    %c0_i32_0 = arith.constant 0 : i32
    %c0_i32_1 = arith.constant 0 : i32
    return %c0_i32, %c0_i32_0 : i32, i32
  }
  func.func @transform_4(%arg0: i32) -> (i32, i32, i32) {
    %c0_i32 = arith.constant 0 : i32
    %c0_i32_0 = arith.constant 0 : i32
    %c0_i32_1 = arith.constant 0 : i32
    return %arg0, %c0_i32, %c0_i32_0 : i32, i32, i32
  }
}

</mosaic_0001>

<llo_original>
// kernel: tpu_custom_call.1
$region0: #{tpu_custom_call.1}
  #allocation0 [shape = 'u32[]', space=smem, size = 0x4, offset = 0x4, fixed_abs, tag = 'smem constant byte address 0x4 - core index']
  #allocation1 [shape = 'u32[72,128]{1,0:T(1,128)}', space=vmem, size = 0x9000, scoped, tag = 'internal scratch']
  %s0 = inlined_call_operand.hbm [shape: bf16[2,376,128], index: 0, kind: input, shape index: {}]
  %s1 = inlined_call_operand.hbm [shape: bf16[9,128,128], index: 1, kind: input, shape index: {}]
  %s2 = inlined_call_operand.vmem [shape: f32[1,128], index: 2, kind: input, shape index: {}]
  %s3 = inlined_call_operand.vmem [shape: f32[324,1], index: 3, kind: input, shape index: {}]
  %s4 = inlined_call_operand.hbm [shape: bf16[2,376,128], index: 4, kind: output, shape index: {}]
  %s5 = sld [smem:[#allocation0]]
  $region57: #{tpu_custom_call.1} parent=0
    _
  %s7 = ssub.s32 1, %s5
  %s8 = scalar_select 0, %s7, %s5
  $region1: #{tpu_custom_call.1} parent=0
    #allocation2 [shape = 'u8[192512]{0}', space=vmem, size = 0x2f000, scoped, tag = 'input window, operand 0']
    #allocation3 [shape = 's32[2]{0}', space=sflag, size = 0x8, scoped, tag = 'scoped memory for tpu_custom_call.1']
    #allocation4 [shape = 's32[2]{0}', space=sflag, size = 0x8, scoped, tag = 'scoped memory for tpu_custom_call.1']
    #allocation5 [shape = 'u8[294912]{0}', space=vmem, size = 0x48000, scoped, tag = 'input window, operand 1, single buffered']
    #allocation6 [shape = 's32[1]{0}', space=sflag, size = 0x4, scoped, tag = 'scoped memory for tpu_custom_call.1']
    #allocation7 [shape = 'u8[192512]{0}', space=vmem, size = 0x2f000, scoped, tag = 'output window, operand 0']
    %9 = vsyncpa [#allocation3], 0
    %s10 = scalar_lea.sflag [#allocation3], 1
    %11 = vsyncpa %s10, 0
    %12 = vsyncpa [#allocation6], 0
    %13 = vsyncpa [#allocation4], 0
    %s14 = scalar_lea.sflag [#allocation4], 1
    %15 = vsyncpa %s14, 0
    loop: start=0, step=1, limit=4
    $region2: #{tpu_custom_call.1} parent=1 // loop_pre_header
      _
    $region3: #{tpu_custom_call.1} parent=1 // loop_header
      %s17 = sphi 0, %s21
      %p18 = scmp.ge.s32.totalorder %s17, 4
      %s27 = sphi 0, %s29
      %s30 = sphi 0, %s27
      %s31 = sphi 0, %s30
      %s47 = sphi 0, %s31
      %s51 = sphi 0, %s51
      %s53 = sphi 0, %s51
      %s54 = sphi 0, %s53
      %s68 = sphi 0, %s54
      %s72 = sphi 0, %s72
      %s74 = sphi 0, %s72
      %s75 = sphi 0, %s74
      %s89 = sphi 0, %s75
      %s93 = sphi 0, %s93
      %s95 = sphi 0, %s93
      %s96 = sphi 0, %s95
      %s110 = sphi 0, %s96
      %s116 = sphi 0, %s118
      %s119 = sphi 0, %s116
      %s120 = sphi 0, %s119
      %s136 = sphi 0, %s120
    $region4: #{tpu_custom_call.1} parent=1 // loop_header_branch
      %20 = sbr.rel (%p18) target = $region8
    $region5: #{tpu_custom_call.1} parent=1 // loop_body
      %s22 = ssub.s32 %s17, 1
      %s23 = ssub.s32 %s17, 2
      %s24 = sadd.s32 %s17, 1
      %s25 = ssub.s32 %s17, %s24
      %p26 = scmp.eq.s32.totalorder %s25, 0
      %s28 = sadd.s32 %s27, 1
      %s29 = scalar_select %p26, %s27, %s28
      %p32 = pneg %p26
      %p33 = scmp.eq.s32.totalorder %s17, 1
      %p34 = por %p32, %p33
      %p35 = scmp.ne.s32.totalorder %s27, %s30
      %p36 = scmp.eq.s32.totalorder %s17, 0
      %p37 = por %p35, %p36
      %p38 = scmp.ne.s32.totalorder %s27, %s30
      %p39 = scmp.eq.s32.totalorder %s22, 1
      %p40 = por %p38, %p39
      %p41 = scmp.ne.s32.totalorder %s30, %s31
      %p42 = scmp.eq.s32.totalorder %s22, 0
      %p43 = por %p41, %p42
      %p44 = scmp.ne.s32.totalorder %s30, %s31
      %p45 = scmp.eq.s32.totalorder %s23, 1
      %p46 = por %p44, %p45
      %p48 = scmp.ne.s32.totalorder %s31, %s47
      %p49 = scmp.eq.s32.totalorder %s23, 0
      %p50 = por %p48, %p49
      %s52 = sadd.s32 %s51, 1
      %p55 = scmp.eq.s32.totalorder %s17, 1
      %p56 = scmp.ne.s32.totalorder %s51, %s53
      %p57 = scmp.eq.s32.totalorder %s17, 0
      %p58 = por %p56, %p57
      %p59 = scmp.ne.s32.totalorder %s51, %s53
      %p60 = scmp.eq.s32.totalorder %s22, 1
      %p61 = por %p59, %p60
      %p62 = scmp.ne.s32.totalorder %s53, %s54
      %p63 = scmp.eq.s32.totalorder %s22, 0
      %p64 = por %p62, %p63
      %p65 = scmp.ne.s32.totalorder %s53, %s54
      %p66 = scmp.eq.s32.totalorder %s23, 1
      %p67 = por %p65, %p66
      %p69 = scmp.ne.s32.totalorder %s54, %s68
      %p70 = scmp.eq.s32.totalorder %s23, 0
      %p71 = por %p69, %p70
      %s73 = sadd.s32 %s72, 1
      %p76 = scmp.eq.s32.totalorder %s17, 1
      %p77 = scmp.ne.s32.totalorder %s72, %s74
      %p78 = scmp.eq.s32.totalorder %s17, 0
      %p79 = por %p77, %p78
      %p80 = scmp.ne.s32.totalorder %s72, %s74
      %p81 = scmp.eq.s32.totalorder %s22, 1
      %p82 = por %p80, %p81
      %p83 = scmp.ne.s32.totalorder %s74, %s75
      %p84 = scmp.eq.s32.totalorder %s22, 0
      %p85 = por %p83, %p84
      %p86 = scmp.ne.s32.totalorder %s74, %s75
      %p87 = scmp.eq.s32.totalorder %s23, 1
      %p88 = por %p86, %p87
      %p90 = scmp.ne.s32.totalorder %s75, %s89
      %p91 = scmp.eq.s32.totalorder %s23, 0
      %p92 = por %p90, %p91
      %s94 = sadd.s32 %s93, 1
      %p97 = scmp.eq.s32.totalorder %s17, 1
      %p98 = scmp.ne.s32.totalorder %s93, %s95
      %p99 = scmp.eq.s32.totalorder %s17, 0
      %p100 = por %p98, %p99
      %p101 = scmp.ne.s32.totalorder %s93, %s95
      %p102 = scmp.eq.s32.totalorder %s22, 1
      %p103 = por %p101, %p102
      %p104 = scmp.ne.s32.totalorder %s95, %s96
      %p105 = scmp.eq.s32.totalorder %s22, 0
      %p106 = por %p104, %p105
      %p107 = scmp.ne.s32.totalorder %s95, %s96
      %p108 = scmp.eq.s32.totalorder %s23, 1
      %p109 = por %p107, %p108
      %p111 = scmp.ne.s32.totalorder %s96, %s110
      %p112 = scmp.eq.s32.totalorder %s23, 0
      %p113 = por %p111, %p112
      %s114 = ssub.s32 %s17, %s24
      %p115 = scmp.eq.s32.totalorder %s114, 0
      %s117 = sadd.s32 %s116, 1
      %s118 = scalar_select %p115, %s116, %s117
      %p121 = pneg %p115
      %p122 = scmp.eq.s32.totalorder %s17, 1
      %p123 = por %p121, %p122
      %p124 = scmp.ne.s32.totalorder %s116, %s119
      %p125 = scmp.eq.s32.totalorder %s17, 0
      %p126 = por %p124, %p125
      %p127 = scmp.ne.s32.totalorder %s116, %s119
      %p128 = scmp.eq.s32.totalorder %s22, 1
      %p129 = por %p127, %p128
      %p130 = scmp.ne.s32.totalorder %s119, %s120
      %p131 = scmp.eq.s32.totalorder %s22, 0
      %p132 = por %p130, %p131
      %p133 = scmp.ne.s32.totalorder %s119, %s120
      %p134 = scmp.eq.s32.totalorder %s23, 1
      %p135 = por %p133, %p134
      %p137 = scmp.ne.s32.totalorder %s120, %s136
      %p138 = scmp.eq.s32.totalorder %s23, 0
      %p139 = por %p137, %p138
      %p140 = scmp.le.s32.totalorder 1, %s17
      %p141 = scmp.lt.s32.totalorder %s17, 3
      %p142 = pnand %p140, %p141
      %p143 = pneg %p142
      // Predicated region
      $region9: #{tpu_custom_call.1} parent=5 // pred_check
        _
      $region10: #{tpu_custom_call.1} parent=5 // pred_check_branch
        %145 = sbr.rel (%p142) target = $region12
      $region11: #{tpu_custom_call.1} parent=5 // pred_region
        %s146 = ssub.s32 %s17, 1
        // Predicated region
        $region13: #{tpu_custom_call.1} parent=11 // pred_check
          %p147 = pneg %p64
        $region14: #{tpu_custom_call.1} parent=11 // pred_check_branch
          %149 = sbr.rel (%p147) target = $region16
        $region15: #{tpu_custom_call.1} parent=11 // pred_region
          %151 = vsyncadd [#allocation6], 0
          %s152 = sshll.u32 %s1, 4
          %s153 = int_to_ptr.hbm [resolvable:$true] %s152
          %s154 = sshll.u32 [#allocation5], 4
          %s155 = int_to_ptr.vmem [resolvable:$true] %s154
          %160 = dma.hbm_to_vmem [thread:$0]  %s153, 9216, %s155, [#allocation6], 64, 64, 4
        $region16: #{tpu_custom_call.1} parent=11 // pred_fallthru
          _
        // Predicated region
        $region17: #{tpu_custom_call.1} parent=11 // pred_check
          %p161 = pneg %p85
        $region18: #{tpu_custom_call.1} parent=11 // pred_check_branch
          %163 = sbr.rel (%p161) target = $region20
        $region19: #{tpu_custom_call.1} parent=11 // pred_region
          _
        $region20: #{tpu_custom_call.1} parent=11 // pred_fallthru
          _
        // Predicated region
        $region21: #{tpu_custom_call.1} parent=11 // pred_check
          %p164 = pneg %p106
        $region22: #{tpu_custom_call.1} parent=11 // pred_check_branch
          %166 = sbr.rel (%p164) target = $region24
        $region23: #{tpu_custom_call.1} parent=11 // pred_region
          _
        $region24: #{tpu_custom_call.1} parent=11 // pred_fallthru
          _
      $region12: #{tpu_custom_call.1} parent=5 // pred_fallthru
        _
      %p167 = scmp.lt.s32.totalorder %s17, 2
      // Predicated region
      $region25: #{tpu_custom_call.1} parent=5 // pred_check
        %p168 = pneg %p167
      $region26: #{tpu_custom_call.1} parent=5 // pred_check_branch
        %170 = sbr.rel (%p168) target = $region28
      $region27: #{tpu_custom_call.1} parent=5 // pred_region
        // Predicated region
        $region29: #{tpu_custom_call.1} parent=27 // pred_check
          %p171 = pneg %p37
        $region30: #{tpu_custom_call.1} parent=27 // pred_check_branch
          %173 = sbr.rel (%p171) target = $region32
        $region31: #{tpu_custom_call.1} parent=27 // pred_region
          %s174 = sand.u32 %s27, 1
          %s175 = scalar_lea.sflag [#allocation3], %s174
          %s176 = sand.u32 %s27, 1
          %s177 = smul.addr %s176, 188
          %s178 = scalar_lea.vmem [#allocation2], %s177
          %180 = vsyncadd %s175, 0
          %s181 = smul.addr %s17, 47
          %s182 = smul.addr %s181, 4
          %s183 = scalar_lea.hbm %s0, %s182
          %s184 = sshll.u32 %s183, 4
          %s185 = int_to_ptr.hbm [resolvable:$true] %s184
          %s186 = sshll.u32 %s178, 4
          %s187 = int_to_ptr.vmem [resolvable:$true] %s186
          %192 = dma.hbm_to_vmem [thread:$0]  %s185, 3008, %s187, %s175, 64, 64, 4
        $region32: #{tpu_custom_call.1} parent=27 // pred_fallthru
          _
      $region28: #{tpu_custom_call.1} parent=5 // pred_fallthru
        _
      %p193 = scmp.le.s32.totalorder 1, %s17
      %p194 = scmp.lt.s32.totalorder %s17, 3
      %p195 = pnand %p193, %p194
      %p196 = pneg %p195
      // Predicated region
      $region33: #{tpu_custom_call.1} parent=5 // pred_check
        _
      $region34: #{tpu_custom_call.1} parent=5 // pred_check_branch
        %198 = sbr.rel (%p195) target = $region36
      $region35: #{tpu_custom_call.1} parent=5 // pred_region
        %s199 = ssub.s32 %s17, 1
        %s200 = sand.u32 %s30, 1
        %s201 = scalar_lea.sflag [#allocation3], %s200
        %s202 = sand.u32 %s30, 1
        %s203 = smul.addr %s202, 188
        %s204 = scalar_lea.vmem [#allocation2], %s203
        // Predicated region
        $region37: #{tpu_custom_call.1} parent=35 // pred_check
          %p205 = pneg %p43
        $region38: #{tpu_custom_call.1} parent=35 // pred_check_branch
          %207 = sbr.rel (%p205) target = $region40
        $region39: #{tpu_custom_call.1} parent=35 // pred_region
          %209 = dma.done %s201, 3008
        $region40: #{tpu_custom_call.1} parent=35 // pred_fallthru
          _
        // Predicated region
        $region41: #{tpu_custom_call.1} parent=35 // pred_check
          %p210 = pneg %p64
        $region42: #{tpu_custom_call.1} parent=35 // pred_check_branch
          %212 = sbr.rel (%p210) target = $region44
        $region43: #{tpu_custom_call.1} parent=35 // pred_region
          %214 = dma.done [#allocation6], 9216
        $region44: #{tpu_custom_call.1} parent=35 // pred_fallthru
          _
        %s215 = sand.u32 %s30, 1
        %s216 = scalar_lea.sflag [#allocation3], %s215
        %s217 = sand.u32 %s30, 1
        %s218 = smul.addr %s217, 188
        %s219 = scalar_lea.vmem [#allocation2], %s218
        %p220 = pneg %p43
        %p221 = pneg %p40
        %p222 = pneg %p64
        %p223 = pneg %p61
        %p224 = pneg %p85
        %p225 = pneg %p82
        %p226 = pneg %p106
        %p227 = pneg %p103
        %p228 = pneg %p132
        %p229 = pneg %p129
        %s230 = sand.u32 %s119, 1
        %s231 = scalar_lea.sflag [#allocation4], %s230
        %s232 = sand.u32 %s119, 1
        %s233 = smul.addr %s232, 188
        %s234 = scalar_lea.vmem [#allocation7], %s233
        %v236 = vld [vmem:[%s204] sm:$0x8]
        %v237 = vld [vmem:[%s204 + $0x4] sm:$0xf]
        %v238 = vld [vmem:[%s204 + $0x8] sm:$0xf]
        %v239 = vld [vmem:[%s204 + $0xc] sm:$0xf]
        %v240 = vld [vmem:[%s204 + $0x10] sm:$0xf]
        %v241 = vld [vmem:[%s204 + $0x14] sm:$0xf]
        %v242 = vld [vmem:[%s204 + $0x18] sm:$0xf]
        %v243 = vld [vmem:[%s204 + $0x1c] sm:$0xf]
        %v244 = vld [vmem:[%s204 + $0x20] sm:$0xf]
        %v245 = vld [vmem:[%s204 + $0x24] sm:$0xf]
        %v246 = vld [vmem:[%s204 + $0x28] sm:$0xf]
        %v247 = vld [vmem:[%s204 + $0x2c] sm:$0xf]
        %v248 = vld [vmem:[%s204 + $0x30] sm:$0xf]
        %v249 = vld [vmem:[%s204 + $0x34] sm:$0xf]
        %v250 = vld [vmem:[%s204 + $0x38] sm:$0xf]
        %v251 = vld [vmem:[%s204 + $0x3c] sm:$0xf]
        %v252 = vld [vmem:[%s204 + $0x40] sm:$0xf]
        %v253 = vld [vmem:[%s204 + $0x44] sm:$0xf]
        %v254 = vld [vmem:[%s204 + $0x48] sm:$0xf]
        %v255 = vld [vmem:[%s204 + $0x4c] sm:$0xf]
        %v256 = vld [vmem:[%s204 + $0x50] sm:$0xf]
        %v257 = vld [vmem:[%s204 + $0x54] sm:$0xf]
        %v258 = vld [vmem:[%s204 + $0x58] sm:$0xf]
        %v259 = vld [vmem:[%s204 + $0x5c] sm:$0xf]
        %v260 = vld [vmem:[%s204 + $0x60] sm:$0xf]
        %v261 = vld [vmem:[%s204 + $0x64] sm:$0xf]
        %v262 = vld [vmem:[%s204 + $0x68] sm:$0xf]
        %v263 = vld [vmem:[%s204 + $0x6c] sm:$0xf]
        %v264 = vld [vmem:[%s204 + $0x70] sm:$0xf]
        %v265 = vld [vmem:[%s204 + $0x74] sm:$0xf]
        %v266 = vld [vmem:[%s204 + $0x78] sm:$0xf]
        %v267 = vld [vmem:[%s204 + $0x7c] sm:$0xf]
        %v268 = vld [vmem:[%s204 + $0x80] sm:$0xf]
        %v269 = vld [vmem:[%s204 + $0x84] sm:$0xf]
        %v270 = vld [vmem:[%s204 + $0x88] sm:$0xf]
        %v271 = vld [vmem:[%s204 + $0x8c] sm:$0xf]
        %v272 = vld [vmem:[%s204 + $0x90] sm:$0xf]
        %v273 = vld [vmem:[%s204 + $0x94] sm:$0xf]
        %v274 = vld [vmem:[%s204 + $0x98] sm:$0xf]
        %v275 = vld [vmem:[%s204 + $0x9c] sm:$0xf]
        %v276 = vld [vmem:[%s204 + $0xa0] sm:$0xf]
        %v277 = vld [vmem:[%s204 + $0xa4] sm:$0x3]
        %v278 = vld [vmem:[#allocation5] sm:$0xf]
        %v279 = vld [vmem:[#allocation5 + $0x4] sm:$0xf]
        %v280 = vld [vmem:[#allocation5 + $0x8] sm:$0xf]
        %v281 = vld [vmem:[#allocation5 + $0xc] sm:$0xf]
        %v282 = vld [vmem:[#allocation5 + $0x10] sm:$0xf]
        %v283 = vld [vmem:[#allocation5 + $0x14] sm:$0xf]
        %v284 = vld [vmem:[#allocation5 + $0x18] sm:$0xf]
        %v285 = vld [vmem:[#allocation5 + $0x1c] sm:$0xf]
        %v286 = vld [vmem:[#allocation5 + $0x20] sm:$0xf]
        %v287 = vld [vmem:[#allocation5 + $0x24] sm:$0xf]
        %v288 = vld [vmem:[#allocation5 + $0x28] sm:$0xf]
        %v289 = vld [vmem:[#allocation5 + $0x2c] sm:$0xf]
        %v290 = vld [vmem:[#allocation5 + $0x30] sm:$0xf]
        %v291 = vld [vmem:[#allocation5 + $0x34] sm:$0xf]
        %v292 = vld [vmem:[#allocation5 + $0x38] sm:$0xf]
        %v293 = vld [vmem:[#allocation5 + $0x3c] sm:$0xf]
        %s294 = scalar_lea.vmem [#allocation5], 64
        %v295 = vld [vmem:[%s294] sm:$0xf]
        %v296 = vld [vmem:[%s294 + $0x4] sm:$0xf]
        %v297 = vld [vmem:[%s294 + $0x8] sm:$0xf]
        %v298 = vld [vmem:[%s294 + $0xc] sm:$0xf]
        %v299 = vld [vmem:[%s294 + $0x10] sm:$0xf]
        %v300 = vld [vmem:[%s294 + $0x14] sm:$0xf]
        %v301 = vld [vmem:[%s294 + $0x18] sm:$0xf]
        %v302 = vld [vmem:[%s294 + $0x1c] sm:$0xf]
        %v303 = vld [vmem:[%s294 + $0x20] sm:$0xf]
        %v304 = vld [vmem:[%s294 + $0x24] sm:$0xf]
        %v305 = vld [vmem:[%s294 + $0x28] sm:$0xf]
        %v306 = vld [vmem:[%s294 + $0x2c] sm:$0xf]
        %v307 = vld [vmem:[%s294 + $0x30] sm:$0xf]
        %v308 = vld [vmem:[%s294 + $0x34] sm:$0xf]
        %v309 = vld [vmem:[%s294 + $0x38] sm:$0xf]
        %v310 = vld [vmem:[%s294 + $0x3c] sm:$0xf]
        %v352 = vunpack.c.l.b16 %v237
        %v353 = vunpack.c.l.b16 %v238
        %v354 = vunpack.c.l.b16 %v239
        %v355 = vunpack.c.l.b16 %v240
        %v356 = vunpack.c.l.b16 %v241
        %v357 = vunpack.c.l.b16 %v242
        %v358 = vunpack.c.l.b16 %v243
        %v359 = vunpack.c.l.b16 %v244
        %v360 = vunpack.c.l.b16 %v245
        %v361 = vunpack.c.l.b16 %v246
        %v362 = vunpack.c.l.b16 %v247
        %v363 = vunpack.c.l.b16 %v248
        %v364 = vunpack.c.l.b16 %v249
        %v365 = vunpack.c.l.b16 %v250
        %v366 = vunpack.c.l.b16 %v251
        %v367 = vunpack.c.l.b16 %v252
        %v368 = vunpack.c.l.b16 %v253
        %v369 = vunpack.c.l.b16 %v254
        %v370 = vunpack.c.l.b16 %v255
        %v371 = vunpack.c.l.b16 %v256
        %v372 = vunpack.c.l.b16 %v257
        %v373 = vunpack.c.l.b16 %v258
        %v374 = vunpack.c.l.b16 %v259
        %v375 = vunpack.c.l.b16 %v260
        %v376 = vunpack.c.l.b16 %v261
        %v377 = vunpack.c.l.b16 %v262
        %v378 = vunpack.c.l.b16 %v263
        %v379 = vunpack.c.l.b16 %v264
        %v380 = vunpack.c.l.b16 %v265
        %v381 = vunpack.c.l.b16 %v266
        %v382 = vunpack.c.l.b16 %v267
        %v383 = vunpack.c.l.b16 %v268
        %v384 = vunpack.c.l.b16 %v269
        %v385 = vunpack.c.l.b16 %v270
        %v386 = vunpack.c.l.b16 %v271
        %v387 = vunpack.c.l.b16 %v272
        %v388 = vunpack.c.l.b16 %v273
        %v389 = vunpack.c.l.b16 %v274
        %v390 = vunpack.c.l.b16 %v275
        %v391 = vunpack.c.l.b16 %v276
        %v392 = vunpack.c.l.b16 %v277
        %v393 = vpack.c.b16 %v353, %v352
        %v394 = vpack.c.b16 %v355, %v354
        %v395 = vpack.c.b16 %v357, %v356
        %v396 = vpack.c.b16 %v359, %v358
        %v397 = vpack.c.b16 %v361, %v360
        %v398 = vpack.c.b16 %v363, %v362
        %v399 = vpack.c.b16 %v365, %v364
        %v400 = vpack.c.b16 %v367, %v366
        %v401 = vpack.c.b16 %v369, %v368
        %v402 = vpack.c.b16 %v371, %v370
        %v403 = vpack.c.b16 %v373, %v372
        %v404 = vpack.c.b16 %v375, %v374
        %v405 = vpack.c.b16 %v377, %v376
        %v406 = vpack.c.b16 %v379, %v378
        %v407 = vpack.c.b16 %v381, %v380
        %v408 = vpack.c.b16 %v383, %v382
        %v409 = vpack.c.b16 %v385, %v384
        %v410 = vpack.c.b16 %v387, %v386
        %v411 = vpack.c.b16 %v389, %v388
        %v412 = vpack.c.b16 %v391, %v390
        %v413 = vpack.c.b16 %v392, %v392
        %v451 = vunpack.c.l.b16 %v295
        %v452 = vunpack.c.l.b16 %v296
        %v453 = vunpack.c.l.b16 %v297
        %v454 = vunpack.c.l.b16 %v298
        %v455 = vunpack.c.l.b16 %v299
        %v456 = vunpack.c.l.b16 %v300
        %v457 = vunpack.c.l.b16 %v301
        %v458 = vunpack.c.l.b16 %v302
        %v459 = vunpack.c.l.b16 %v303
        %v460 = vunpack.c.l.b16 %v304
        %v461 = vunpack.c.l.b16 %v305
        %v462 = vunpack.c.l.b16 %v306
        %v463 = vunpack.c.l.b16 %v307
        %v464 = vunpack.c.l.b16 %v308
        %v465 = vunpack.c.l.b16 %v309
        %v466 = vunpack.c.l.b16 %v310
        %v467 = vpack.c.b16 %v452, %v451
        %v468 = vpack.c.b16 %v454, %v453
        %v469 = vpack.c.b16 %v456, %v455
        %v470 = vpack.c.b16 %v458, %v457
        %v471 = vpack.c.b16 %v460, %v459
        %v472 = vpack.c.b16 %v462, %v461
        %v473 = vpack.c.b16 %v464, %v463
        %v474 = vpack.c.b16 %v466, %v465
        %483 = vmatpush.bf16.msra.mxu0 %v474
        %484 = vmatpush.bf16.msra.mxu0 %v473
        %485 = vmatpush.bf16.msra.mxu0 %v472
        %486 = vmatpush.bf16.msra.mxu0 %v471
        %487 = vmatpush.bf16.msra.mxu0 %v470
        %488 = vmatpush.bf16.msra.mxu0 %v469
        %489 = vmatpush.bf16.msra.mxu0 %v468
        %490 = vmatpush.bf16.msra.mxu0 %v467
        %491 = vmatmul.bf16.gmra.mxu0 %v393
        %v492 = vpop.f32.mrf.mxu0
        %v493 = vadd.f32 0.0, %v492
        %v494 = vpop.f32.mrf.mxu0
        %v495 = vadd.f32 0.0, %v494
        %496 = vmatmul.bf16.gmra.mxu0 %v394
        %v497 = vpop.f32.mrf.mxu0
        %v498 = vadd.f32 0.0, %v497
        %v499 = vpop.f32.mrf.mxu0
        %v500 = vadd.f32 0.0, %v499
        %501 = vmatmul.bf16.gmra.mxu0 %v395
        %v502 = vpop.f32.mrf.mxu0
        %v503 = vadd.f32 0.0, %v502
        %v504 = vpop.f32.mrf.mxu0
        %v505 = vadd.f32 0.0, %v504
        %506 = vmatmul.bf16.gmra.mxu0 %v396
        %v507 = vpop.f32.mrf.mxu0
        %v508 = vadd.f32 0.0, %v507
        %v509 = vpop.f32.mrf.mxu0
        %v510 = vadd.f32 0.0, %v509
        %511 = vmatmul.bf16.gmra.mxu0 %v397
        %v512 = vpop.f32.mrf.mxu0
        %v513 = vadd.f32 0.0, %v512
        %v514 = vpop.f32.mrf.mxu0
        %v515 = vadd.f32 0.0, %v514
        %516 = vmatmul.bf16.gmra.mxu0 %v398
        %v517 = vpop.f32.mrf.mxu0
        %v518 = vadd.f32 0.0, %v517
        %v519 = vpop.f32.mrf.mxu0
        %v520 = vadd.f32 0.0, %v519
        %521 = vmatmul.bf16.gmra.mxu0 %v399
        %v522 = vpop.f32.mrf.mxu0
        %v523 = vadd.f32 0.0, %v522
        %v524 = vpop.f32.mrf.mxu0
        %v525 = vadd.f32 0.0, %v524
        %526 = vmatmul.bf16.gmra.mxu0 %v400
        %v527 = vpop.f32.mrf.mxu0
        %v528 = vadd.f32 0.0, %v527
        %v529 = vpop.f32.mrf.mxu0
        %v530 = vadd.f32 0.0, %v529
        %531 = vmatmul.bf16.gmra.mxu0 %v401
        %v532 = vpop.f32.mrf.mxu0
        %v533 = vadd.f32 0.0, %v532
        %v534 = vpop.f32.mrf.mxu0
        %v535 = vadd.f32 0.0, %v534
        %536 = vmatmul.bf16.gmra.mxu0 %v402
        %v537 = vpop.f32.mrf.mxu0
        %v538 = vadd.f32 0.0, %v537
        %v539 = vpop.f32.mrf.mxu0
        %v540 = vadd.f32 0.0, %v539
        %541 = vmatmul.bf16.gmra.mxu0 %v403
        %v542 = vpop.f32.mrf.mxu0
        %v543 = vadd.f32 0.0, %v542
        %v544 = vpop.f32.mrf.mxu0
        %v545 = vadd.f32 0.0, %v544
        %546 = vmatmul.bf16.gmra.mxu0 %v404
        %v547 = vpop.f32.mrf.mxu0
        %v548 = vadd.f32 0.0, %v547
        %v549 = vpop.f32.mrf.mxu0
        %v550 = vadd.f32 0.0, %v549
        %551 = vmatmul.bf16.gmra.mxu0 %v405
        %v552 = vpop.f32.mrf.mxu0
        %v553 = vadd.f32 0.0, %v552
        %v554 = vpop.f32.mrf.mxu0
        %v555 = vadd.f32 0.0, %v554
        %556 = vmatmul.bf16.gmra.mxu0 %v406
        %v557 = vpop.f32.mrf.mxu0
        %v558 = vadd.f32 0.0, %v557
        %v559 = vpop.f32.mrf.mxu0
        %v560 = vadd.f32 0.0, %v559
        %561 = vmatmul.bf16.gmra.mxu0 %v407
        %v562 = vpop.f32.mrf.mxu0
        %v563 = vadd.f32 0.0, %v562
        %v564 = vpop.f32.mrf.mxu0
        %v565 = vadd.f32 0.0, %v564
        %566 = vmatmul.bf16.gmra.mxu0 %v408
        %v567 = vpop.f32.mrf.mxu0
        %v568 = vadd.f32 0.0, %v567
        %v569 = vpop.f32.mrf.mxu0
        %v570 = vadd.f32 0.0, %v569
        %571 = vmatmul.bf16.gmra.mxu0 %v409
        %v572 = vpop.f32.mrf.mxu0
        %v573 = vadd.f32 0.0, %v572
        %v574 = vpop.f32.mrf.mxu0
        %v575 = vadd.f32 0.0, %v574
        %576 = vmatmul.bf16.gmra.mxu0 %v410
        %v577 = vpop.f32.mrf.mxu0
        %v578 = vadd.f32 0.0, %v577
        %v579 = vpop.f32.mrf.mxu0
        %v580 = vadd.f32 0.0, %v579
        %581 = vmatmul.bf16.gmra.mxu0 %v411
        %v582 = vpop.f32.mrf.mxu0
        %v583 = vadd.f32 0.0, %v582
        %v584 = vpop.f32.mrf.mxu0
        %v585 = vadd.f32 0.0, %v584
        %586 = vmatmul.bf16.gmra.mxu0 %v412
        %v587 = vpop.f32.mrf.mxu0
        %v588 = vadd.f32 0.0, %v587
        %v589 = vpop.f32.mrf.mxu0
        %v590 = vadd.f32 0.0, %v589
        %591 = vmatmul.bf16.gmra.mxu0 %v413
        %v592 = vpop.f32.mrf.mxu0
        %v593 = vadd.f32 0.0, %v592
        %v594 = vpop.f32.mrf.mxu0
        %595 = vdwg.mxu0
        %v597 = vunpack.c.l.b16 %v236
        %v598 = vpack.c.b16 %v352, %v597
        %v599 = vpack.c.b16 %v354, %v353
        %v600 = vpack.c.b16 %v356, %v355
        %v601 = vpack.c.b16 %v358, %v357
        %v602 = vpack.c.b16 %v360, %v359
        %v603 = vpack.c.b16 %v362, %v361
        %v604 = vpack.c.b16 %v364, %v363
        %v605 = vpack.c.b16 %v366, %v365
        %v606 = vpack.c.b16 %v368, %v367
        %v607 = vpack.c.b16 %v370, %v369
        %v608 = vpack.c.b16 %v372, %v371
        %v609 = vpack.c.b16 %v374, %v373
        %v610 = vpack.c.b16 %v376, %v375
        %v611 = vpack.c.b16 %v378, %v377
        %v612 = vpack.c.b16 %v380, %v379
        %v613 = vpack.c.b16 %v382, %v381
        %v614 = vpack.c.b16 %v384, %v383
        %v615 = vpack.c.b16 %v386, %v385
        %v616 = vpack.c.b16 %v388, %v387
        %v617 = vpack.c.b16 %v390, %v389
        %v618 = vpack.c.b16 %v392, %v391
        %vm619 = vsmask.f32 4352
        %v621 = vshrl.u32 %v598, 16
        %v623 = vrot.slane %v621, 3
        %v624 = vshll.u32 %v598, 16
        %v626 = vrot.slane %v624, 4
        %v627 = vor.u32 %v623, %v626
        %v629 = vshrl.u32 %v599, 16
        %v631 = vrot.slane %v629, 3
        %v632 = vshll.u32 %v599, 16
        %v634 = vrot.slane %v632, 4
        %v635 = vor.u32 %v631, %v634
        %v636 = vsel %vm619, %v627, %v635
        %v638 = vshrl.u32 %v600, 16
        %v640 = vrot.slane %v638, 3
        %v641 = vshll.u32 %v600, 16
        %v643 = vrot.slane %v641, 4
        %v644 = vor.u32 %v640, %v643
        %v645 = vsel %vm619, %v635, %v644
        %v647 = vshrl.u32 %v601, 16
        %v649 = vrot.slane %v647, 3
        %v650 = vshll.u32 %v601, 16
        %v652 = vrot.slane %v650, 4
        %v653 = vor.u32 %v649, %v652
        %v654 = vsel %vm619, %v644, %v653
        %v656 = vshrl.u32 %v602, 16
        %v658 = vrot.slane %v656, 3
        %v659 = vshll.u32 %v602, 16
        %v661 = vrot.slane %v659, 4
        %v662 = vor.u32 %v658, %v661
        %v663 = vsel %vm619, %v653, %v662
        %v665 = vshrl.u32 %v603, 16
        %v667 = vrot.slane %v665, 3
        %v668 = vshll.u32 %v603, 16
        %v670 = vrot.slane %v668, 4
        %v671 = vor.u32 %v667, %v670
        %v672 = vsel %vm619, %v662, %v671
        %v674 = vshrl.u32 %v604, 16
        %v676 = vrot.slane %v674, 3
        %v677 = vshll.u32 %v604, 16
        %v679 = vrot.slane %v677, 4
        %v680 = vor.u32 %v676, %v679
        %v681 = vsel %vm619, %v671, %v680
        %v683 = vshrl.u32 %v605, 16
        %v685 = vrot.slane %v683, 3
        %v686 = vshll.u32 %v605, 16
        %v688 = vrot.slane %v686, 4
        %v689 = vor.u32 %v685, %v688
        %v690 = vsel %vm619, %v680, %v689
        %v692 = vshrl.u32 %v606, 16
        %v694 = vrot.slane %v692, 3
        %v695 = vshll.u32 %v606, 16
        %v697 = vrot.slane %v695, 4
        %v698 = vor.u32 %v694, %v697
        %v699 = vsel %vm619, %v689, %v698
        %v701 = vshrl.u32 %v607, 16
        %v703 = vrot.slane %v701, 3
        %v704 = vshll.u32 %v607, 16
        %v706 = vrot.slane %v704, 4
        %v707 = vor.u32 %v703, %v706
        %v708 = vsel %vm619, %v698, %v707
        %v710 = vshrl.u32 %v608, 16
        %v712 = vrot.slane %v710, 3
        %v713 = vshll.u32 %v608, 16
        %v715 = vrot.slane %v713, 4
        %v716 = vor.u32 %v712, %v715
        %v717 = vsel %vm619, %v707, %v716
        %v719 = vshrl.u32 %v609, 16
        %v721 = vrot.slane %v719, 3
        %v722 = vshll.u32 %v609, 16
        %v724 = vrot.slane %v722, 4
        %v725 = vor.u32 %v721, %v724
        %v726 = vsel %vm619, %v716, %v725
        %v728 = vshrl.u32 %v610, 16
        %v730 = vrot.slane %v728, 3
        %v731 = vshll.u32 %v610, 16
        %v733 = vrot.slane %v731, 4
        %v734 = vor.u32 %v730, %v733
        %v735 = vsel %vm619, %v725, %v734
        %v737 = vshrl.u32 %v611, 16
        %v739 = vrot.slane %v737, 3
        %v740 = vshll.u32 %v611, 16
        %v742 = vrot.slane %v740, 4
        %v743 = vor.u32 %v739, %v742
        %v744 = vsel %vm619, %v734, %v743
        %v746 = vshrl.u32 %v612, 16
        %v748 = vrot.slane %v746, 3
        %v749 = vshll.u32 %v612, 16
        %v751 = vrot.slane %v749, 4
        %v752 = vor.u32 %v748, %v751
        %v753 = vsel %vm619, %v743, %v752
        %v755 = vshrl.u32 %v613, 16
        %v757 = vrot.slane %v755, 3
        %v758 = vshll.u32 %v613, 16
        %v760 = vrot.slane %v758, 4
        %v761 = vor.u32 %v757, %v760
        %v762 = vsel %vm619, %v752, %v761
        %v764 = vshrl.u32 %v614, 16
        %v766 = vrot.slane %v764, 3
        %v767 = vshll.u32 %v614, 16
        %v769 = vrot.slane %v767, 4
        %v770 = vor.u32 %v766, %v769
        %v771 = vsel %vm619, %v761, %v770
        %v773 = vshrl.u32 %v615, 16
        %v775 = vrot.slane %v773, 3
        %v776 = vshll.u32 %v615, 16
        %v778 = vrot.slane %v776, 4
        %v779 = vor.u32 %v775, %v778
        %v780 = vsel %vm619, %v770, %v779
        %v782 = vshrl.u32 %v616, 16
        %v784 = vrot.slane %v782, 3
        %v785 = vshll.u32 %v616, 16
        %v787 = vrot.slane %v785, 4
        %v788 = vor.u32 %v784, %v787
        %v789 = vsel %vm619, %v779, %v788
        %v791 = vshrl.u32 %v617, 16
        %v793 = vrot.slane %v791, 3
        %v794 = vshll.u32 %v617, 16
        %v796 = vrot.slane %v794, 4
        %v797 = vor.u32 %v793, %v796
        %v798 = vsel %vm619, %v788, %v797
        %v800 = vshrl.u32 %v618, 16
        %v802 = vrot.slane %v800, 3
        %v803 = vshll.u32 %v618, 16
        %v805 = vrot.slane %v803, 4
        %v806 = vor.u32 %v802, %v805
        %v807 = vsel %vm619, %v797, %v806
        %v845 = vunpack.c.l.b16 %v278
        %v846 = vunpack.c.l.b16 %v279
        %v847 = vunpack.c.l.b16 %v280
        %v848 = vunpack.c.l.b16 %v281
        %v849 = vunpack.c.l.b16 %v282
        %v850 = vunpack.c.l.b16 %v283
        %v851 = vunpack.c.l.b16 %v284
        %v852 = vunpack.c.l.b16 %v285
        %v853 = vunpack.c.l.b16 %v286
        %v854 = vunpack.c.l.b16 %v287
        %v855 = vunpack.c.l.b16 %v288
        %v856 = vunpack.c.l.b16 %v289
        %v857 = vunpack.c.l.b16 %v290
        %v858 = vunpack.c.l.b16 %v291
        %v859 = vunpack.c.l.b16 %v292
        %v860 = vunpack.c.l.b16 %v293
        %v861 = vpack.c.b16 %v846, %v845
        %v862 = vpack.c.b16 %v848, %v847
        %v863 = vpack.c.b16 %v850, %v849
        %v864 = vpack.c.b16 %v852, %v851
        %v865 = vpack.c.b16 %v854, %v853
        %v866 = vpack.c.b16 %v856, %v855
        %v867 = vpack.c.b16 %v858, %v857
        %v868 = vpack.c.b16 %v860, %v859
        %877 = vmatpush.bf16.msra.mxu0 %v868
        %878 = vmatpush.bf16.msra.mxu0 %v867
        %879 = vmatpush.bf16.msra.mxu0 %v866
        %880 = vmatpush.bf16.msra.mxu0 %v865
        %881 = vmatpush.bf16.msra.mxu0 %v864
        %882 = vmatpush.bf16.msra.mxu0 %v863
        %883 = vmatpush.bf16.msra.mxu0 %v862
        %884 = vmatpush.bf16.msra.mxu0 %v861
        %885 = vmatmul.bf16.gmra.mxu0 %v636
        %v886 = vpop.f32.mrf.mxu0
        %v887 = vadd.f32 %v493, %v886
        %v888 = vpop.f32.mrf.mxu0
        %v889 = vadd.f32 %v495, %v888
        %890 = vmatmul.bf16.gmra.mxu0 %v645
        %v891 = vpop.f32.mrf.mxu0
        %v892 = vadd.f32 %v498, %v891
        %v893 = vpop.f32.mrf.mxu0
        %v894 = vadd.f32 %v500, %v893
        %895 = vmatmul.bf16.gmra.mxu0 %v654
        %v896 = vpop.f32.mrf.mxu0
        %v897 = vadd.f32 %v503, %v896
        %v898 = vpop.f32.mrf.mxu0
        %v899 = vadd.f32 %v505, %v898
        %900 = vmatmul.bf16.gmra.mxu0 %v663
        %v901 = vpop.f32.mrf.mxu0
        %v902 = vadd.f32 %v508, %v901
        %v903 = vpop.f32.mrf.mxu0
        %v904 = vadd.f32 %v510, %v903
        %905 = vmatmul.bf16.gmra.mxu0 %v672
        %v906 = vpop.f32.mrf.mxu0
        %v907 = vadd.f32 %v513, %v906
        %v908 = vpop.f32.mrf.mxu0
        %v909 = vadd.f32 %v515, %v908
        %910 = vmatmul.bf16.gmra.mxu0 %v681
        %v911 = vpop.f32.mrf.mxu0
        %v912 = vadd.f32 %v518, %v911
        %v913 = vpop.f32.mrf.mxu0
        %v914 = vadd.f32 %v520, %v913
        %915 = vmatmul.bf16.gmra.mxu0 %v690
        %v916 = vpop.f32.mrf.mxu0
        %v917 = vadd.f32 %v523, %v916
        %v918 = vpop.f32.mrf.mxu0
        %v919 = vadd.f32 %v525, %v918
        %920 = vmatmul.bf16.gmra.mxu0 %v699
        %v921 = vpop.f32.mrf.mxu0
        %v922 = vadd.f32 %v528, %v921
        %v923 = vpop.f32.mrf.mxu0
        %v924 = vadd.f32 %v530, %v923
        %925 = vmatmul.bf16.gmra.mxu0 %v708
        %v926 = vpop.f32.mrf.mxu0
        %v927 = vadd.f32 %v533, %v926
        %v928 = vpop.f32.mrf.mxu0
        %v929 = vadd.f32 %v535, %v928
        %930 = vmatmul.bf16.gmra.mxu0 %v717
        %v931 = vpop.f32.mrf.mxu0
        %v932 = vadd.f32 %v538, %v931
        %v933 = vpop.f32.mrf.mxu0
        %v934 = vadd.f32 %v540, %v933
        %935 = vmatmul.bf16.gmra.mxu0 %v726
        %v936 = vpop.f32.mrf.mxu0
        %v937 = vadd.f32 %v543, %v936
        %v938 = vpop.f32.mrf.mxu0
        %v939 = vadd.f32 %v545, %v938
        %940 = vmatmul.bf16.gmra.mxu0 %v735
        %v941 = vpop.f32.mrf.mxu0
        %v942 = vadd.f32 %v548, %v941
        %v943 = vpop.f32.mrf.mxu0
        %v944 = vadd.f32 %v550, %v943
        %945 = vmatmul.bf16.gmra.mxu0 %v744
        %v946 = vpop.f32.mrf.mxu0
        %v947 = vadd.f32 %v553, %v946
        %v948 = vpop.f32.mrf.mxu0
        %v949 = vadd.f32 %v555, %v948
        %950 = vmatmul.bf16.gmra.mxu0 %v753
        %v951 = vpop.f32.mrf.mxu0
        %v952 = vadd.f32 %v558, %v951
        %v953 = vpop.f32.mrf.mxu0
        %v954 = vadd.f32 %v560, %v953
        %955 = vmatmul.bf16.gmra.mxu0 %v762
        %v956 = vpop.f32.mrf.mxu0
        %v957 = vadd.f32 %v563, %v956
        %v958 = vpop.f32.mrf.mxu0
        %v959 = vadd.f32 %v565, %v958
        %960 = vmatmul.bf16.gmra.mxu0 %v771
        %v961 = vpop.f32.mrf.mxu0
        %v962 = vadd.f32 %v568, %v961
        %v963 = vpop.f32.mrf.mxu0
        %v964 = vadd.f32 %v570, %v963
        %965 = vmatmul.bf16.gmra.mxu0 %v780
        %v966 = vpop.f32.mrf.mxu0
        %v967 = vadd.f32 %v573, %v966
        %v968 = vpop.f32.mrf.mxu0
        %v969 = vadd.f32 %v575, %v968
        %970 = vmatmul.bf16.gmra.mxu0 %v789
        %v971 = vpop.f32.mrf.mxu0
        %v972 = vadd.f32 %v578, %v971
        %v973 = vpop.f32.mrf.mxu0
        %v974 = vadd.f32 %v580, %v973
        %975 = vmatmul.bf16.gmra.mxu0 %v798
        %v976 = vpop.f32.mrf.mxu0
        %v977 = vadd.f32 %v583, %v976
        %v978 = vpop.f32.mrf.mxu0
        %v979 = vadd.f32 %v585, %v978
        %980 = vmatmul.bf16.gmra.mxu0 %v807
        %v981 = vpop.f32.mrf.mxu0
        %v982 = vadd.f32 %v588, %v981
        %v983 = vpop.f32.mrf.mxu0
        %v984 = vadd.f32 %v590, %v983
        %985 = vmatmul.bf16.gmra.mxu0 %v806
        %v986 = vpop.f32.mrf.mxu0
        %v987 = vadd.f32 %v593, %v986
        %v988 = vpop.f32.mrf.mxu0
        %989 = vdwg.mxu0
        %v990 = vld [vmem:[%s204 + $0xa4] sm:$0x7]
        %s991 = scalar_lea.vmem [#allocation5], 128
        %v992 = vld [vmem:[%s991] sm:$0xf]
        %v993 = vld [vmem:[%s991 + $0x4] sm:$0xf]
        %v994 = vld [vmem:[%s991 + $0x8] sm:$0xf]
        %v995 = vld [vmem:[%s991 + $0xc] sm:$0xf]
        %v996 = vld [vmem:[%s991 + $0x10] sm:$0xf]
        %v997 = vld [vmem:[%s991 + $0x14] sm:$0xf]
        %v998 = vld [vmem:[%s991 + $0x18] sm:$0xf]
        %v999 = vld [vmem:[%s991 + $0x1c] sm:$0xf]
        %v1000 = vld [vmem:[%s991 + $0x20] sm:$0xf]
        %v1001 = vld [vmem:[%s991 + $0x24] sm:$0xf]
        %v1002 = vld [vmem:[%s991 + $0x28] sm:$0xf]
        %v1003 = vld [vmem:[%s991 + $0x2c] sm:$0xf]
        %v1004 = vld [vmem:[%s991 + $0x30] sm:$0xf]
        %v1005 = vld [vmem:[%s991 + $0x34] sm:$0xf]
        %v1006 = vld [vmem:[%s991 + $0x38] sm:$0xf]
        %v1007 = vld [vmem:[%s991 + $0x3c] sm:$0xf]
        %v1009 = vunpack.c.l.b16 %v990
        %v1010 = vpack.c.b16 %v1009, %v1009
        %vm1011 = vsmask.f32 7424
        %v1013 = vshrl.u32 %v393, 16
        %v1015 = vshll.u32 %v393, 16
        %v1017 = vrot.slane %v1015, 1
        %v1018 = vor.u32 %v1013, %v1017
        %v1020 = vshll.u32 %v394, 16
        %v1022 = vrot.slane %v1020, 1
        %v1023 = vsel %vm1011, %v1018, %v1022
        %v1024 = vshrl.u32 %v394, 16
        %v1026 = vor.u32 %v1024, %v1022
        %v1028 = vshll.u32 %v395, 16
        %v1030 = vrot.slane %v1028, 1
        %v1031 = vsel %vm1011, %v1026, %v1030
        %v1032 = vshrl.u32 %v395, 16
        %v1034 = vor.u32 %v1032, %v1030
        %v1036 = vshll.u32 %v396, 16
        %v1038 = vrot.slane %v1036, 1
        %v1039 = vsel %vm1011, %v1034, %v1038
        %v1040 = vshrl.u32 %v396, 16
        %v1042 = vor.u32 %v1040, %v1038
        %v1044 = vshll.u32 %v397, 16
        %v1046 = vrot.slane %v1044, 1
        %v1047 = vsel %vm1011, %v1042, %v1046
        %v1048 = vshrl.u32 %v397, 16
        %v1050 = vor.u32 %v1048, %v1046
        %v1052 = vshll.u32 %v398, 16
        %v1054 = vrot.slane %v1052, 1
        %v1055 = vsel %vm1011, %v1050, %v1054
        %v1056 = vshrl.u32 %v398, 16
        %v1058 = vor.u32 %v1056, %v1054
        %v1060 = vshll.u32 %v399, 16
        %v1062 = vrot.slane %v1060, 1
        %v1063 = vsel %vm1011, %v1058, %v1062
        %v1064 = vshrl.u32 %v399, 16
        %v1066 = vor.u32 %v1064, %v1062
        %v1068 = vshll.u32 %v400, 16
        %v1070 = vrot.slane %v1068, 1
        %v1071 = vsel %vm1011, %v1066, %v1070
        %v1072 = vshrl.u32 %v400, 16
        %v1074 = vor.u32 %v1072, %v1070
        %v1076 = vshll.u32 %v401, 16
        %v1078 = vrot.slane %v1076, 1
        %v1079 = vsel %vm1011, %v1074, %v1078
        %v1080 = vshrl.u32 %v401, 16
        %v1082 = vor.u32 %v1080, %v1078
        %v1084 = vshll.u32 %v402, 16
        %v1086 = vrot.slane %v1084, 1
        %v1087 = vsel %vm1011, %v1082, %v1086
        %v1088 = vshrl.u32 %v402, 16
        %v1090 = vor.u32 %v1088, %v1086
        %v1092 = vshll.u32 %v403, 16
        %v1094 = vrot.slane %v1092, 1
        %v1095 = vsel %vm1011, %v1090, %v1094
        %v1096 = vshrl.u32 %v403, 16
        %v1098 = vor.u32 %v1096, %v1094
        %v1100 = vshll.u32 %v404, 16
        %v1102 = vrot.slane %v1100, 1
        %v1103 = vsel %vm1011, %v1098, %v1102
        %v1104 = vshrl.u32 %v404, 16
        %v1106 = vor.u32 %v1104, %v1102
        %v1108 = vshll.u32 %v405, 16
        %v1110 = vrot.slane %v1108, 1
        %v1111 = vsel %vm1011, %v1106, %v1110
        %v1112 = vshrl.u32 %v405, 16
        %v1114 = vor.u32 %v1112, %v1110
        %v1116 = vshll.u32 %v406, 16
        %v1118 = vrot.slane %v1116, 1
        %v1119 = vsel %vm1011, %v1114, %v1118
        %v1120 = vshrl.u32 %v406, 16
        %v1122 = vor.u32 %v1120, %v1118
        %v1124 = vshll.u32 %v407, 16
        %v1126 = vrot.slane %v1124, 1
        %v1127 = vsel %vm1011, %v1122, %v1126
        %v1128 = vshrl.u32 %v407, 16
        %v1130 = vor.u32 %v1128, %v1126
        %v1132 = vshll.u32 %v408, 16
        %v1134 = vrot.slane %v1132, 1
        %v1135 = vsel %vm1011, %v1130, %v1134
        %v1136 = vshrl.u32 %v408, 16
        %v1138 = vor.u32 %v1136, %v1134
        %v1140 = vshll.u32 %v409, 16
        %v1142 = vrot.slane %v1140, 1
        %v1143 = vsel %vm1011, %v1138, %v1142
        %v1144 = vshrl.u32 %v409, 16
        %v1146 = vor.u32 %v1144, %v1142
        %v1148 = vshll.u32 %v410, 16
        %v1150 = vrot.slane %v1148, 1
        %v1151 = vsel %vm1011, %v1146, %v1150
        %v1152 = vshrl.u32 %v410, 16
        %v1154 = vor.u32 %v1152, %v1150
        %v1156 = vshll.u32 %v411, 16
        %v1158 = vrot.slane %v1156, 1
        %v1159 = vsel %vm1011, %v1154, %v1158
        %v1160 = vshrl.u32 %v411, 16
        %v1162 = vor.u32 %v1160, %v1158
        %v1164 = vshll.u32 %v412, 16
        %v1166 = vrot.slane %v1164, 1
        %v1167 = vsel %vm1011, %v1162, %v1166
        %v1168 = vshrl.u32 %v412, 16
        %v1170 = vor.u32 %v1168, %v1166
        %v1172 = vshll.u32 %v1010, 16
        %v1174 = vrot.slane %v1172, 1
        %v1175 = vsel %vm1011, %v1170, %v1174
        %v1176 = vshrl.u32 %v1010, 16
        %v1178 = vor.u32 %v1176, %v1174
        %v1216 = vunpack.c.l.b16 %v992
        %v1217 = vunpack.c.l.b16 %v993
        %v1218 = vunpack.c.l.b16 %v994
        %v1219 = vunpack.c.l.b16 %v995
        %v1220 = vunpack.c.l.b16 %v996
        %v1221 = vunpack.c.l.b16 %v997
        %v1222 = vunpack.c.l.b16 %v998
        %v1223 = vunpack.c.l.b16 %v999
        %v1224 = vunpack.c.l.b16 %v1000
        %v1225 = vunpack.c.l.b16 %v1001
        %v1226 = vunpack.c.l.b16 %v1002
        %v1227 = vunpack.c.l.b16 %v1003
        %v1228 = vunpack.c.l.b16 %v1004
        %v1229 = vunpack.c.l.b16 %v1005
        %v1230 = vunpack.c.l.b16 %v1006
        %v1231 = vunpack.c.l.b16 %v1007
        %v1232 = vpack.c.b16 %v1217, %v1216
        %v1233 = vpack.c.b16 %v1219, %v1218
        %v1234 = vpack.c.b16 %v1221, %v1220
        %v1235 = vpack.c.b16 %v1223, %v1222
        %v1236 = vpack.c.b16 %v1225, %v1224
        %v1237 = vpack.c.b16 %v1227, %v1226
        %v1238 = vpack.c.b16 %v1229, %v1228
        %v1239 = vpack.c.b16 %v1231, %v1230
        %1248 = vmatpush.bf16.msra.mxu0 %v1239
        %1249 = vmatpush.bf16.msra.mxu0 %v1238
        %1250 = vmatpush.bf16.msra.mxu0 %v1237
        %1251 = vmatpush.bf16.msra.mxu0 %v1236
        %1252 = vmatpush.bf16.msra.mxu0 %v1235
        %1253 = vmatpush.bf16.msra.mxu0 %v1234
        %1254 = vmatpush.bf16.msra.mxu0 %v1233
        %1255 = vmatpush.bf16.msra.mxu0 %v1232
        %1256 = vmatmul.bf16.gmra.mxu0 %v1023
        %v1257 = vpop.f32.mrf.mxu0
        %v1258 = vadd.f32 0.0, %v1257
        %v1259 = vpop.f32.mrf.mxu0
        %v1260 = vadd.f32 0.0, %v1259
        %1261 = vmatmul.bf16.gmra.mxu0 %v1031
        %v1262 = vpop.f32.mrf.mxu0
        %v1263 = vadd.f32 0.0, %v1262
        %v1264 = vpop.f32.mrf.mxu0
        %v1265 = vadd.f32 0.0, %v1264
        %1266 = vmatmul.bf16.gmra.mxu0 %v1039
        %v1267 = vpop.f32.mrf.mxu0
        %v1268 = vadd.f32 0.0, %v1267
        %v1269 = vpop.f32.mrf.mxu0
        %v1270 = vadd.f32 0.0, %v1269
        %1271 = vmatmul.bf16.gmra.mxu0 %v1047
        %v1272 = vpop.f32.mrf.mxu0
        %v1273 = vadd.f32 0.0, %v1272
        %v1274 = vpop.f32.mrf.mxu0
        %v1275 = vadd.f32 0.0, %v1274
        %1276 = vmatmul.bf16.gmra.mxu0 %v1055
        %v1277 = vpop.f32.mrf.mxu0
        %v1278 = vadd.f32 0.0, %v1277
        %v1279 = vpop.f32.mrf.mxu0
        %v1280 = vadd.f32 0.0, %v1279
        %1281 = vmatmul.bf16.gmra.mxu0 %v1063
        %v1282 = vpop.f32.mrf.mxu0
        %v1283 = vadd.f32 0.0, %v1282
        %v1284 = vpop.f32.mrf.mxu0
        %v1285 = vadd.f32 0.0, %v1284
        %1286 = vmatmul.bf16.gmra.mxu0 %v1071
        %v1287 = vpop.f32.mrf.mxu0
        %v1288 = vadd.f32 0.0, %v1287
        %v1289 = vpop.f32.mrf.mxu0
        %v1290 = vadd.f32 0.0, %v1289
        %1291 = vmatmul.bf16.gmra.mxu0 %v1079
        %v1292 = vpop.f32.mrf.mxu0
        %v1293 = vadd.f32 0.0, %v1292
        %v1294 = vpop.f32.mrf.mxu0
        %v1295 = vadd.f32 0.0, %v1294
        %1296 = vmatmul.bf16.gmra.mxu0 %v1087
        %v1297 = vpop.f32.mrf.mxu0
        %v1298 = vadd.f32 0.0, %v1297
        %v1299 = vpop.f32.mrf.mxu0
        %v1300 = vadd.f32 0.0, %v1299
        %1301 = vmatmul.bf16.gmra.mxu0 %v1095
        %v1302 = vpop.f32.mrf.mxu0
        %v1303 = vadd.f32 0.0, %v1302
        %v1304 = vpop.f32.mrf.mxu0
        %v1305 = vadd.f32 0.0, %v1304
        %1306 = vmatmul.bf16.gmra.mxu0 %v1103
        %v1307 = vpop.f32.mrf.mxu0
        %v1308 = vadd.f32 0.0, %v1307
        %v1309 = vpop.f32.mrf.mxu0
        %v1310 = vadd.f32 0.0, %v1309
        %1311 = vmatmul.bf16.gmra.mxu0 %v1111
        %v1312 = vpop.f32.mrf.mxu0
        %v1313 = vadd.f32 0.0, %v1312
        %v1314 = vpop.f32.mrf.mxu0
        %v1315 = vadd.f32 0.0, %v1314
        %1316 = vmatmul.bf16.gmra.mxu0 %v1119
        %v1317 = vpop.f32.mrf.mxu0
        %v1318 = vadd.f32 0.0, %v1317
        %v1319 = vpop.f32.mrf.mxu0
        %v1320 = vadd.f32 0.0, %v1319
        %1321 = vmatmul.bf16.gmra.mxu0 %v1127
        %v1322 = vpop.f32.mrf.mxu0
        %v1323 = vadd.f32 0.0, %v1322
        %v1324 = vpop.f32.mrf.mxu0
        %v1325 = vadd.f32 0.0, %v1324
        %1326 = vmatmul.bf16.gmra.mxu0 %v1135
        %v1327 = vpop.f32.mrf.mxu0
        %v1328 = vadd.f32 0.0, %v1327
        %v1329 = vpop.f32.mrf.mxu0
        %v1330 = vadd.f32 0.0, %v1329
        %1331 = vmatmul.bf16.gmra.mxu0 %v1143
        %v1332 = vpop.f32.mrf.mxu0
        %v1333 = vadd.f32 0.0, %v1332
        %v1334 = vpop.f32.mrf.mxu0
        %v1335 = vadd.f32 0.0, %v1334
        %1336 = vmatmul.bf16.gmra.mxu0 %v1151
        %v1337 = vpop.f32.mrf.mxu0
        %v1338 = vadd.f32 0.0, %v1337
        %v1339 = vpop.f32.mrf.mxu0
        %v1340 = vadd.f32 0.0, %v1339
        %1341 = vmatmul.bf16.gmra.mxu0 %v1159
        %v1342 = vpop.f32.mrf.mxu0
        %v1343 = vadd.f32 0.0, %v1342
        %v1344 = vpop.f32.mrf.mxu0
        %v1345 = vadd.f32 0.0, %v1344
        %1346 = vmatmul.bf16.gmra.mxu0 %v1167
        %v1347 = vpop.f32.mrf.mxu0
        %v1348 = vadd.f32 0.0, %v1347
        %v1349 = vpop.f32.mrf.mxu0
        %v1350 = vadd.f32 0.0, %v1349
        %1351 = vmatmul.bf16.gmra.mxu0 %v1175
        %v1352 = vpop.f32.mrf.mxu0
        %v1353 = vadd.f32 0.0, %v1352
        %v1354 = vpop.f32.mrf.mxu0
        %v1355 = vadd.f32 0.0, %v1354
        %1356 = vmatmul.bf16.gmra.mxu0 %v1178
        %v1357 = vpop.f32.mrf.mxu0
        %v1358 = vadd.f32 0.0, %v1357
        %v1359 = vpop.f32.mrf.mxu0
        %1360 = vdwg.mxu0
        %v1361 = vadd.f32 %v887, %v1258
        %v1362 = vadd.f32 %v889, %v1260
        %v1363 = vadd.f32 %v892, %v1263
        %v1364 = vadd.f32 %v894, %v1265
        %v1365 = vadd.f32 %v897, %v1268
        %v1366 = vadd.f32 %v899, %v1270
        %v1367 = vadd.f32 %v902, %v1273
        %v1368 = vadd.f32 %v904, %v1275
        %v1369 = vadd.f32 %v907, %v1278
        %v1370 = vadd.f32 %v909, %v1280
        %v1371 = vadd.f32 %v912, %v1283
        %v1372 = vadd.f32 %v914, %v1285
        %v1373 = vadd.f32 %v917, %v1288
        %v1374 = vadd.f32 %v919, %v1290
        %v1375 = vadd.f32 %v922, %v1293
        %v1376 = vadd.f32 %v924, %v1295
        %v1377 = vadd.f32 %v927, %v1298
        %v1378 = vadd.f32 %v929, %v1300
        %v1379 = vadd.f32 %v932, %v1303
        %v1380 = vadd.f32 %v934, %v1305
        %v1381 = vadd.f32 %v937, %v1308
        %v1382 = vadd.f32 %v939, %v1310
        %v1383 = vadd.f32 %v942, %v1313
        %v1384 = vadd.f32 %v944, %v1315
        %v1385 = vadd.f32 %v947, %v1318
        %v1386 = vadd.f32 %v949, %v1320
        %v1387 = vadd.f32 %v952, %v1323
        %v1388 = vadd.f32 %v954, %v1325
        %v1389 = vadd.f32 %v957, %v1328
        %v1390 = vadd.f32 %v959, %v1330
        %v1391 = vadd.f32 %v962, %v1333
        %v1392 = vadd.f32 %v964, %v1335
        %v1393 = vadd.f32 %v967, %v1338
        %v1394 = vadd.f32 %v969, %v1340
        %v1395 = vadd.f32 %v972, %v1343
        %v1396 = vadd.f32 %v974, %v1345
        %v1397 = vadd.f32 %v977, %v1348
        %v1398 = vadd.f32 %v979, %v1350
        %v1399 = vadd.f32 %v982, %v1353
        %v1400 = vadd.f32 %v984, %v1355
        %v1401 = vadd.f32 %v987, %v1358
        %v1402 = vld [vmem:[%s204 + $0xc] sm:$0xf]
        %v1403 = vld [vmem:[%s204 + $0x10] sm:$0xf]
        %v1404 = vld [vmem:[%s204 + $0x14] sm:$0xf]
        %v1405 = vld [vmem:[%s204 + $0x18] sm:$0xf]
        %v1406 = vld [vmem:[%s204 + $0x1c] sm:$0xf]
        %v1407 = vld [vmem:[%s204 + $0x20] sm:$0xf]
        %v1408 = vld [vmem:[%s204 + $0x24] sm:$0xf]
        %v1409 = vld [vmem:[%s204 + $0x28] sm:$0xf]
        %v1410 = vld [vmem:[%s204 + $0x2c] sm:$0xf]
        %v1411 = vld [vmem:[%s204 + $0x30] sm:$0xf]
        %v1412 = vld [vmem:[%s204 + $0x34] sm:$0xf]
        %v1413 = vld [vmem:[%s204 + $0x38] sm:$0xf]
        %v1414 = vld [vmem:[%s204 + $0x3c] sm:$0xf]
        %v1415 = vld [vmem:[%s204 + $0x40] sm:$0xf]
        %v1416 = vld [vmem:[%s204 + $0x44] sm:$0xf]
        %v1417 = vld [vmem:[%s204 + $0x48] sm:$0xf]
        %v1418 = vld [vmem:[%s204 + $0x4c] sm:$0xf]
        %v1419 = vld [vmem:[%s204 + $0x50] sm:$0xf]
        %v1420 = vld [vmem:[%s204 + $0x54] sm:$0xf]
        %v1421 = vld [vmem:[%s204 + $0x58] sm:$0xf]
        %v1422 = vld [vmem:[%s204 + $0x5c] sm:$0xf]
        %v1423 = vld [vmem:[%s204 + $0x60] sm:$0xf]
        %v1424 = vld [vmem:[%s204 + $0x64] sm:$0xf]
        %v1425 = vld [vmem:[%s204 + $0x68] sm:$0xf]
        %v1426 = vld [vmem:[%s204 + $0x6c] sm:$0xf]
        %v1427 = vld [vmem:[%s204 + $0x70] sm:$0xf]
        %v1428 = vld [vmem:[%s204 + $0x74] sm:$0xf]
        %v1429 = vld [vmem:[%s204 + $0x78] sm:$0xf]
        %v1430 = vld [vmem:[%s204 + $0x7c] sm:$0xf]
        %v1431 = vld [vmem:[%s204 + $0x80] sm:$0xf]
        %v1432 = vld [vmem:[%s204 + $0x84] sm:$0xf]
        %v1433 = vld [vmem:[%s204 + $0x88] sm:$0xf]
        %v1434 = vld [vmem:[%s204 + $0x8c] sm:$0xf]
        %v1435 = vld [vmem:[%s204 + $0x90] sm:$0xf]
        %v1436 = vld [vmem:[%s204 + $0x94] sm:$0xf]
        %v1437 = vld [vmem:[%s204 + $0x98] sm:$0xf]
        %v1438 = vld [vmem:[%s204 + $0x9c] sm:$0xf]
        %v1439 = vld [vmem:[%s204 + $0xa0] sm:$0xf]
        %v1440 = vld [vmem:[%s204 + $0xa4] sm:$0xf]
        %v1441 = vld [vmem:[%s204 + $0xa8] sm:$0xf]
        %v1442 = vld [vmem:[%s204 + $0xac] sm:$0x7]
        %s1443 = scalar_lea.vmem [#allocation5], 192
        %v1444 = vld [vmem:[%s1443] sm:$0xf]
        %v1445 = vld [vmem:[%s1443 + $0x4] sm:$0xf]
        %v1446 = vld [vmem:[%s1443 + $0x8] sm:$0xf]
        %v1447 = vld [vmem:[%s1443 + $0xc] sm:$0xf]
        %v1448 = vld [vmem:[%s1443 + $0x10] sm:$0xf]
        %v1449 = vld [vmem:[%s1443 + $0x14] sm:$0xf]
        %v1450 = vld [vmem:[%s1443 + $0x18] sm:$0xf]
        %v1451 = vld [vmem:[%s1443 + $0x1c] sm:$0xf]
        %v1452 = vld [vmem:[%s1443 + $0x20] sm:$0xf]
        %v1453 = vld [vmem:[%s1443 + $0x24] sm:$0xf]
        %v1454 = vld [vmem:[%s1443 + $0x28] sm:$0xf]
        %v1455 = vld [vmem:[%s1443 + $0x2c] sm:$0xf]
        %v1456 = vld [vmem:[%s1443 + $0x30] sm:$0xf]
        %v1457 = vld [vmem:[%s1443 + $0x34] sm:$0xf]
        %v1458 = vld [vmem:[%s1443 + $0x38] sm:$0xf]
        %v1459 = vld [vmem:[%s1443 + $0x3c] sm:$0xf]
        %v1501 = vunpack.c.l.b16 %v1402
        %v1502 = vunpack.c.l.b16 %v1403
        %v1503 = vunpack.c.l.b16 %v1404
        %v1504 = vunpack.c.l.b16 %v1405
        %v1505 = vunpack.c.l.b16 %v1406
        %v1506 = vunpack.c.l.b16 %v1407
        %v1507 = vunpack.c.l.b16 %v1408
        %v1508 = vunpack.c.l.b16 %v1409
        %v1509 = vunpack.c.l.b16 %v1410
        %v1510 = vunpack.c.l.b16 %v1411
        %v1511 = vunpack.c.l.b16 %v1412
        %v1512 = vunpack.c.l.b16 %v1413
        %v1513 = vunpack.c.l.b16 %v1414
        %v1514 = vunpack.c.l.b16 %v1415
        %v1515 = vunpack.c.l.b16 %v1416
        %v1516 = vunpack.c.l.b16 %v1417
        %v1517 = vunpack.c.l.b16 %v1418
        %v1518 = vunpack.c.l.b16 %v1419
        %v1519 = vunpack.c.l.b16 %v1420
        %v1520 = vunpack.c.l.b16 %v1421
        %v1521 = vunpack.c.l.b16 %v1422
        %v1522 = vunpack.c.l.b16 %v1423
        %v1523 = vunpack.c.l.b16 %v1424
        %v1524 = vunpack.c.l.b16 %v1425
        %v1525 = vunpack.c.l.b16 %v1426
        %v1526 = vunpack.c.l.b16 %v1427
        %v1527 = vunpack.c.l.b16 %v1428
        %v1528 = vunpack.c.l.b16 %v1429
        %v1529 = vunpack.c.l.b16 %v1430
        %v1530 = vunpack.c.l.b16 %v1431
        %v1531 = vunpack.c.l.b16 %v1432
        %v1532 = vunpack.c.l.b16 %v1433
        %v1533 = vunpack.c.l.b16 %v1434
        %v1534 = vunpack.c.l.b16 %v1435
        %v1535 = vunpack.c.l.b16 %v1436
        %v1536 = vunpack.c.l.b16 %v1437
        %v1537 = vunpack.c.l.b16 %v1438
        %v1538 = vunpack.c.l.b16 %v1439
        %v1539 = vunpack.c.l.b16 %v1440
        %v1540 = vunpack.c.l.b16 %v1441
        %v1541 = vunpack.c.l.b16 %v1442
        %v1542 = vpack.c.b16 %v1502, %v1501
        %v1543 = vpack.c.b16 %v1504, %v1503
        %v1544 = vpack.c.b16 %v1506, %v1505
        %v1545 = vpack.c.b16 %v1508, %v1507
        %v1546 = vpack.c.b16 %v1510, %v1509
        %v1547 = vpack.c.b16 %v1512, %v1511
        %v1548 = vpack.c.b16 %v1514, %v1513
        %v1549 = vpack.c.b16 %v1516, %v1515
        %v1550 = vpack.c.b16 %v1518, %v1517
        %v1551 = vpack.c.b16 %v1520, %v1519
        %v1552 = vpack.c.b16 %v1522, %v1521
        %v1553 = vpack.c.b16 %v1524, %v1523
        %v1554 = vpack.c.b16 %v1526, %v1525
        %v1555 = vpack.c.b16 %v1528, %v1527
        %v1556 = vpack.c.b16 %v1530, %v1529
        %v1557 = vpack.c.b16 %v1532, %v1531
        %v1558 = vpack.c.b16 %v1534, %v1533
        %v1559 = vpack.c.b16 %v1536, %v1535
        %v1560 = vpack.c.b16 %v1538, %v1537
        %v1561 = vpack.c.b16 %v1540, %v1539
        %v1562 = vpack.c.b16 %v1541, %v1541
        %v1564 = vshrl.u32 %v1542, 16
        %v1566 = vshll.u32 %v1542, 16
        %v1568 = vrot.slane %v1566, 1
        %v1569 = vor.u32 %v1564, %v1568
        %v1571 = vshll.u32 %v1543, 16
        %v1573 = vrot.slane %v1571, 1
        %v1574 = vsel %vm1011, %v1569, %v1573
        %v1575 = vshrl.u32 %v1543, 16
        %v1577 = vor.u32 %v1575, %v1573
        %v1579 = vshll.u32 %v1544, 16
        %v1581 = vrot.slane %v1579, 1
        %v1582 = vsel %vm1011, %v1577, %v1581
        %v1583 = vshrl.u32 %v1544, 16
        %v1585 = vor.u32 %v1583, %v1581
        %v1587 = vshll.u32 %v1545, 16
        %v1589 = vrot.slane %v1587, 1
        %v1590 = vsel %vm1011, %v1585, %v1589
        %v1591 = vshrl.u32 %v1545, 16
        %v1593 = vor.u32 %v1591, %v1589
        %v1595 = vshll.u32 %v1546, 16
        %v1597 = vrot.slane %v1595, 1
        %v1598 = vsel %vm1011, %v1593, %v1597
        %v1599 = vshrl.u32 %v1546, 16
        %v1601 = vor.u32 %v1599, %v1597
        %v1603 = vshll.u32 %v1547, 16
        %v1605 = vrot.slane %v1603, 1
        %v1606 = vsel %vm1011, %v1601, %v1605
        %v1607 = vshrl.u32 %v1547, 16
        %v1609 = vor.u32 %v1607, %v1605
        %v1611 = vshll.u32 %v1548, 16
        %v1613 = vrot.slane %v1611, 1
        %v1614 = vsel %vm1011, %v1609, %v1613
        %v1615 = vshrl.u32 %v1548, 16
        %v1617 = vor.u32 %v1615, %v1613
        %v1619 = vshll.u32 %v1549, 16
        %v1621 = vrot.slane %v1619, 1
        %v1622 = vsel %vm1011, %v1617, %v1621
        %v1623 = vshrl.u32 %v1549, 16
        %v1625 = vor.u32 %v1623, %v1621
        %v1627 = vshll.u32 %v1550, 16
        %v1629 = vrot.slane %v1627, 1
        %v1630 = vsel %vm1011, %v1625, %v1629
        %v1631 = vshrl.u32 %v1550, 16
        %v1633 = vor.u32 %v1631, %v1629
        %v1635 = vshll.u32 %v1551, 16
        %v1637 = vrot.slane %v1635, 1
        %v1638 = vsel %vm1011, %v1633, %v1637
        %v1639 = vshrl.u32 %v1551, 16
        %v1641 = vor.u32 %v1639, %v1637
        %v1643 = vshll.u32 %v1552, 16
        %v1645 = vrot.slane %v1643, 1
        %v1646 = vsel %vm1011, %v1641, %v1645
        %v1647 = vshrl.u32 %v1552, 16
        %v1649 = vor.u32 %v1647, %v1645
        %v1651 = vshll.u32 %v1553, 16
        %v1653 = vrot.slane %v1651, 1
        %v1654 = vsel %vm1011, %v1649, %v1653
        %v1655 = vshrl.u32 %v1553, 16
        %v1657 = vor.u32 %v1655, %v1653
        %v1659 = vshll.u32 %v1554, 16
        %v1661 = vrot.slane %v1659, 1
        %v1662 = vsel %vm1011, %v1657, %v1661
        %v1663 = vshrl.u32 %v1554, 16
        %v1665 = vor.u32 %v1663, %v1661
        %v1667 = vshll.u32 %v1555, 16
        %v1669 = vrot.slane %v1667, 1
        %v1670 = vsel %vm1011, %v1665, %v1669
        %v1671 = vshrl.u32 %v1555, 16
        %v1673 = vor.u32 %v1671, %v1669
        %v1675 = vshll.u32 %v1556, 16
        %v1677 = vrot.slane %v1675, 1
        %v1678 = vsel %vm1011, %v1673, %v1677
        %v1679 = vshrl.u32 %v1556, 16
        %v1681 = vor.u32 %v1679, %v1677
        %v1683 = vshll.u32 %v1557, 16
        %v1685 = vrot.slane %v1683, 1
        %v1686 = vsel %vm1011, %v1681, %v1685
        %v1687 = vshrl.u32 %v1557, 16
        %v1689 = vor.u32 %v1687, %v1685
        %v1691 = vshll.u32 %v1558, 16
        %v1693 = vrot.slane %v1691, 1
        %v1694 = vsel %vm1011, %v1689, %v1693
        %v1695 = vshrl.u32 %v1558, 16
        %v1697 = vor.u32 %v1695, %v1693
        %v1699 = vshll.u32 %v1559, 16
        %v1701 = vrot.slane %v1699, 1
        %v1702 = vsel %vm1011, %v1697, %v1701
        %v1703 = vshrl.u32 %v1559, 16
        %v1705 = vor.u32 %v1703, %v1701
        %v1707 = vshll.u32 %v1560, 16
        %v1709 = vrot.slane %v1707, 1
        %v1710 = vsel %vm1011, %v1705, %v1709
        %v1711 = vshrl.u32 %v1560, 16
        %v1713 = vor.u32 %v1711, %v1709
        %v1715 = vshll.u32 %v1561, 16
        %v1717 = vrot.slane %v1715, 1
        %v1718 = vsel %vm1011, %v1713, %v1717
        %v1719 = vshrl.u32 %v1561, 16
        %v1721 = vor.u32 %v1719, %v1717
        %v1723 = vshll.u32 %v1562, 16
        %v1725 = vrot.slane %v1723, 1
        %v1726 = vsel %vm1011, %v1721, %v1725
        %v1727 = vshrl.u32 %v1562, 16
        %v1729 = vor.u32 %v1727, %v1725
        %v1767 = vunpack.c.l.b16 %v1444
        %v1768 = vunpack.c.l.b16 %v1445
        %v1769 = vunpack.c.l.b16 %v1446
        %v1770 = vunpack.c.l.b16 %v1447
        %v1771 = vunpack.c.l.b16 %v1448
        %v1772 = vunpack.c.l.b16 %v1449
        %v1773 = vunpack.c.l.b16 %v1450
        %v1774 = vunpack.c.l.b16 %v1451
        %v1775 = vunpack.c.l.b16 %v1452
        %v1776 = vunpack.c.l.b16 %v1453
        %v1777 = vunpack.c.l.b16 %v1454
        %v1778 = vunpack.c.l.b16 %v1455
        %v1779 = vunpack.c.l.b16 %v1456
        %v1780 = vunpack.c.l.b16 %v1457
        %v1781 = vunpack.c.l.b16 %v1458
        %v1782 = vunpack.c.l.b16 %v1459
        %v1783 = vpack.c.b16 %v1768, %v1767
        %v1784 = vpack.c.b16 %v1770, %v1769
        %v1785 = vpack.c.b16 %v1772, %v1771
        %v1786 = vpack.c.b16 %v1774, %v1773
        %v1787 = vpack.c.b16 %v1776, %v1775
        %v1788 = vpack.c.b16 %v1778, %v1777
        %v1789 = vpack.c.b16 %v1780, %v1779
        %v1790 = vpack.c.b16 %v1782, %v1781
        %1799 = vmatpush.bf16.msra.mxu0 %v1790
        %1800 = vmatpush.bf16.msra.mxu0 %v1789
        %1801 = vmatpush.bf16.msra.mxu0 %v1788
        %1802 = vmatpush.bf16.msra.mxu0 %v1787
        %1803 = vmatpush.bf16.msra.mxu0 %v1786
        %1804 = vmatpush.bf16.msra.mxu0 %v1785
        %1805 = vmatpush.bf16.msra.mxu0 %v1784
        %1806 = vmatpush.bf16.msra.mxu0 %v1783
        %1807 = vmatmul.bf16.gmra.mxu0 %v1574
        %v1808 = vpop.f32.mrf.mxu0
        %v1809 = vadd.f32 0.0, %v1808
        %v1810 = vpop.f32.mrf.mxu0
        %v1811 = vadd.f32 0.0, %v1810
        %1812 = vmatmul.bf16.gmra.mxu0 %v1582
        %v1813 = vpop.f32.mrf.mxu0
        %v1814 = vadd.f32 0.0, %v1813
        %v1815 = vpop.f32.mrf.mxu0
        %v1816 = vadd.f32 0.0, %v1815
        %1817 = vmatmul.bf16.gmra.mxu0 %v1590
        %v1818 = vpop.f32.mrf.mxu0
        %v1819 = vadd.f32 0.0, %v1818
        %v1820 = vpop.f32.mrf.mxu0
        %v1821 = vadd.f32 0.0, %v1820
        %1822 = vmatmul.bf16.gmra.mxu0 %v1598
        %v1823 = vpop.f32.mrf.mxu0
        %v1824 = vadd.f32 0.0, %v1823
        %v1825 = vpop.f32.mrf.mxu0
        %v1826 = vadd.f32 0.0, %v1825
        %1827 = vmatmul.bf16.gmra.mxu0 %v1606
        %v1828 = vpop.f32.mrf.mxu0
        %v1829 = vadd.f32 0.0, %v1828
        %v1830 = vpop.f32.mrf.mxu0
        %v1831 = vadd.f32 0.0, %v1830
        %1832 = vmatmul.bf16.gmra.mxu0 %v1614
        %v1833 = vpop.f32.mrf.mxu0
        %v1834 = vadd.f32 0.0, %v1833
        %v1835 = vpop.f32.mrf.mxu0
        %v1836 = vadd.f32 0.0, %v1835
        %1837 = vmatmul.bf16.gmra.mxu0 %v1622
        %v1838 = vpop.f32.mrf.mxu0
        %v1839 = vadd.f32 0.0, %v1838
        %v1840 = vpop.f32.mrf.mxu0
        %v1841 = vadd.f32 0.0, %v1840
        %1842 = vmatmul.bf16.gmra.mxu0 %v1630
        %v1843 = vpop.f32.mrf.mxu0
        %v1844 = vadd.f32 0.0, %v1843
        %v1845 = vpop.f32.mrf.mxu0
        %v1846 = vadd.f32 0.0, %v1845
        %1847 = vmatmul.bf16.gmra.mxu0 %v1638
        %v1848 = vpop.f32.mrf.mxu0
        %v1849 = vadd.f32 0.0, %v1848
        %v1850 = vpop.f32.mrf.mxu0
        %v1851 = vadd.f32 0.0, %v1850
        %1852 = vmatmul.bf16.gmra.mxu0 %v1646
        %v1853 = vpop.f32.mrf.mxu0
        %v1854 = vadd.f32 0.0, %v1853
        %v1855 = vpop.f32.mrf.mxu0
        %v1856 = vadd.f32 0.0, %v1855
        %1857 = vmatmul.bf16.gmra.mxu0 %v1654
        %v1858 = vpop.f32.mrf.mxu0
        %v1859 = vadd.f32 0.0, %v1858
        %v1860 = vpop.f32.mrf.mxu0
        %v1861 = vadd.f32 0.0, %v1860
        %1862 = vmatmul.bf16.gmra.mxu0 %v1662
        %v1863 = vpop.f32.mrf.mxu0
        %v1864 = vadd.f32 0.0, %v1863
        %v1865 = vpop.f32.mrf.mxu0
        %v1866 = vadd.f32 0.0, %v1865
        %1867 = vmatmul.bf16.gmra.mxu0 %v1670
        %v1868 = vpop.f32.mrf.mxu0
        %v1869 = vadd.f32 0.0, %v1868
        %v1870 = vpop.f32.mrf.mxu0
        %v1871 = vadd.f32 0.0, %v1870
        %1872 = vmatmul.bf16.gmra.mxu0 %v1678
        %v1873 = vpop.f32.mrf.mxu0
        %v1874 = vadd.f32 0.0, %v1873
        %v1875 = vpop.f32.mrf.mxu0
        %v1876 = vadd.f32 0.0, %v1875
        %1877 = vmatmul.bf16.gmra.mxu0 %v1686
        %v1878 = vpop.f32.mrf.mxu0
        %v1879 = vadd.f32 0.0, %v1878
        %v1880 = vpop.f32.mrf.mxu0
        %v1881 = vadd.f32 0.0, %v1880
        %1882 = vmatmul.bf16.gmra.mxu0 %v1694
        %v1883 = vpop.f32.mrf.mxu0
        %v1884 = vadd.f32 0.0, %v1883
        %v1885 = vpop.f32.mrf.mxu0
        %v1886 = vadd.f32 0.0, %v1885
        %1887 = vmatmul.bf16.gmra.mxu0 %v1702
        %v1888 = vpop.f32.mrf.mxu0
        %v1889 = vadd.f32 0.0, %v1888
        %v1890 = vpop.f32.mrf.mxu0
        %v1891 = vadd.f32 0.0, %v1890
        %1892 = vmatmul.bf16.gmra.mxu0 %v1710
        %v1893 = vpop.f32.mrf.mxu0
        %v1894 = vadd.f32 0.0, %v1893
        %v1895 = vpop.f32.mrf.mxu0
        %v1896 = vadd.f32 0.0, %v1895
        %1897 = vmatmul.bf16.gmra.mxu0 %v1718
        %v1898 = vpop.f32.mrf.mxu0
        %v1899 = vadd.f32 0.0, %v1898
        %v1900 = vpop.f32.mrf.mxu0
        %v1901 = vadd.f32 0.0, %v1900
        %1902 = vmatmul.bf16.gmra.mxu0 %v1726
        %v1903 = vpop.f32.mrf.mxu0
        %v1904 = vadd.f32 0.0, %v1903
        %v1905 = vpop.f32.mrf.mxu0
        %v1906 = vadd.f32 0.0, %v1905
        %1907 = vmatmul.bf16.gmra.mxu0 %v1729
        %v1908 = vpop.f32.mrf.mxu0
        %v1909 = vadd.f32 0.0, %v1908
        %v1910 = vpop.f32.mrf.mxu0
        %1911 = vdwg.mxu0
        %v1912 = vadd.f32 %v1361, %v1809
        %v1913 = vadd.f32 %v1362, %v1811
        %v1914 = vadd.f32 %v1363, %v1814
        %v1915 = vadd.f32 %v1364, %v1816
        %v1916 = vadd.f32 %v1365, %v1819
        %v1917 = vadd.f32 %v1366, %v1821
        %v1918 = vadd.f32 %v1367, %v1824
        %v1919 = vadd.f32 %v1368, %v1826
        %v1920 = vadd.f32 %v1369, %v1829
        %v1921 = vadd.f32 %v1370, %v1831
        %v1922 = vadd.f32 %v1371, %v1834
        %v1923 = vadd.f32 %v1372, %v1836
        %v1924 = vadd.f32 %v1373, %v1839
        %v1925 = vadd.f32 %v1374, %v1841
        %v1926 = vadd.f32 %v1375, %v1844
        %v1927 = vadd.f32 %v1376, %v1846
        %v1928 = vadd.f32 %v1377, %v1849
        %v1929 = vadd.f32 %v1378, %v1851
        %v1930 = vadd.f32 %v1379, %v1854
        %v1931 = vadd.f32 %v1380, %v1856
        %v1932 = vadd.f32 %v1381, %v1859
        %v1933 = vadd.f32 %v1382, %v1861
        %v1934 = vadd.f32 %v1383, %v1864
        %v1935 = vadd.f32 %v1384, %v1866
        %v1936 = vadd.f32 %v1385, %v1869
        %v1937 = vadd.f32 %v1386, %v1871
        %v1938 = vadd.f32 %v1387, %v1874
        %v1939 = vadd.f32 %v1388, %v1876
        %v1940 = vadd.f32 %v1389, %v1879
        %v1941 = vadd.f32 %v1390, %v1881
        %v1942 = vadd.f32 %v1391, %v1884
        %v1943 = vadd.f32 %v1392, %v1886
        %v1944 = vadd.f32 %v1393, %v1889
        %v1945 = vadd.f32 %v1394, %v1891
        %v1946 = vadd.f32 %v1395, %v1894
        %v1947 = vadd.f32 %v1396, %v1896
        %v1948 = vadd.f32 %v1397, %v1899
        %v1949 = vadd.f32 %v1398, %v1901
        %v1950 = vadd.f32 %v1399, %v1904
        %v1951 = vadd.f32 %v1400, %v1906
        %v1952 = vadd.f32 %v1401, %v1909
        %v1953 = vld [vmem:[%s204 + $0xc] sm:$0xe]
        %s1954 = scalar_lea.vmem [#allocation5], 256
        %v1955 = vld [vmem:[%s1954] sm:$0xf]
        %v1956 = vld [vmem:[%s1954 + $0x4] sm:$0xf]
        %v1957 = vld [vmem:[%s1954 + $0x8] sm:$0xf]
        %v1958 = vld [vmem:[%s1954 + $0xc] sm:$0xf]
        %v1959 = vld [vmem:[%s1954 + $0x10] sm:$0xf]
        %v1960 = vld [vmem:[%s1954 + $0x14] sm:$0xf]
        %v1961 = vld [vmem:[%s1954 + $0x18] sm:$0xf]
        %v1962 = vld [vmem:[%s1954 + $0x1c] sm:$0xf]
        %v1963 = vld [vmem:[%s1954 + $0x20] sm:$0xf]
        %v1964 = vld [vmem:[%s1954 + $0x24] sm:$0xf]
        %v1965 = vld [vmem:[%s1954 + $0x28] sm:$0xf]
        %v1966 = vld [vmem:[%s1954 + $0x2c] sm:$0xf]
        %v1967 = vld [vmem:[%s1954 + $0x30] sm:$0xf]
        %v1968 = vld [vmem:[%s1954 + $0x34] sm:$0xf]
        %v1969 = vld [vmem:[%s1954 + $0x38] sm:$0xf]
        %v1970 = vld [vmem:[%s1954 + $0x3c] sm:$0xf]
        %v1972 = vunpack.c.l.b16 %v1953
        %v1973 = vpack.c.b16 %v1502, %v1972
        %vm1974 = vcmask 1046528
        %v1975 = vrot.slane %v1973, 1
        %v1976 = vrot.slane %v1543, 1
        %v1977 = vsel %vm1974, %v1975, %v1976
        %v1978 = vrot.slane %v1544, 1
        %v1979 = vsel %vm1974, %v1976, %v1978
        %v1980 = vrot.slane %v1545, 1
        %v1981 = vsel %vm1974, %v1978, %v1980
        %v1982 = vrot.slane %v1546, 1
        %v1983 = vsel %vm1974, %v1980, %v1982
        %v1984 = vrot.slane %v1547, 1
        %v1985 = vsel %vm1974, %v1982, %v1984
        %v1986 = vrot.slane %v1548, 1
        %v1987 = vsel %vm1974, %v1984, %v1986
        %v1988 = vrot.slane %v1549, 1
        %v1989 = vsel %vm1974, %v1986, %v1988
        %v1990 = vrot.slane %v1550, 1
        %v1991 = vsel %vm1974, %v1988, %v1990
        %v1992 = vrot.slane %v1551, 1
        %v1993 = vsel %vm1974, %v1990, %v1992
        %v1994 = vrot.slane %v1552, 1
        %v1995 = vsel %vm1974, %v1992, %v1994
        %v1996 = vrot.slane %v1553, 1
        %v1997 = vsel %vm1974, %v1994, %v1996
        %v1998 = vrot.slane %v1554, 1
        %v1999 = vsel %vm1974, %v1996, %v1998
        %v2000 = vrot.slane %v1555, 1
        %v2001 = vsel %vm1974, %v1998, %v2000
        %v2002 = vrot.slane %v1556, 1
        %v2003 = vsel %vm1974, %v2000, %v2002
        %v2004 = vrot.slane %v1557, 1
        %v2005 = vsel %vm1974, %v2002, %v2004
        %v2006 = vrot.slane %v1558, 1
        %v2007 = vsel %vm1974, %v2004, %v2006
        %v2008 = vrot.slane %v1559, 1
        %v2009 = vsel %vm1974, %v2006, %v2008
        %v2010 = vrot.slane %v1560, 1
        %v2011 = vsel %vm1974, %v2008, %v2010
        %v2012 = vrot.slane %v1561, 1
        %v2013 = vsel %vm1974, %v2010, %v2012
        %v2014 = vrot.slane %v1562, 1
        %v2015 = vsel %vm1974, %v2012, %v2014
        %v2053 = vunpack.c.l.b16 %v1955
        %v2054 = vunpack.c.l.b16 %v1956
        %v2055 = vunpack.c.l.b16 %v1957
        %v2056 = vunpack.c.l.b16 %v1958
        %v2057 = vunpack.c.l.b16 %v1959
        %v2058 = vunpack.c.l.b16 %v1960
        %v2059 = vunpack.c.l.b16 %v1961
        %v2060 = vunpack.c.l.b16 %v1962
        %v2061 = vunpack.c.l.b16 %v1963
        %v2062 = vunpack.c.l.b16 %v1964
        %v2063 = vunpack.c.l.b16 %v1965
        %v2064 = vunpack.c.l.b16 %v1966
        %v2065 = vunpack.c.l.b16 %v1967
        %v2066 = vunpack.c.l.b16 %v1968
        %v2067 = vunpack.c.l.b16 %v1969
        %v2068 = vunpack.c.l.b16 %v1970
        %v2069 = vpack.c.b16 %v2054, %v2053
        %v2070 = vpack.c.b16 %v2056, %v2055
        %v2071 = vpack.c.b16 %v2058, %v2057
        %v2072 = vpack.c.b16 %v2060, %v2059
        %v2073 = vpack.c.b16 %v2062, %v2061
        %v2074 = vpack.c.b16 %v2064, %v2063
        %v2075 = vpack.c.b16 %v2066, %v2065
        %v2076 = vpack.c.b16 %v2068, %v2067
        %2085 = vmatpush.bf16.msra.mxu0 %v2076
        %2086 = vmatpush.bf16.msra.mxu0 %v2075
        %2087 = vmatpush.bf16.msra.mxu0 %v2074
        %2088 = vmatpush.bf16.msra.mxu0 %v2073
        %2089 = vmatpush.bf16.msra.mxu0 %v2072
        %2090 = vmatpush.bf16.msra.mxu0 %v2071
        %2091 = vmatpush.bf16.msra.mxu0 %v2070
        %2092 = vmatpush.bf16.msra.mxu0 %v2069
        %2093 = vmatmul.bf16.gmra.mxu0 %v1977
        %v2094 = vpop.f32.mrf.mxu0
        %v2095 = vadd.f32 0.0, %v2094
        %v2096 = vpop.f32.mrf.mxu0
        %v2097 = vadd.f32 0.0, %v2096
        %2098 = vmatmul.bf16.gmra.mxu0 %v1979
        %v2099 = vpop.f32.mrf.mxu0
        %v2100 = vadd.f32 0.0, %v2099
        %v2101 = vpop.f32.mrf.mxu0
        %v2102 = vadd.f32 0.0, %v2101
        %2103 = vmatmul.bf16.gmra.mxu0 %v1981
        %v2104 = vpop.f32.mrf.mxu0
        %v2105 = vadd.f32 0.0, %v2104
        %v2106 = vpop.f32.mrf.mxu0
        %v2107 = vadd.f32 0.0, %v2106
        %2108 = vmatmul.bf16.gmra.mxu0 %v1983
        %v2109 = vpop.f32.mrf.mxu0
        %v2110 = vadd.f32 0.0, %v2109
        %v2111 = vpop.f32.mrf.mxu0
        %v2112 = vadd.f32 0.0, %v2111
        %2113 = vmatmul.bf16.gmra.mxu0 %v1985
        %v2114 = vpop.f32.mrf.mxu0
        %v2115 = vadd.f32 0.0, %v2114
        %v2116 = vpop.f32.mrf.mxu0
        %v2117 = vadd.f32 0.0, %v2116
        %2118 = vmatmul.bf16.gmra.mxu0 %v1987
        %v2119 = vpop.f32.mrf.mxu0
        %v2120 = vadd.f32 0.0, %v2119
        %v2121 = vpop.f32.mrf.mxu0
        %v2122 = vadd.f32 0.0, %v2121
        %2123 = vmatmul.bf16.gmra.mxu0 %v1989
        %v2124 = vpop.f32.mrf.mxu0
        %v2125 = vadd.f32 0.0, %v2124
        %v2126 = vpop.f32.mrf.mxu0
        %v2127 = vadd.f32 0.0, %v2126
        %2128 = vmatmul.bf16.gmra.mxu0 %v1991
        %v2129 = vpop.f32.mrf.mxu0
        %v2130 = vadd.f32 0.0, %v2129
        %v2131 = vpop.f32.mrf.mxu0
        %v2132 = vadd.f32 0.0, %v2131
        %2133 = vmatmul.bf16.gmra.mxu0 %v1993
        %v2134 = vpop.f32.mrf.mxu0
        %v2135 = vadd.f32 0.0, %v2134
        %v2136 = vpop.f32.mrf.mxu0
        %v2137 = vadd.f32 0.0, %v2136
        %2138 = vmatmul.bf16.gmra.mxu0 %v1995
        %v2139 = vpop.f32.mrf.mxu0
        %v2140 = vadd.f32 0.0, %v2139
        %v2141 = vpop.f32.mrf.mxu0
        %v2142 = vadd.f32 0.0, %v2141
        %2143 = vmatmul.bf16.gmra.mxu0 %v1997
        %v2144 = vpop.f32.mrf.mxu0
        %v2145 = vadd.f32 0.0, %v2144
        %v2146 = vpop.f32.mrf.mxu0
        %v2147 = vadd.f32 0.0, %v2146
        %2148 = vmatmul.bf16.gmra.mxu0 %v1999
        %v2149 = vpop.f32.mrf.mxu0
        %v2150 = vadd.f32 0.0, %v2149
        %v2151 = vpop.f32.mrf.mxu0
        %v2152 = vadd.f32 0.0, %v2151
        %2153 = vmatmul.bf16.gmra.mxu0 %v2001
        %v2154 = vpop.f32.mrf.mxu0
        %v2155 = vadd.f32 0.0, %v2154
        %v2156 = vpop.f32.mrf.mxu0
        %v2157 = vadd.f32 0.0, %v2156
        %2158 = vmatmul.bf16.gmra.mxu0 %v2003
        %v2159 = vpop.f32.mrf.mxu0
        %v2160 = vadd.f32 0.0, %v2159
        %v2161 = vpop.f32.mrf.mxu0
        %v2162 = vadd.f32 0.0, %v2161
        %2163 = vmatmul.bf16.gmra.mxu0 %v2005
        %v2164 = vpop.f32.mrf.mxu0
        %v2165 = vadd.f32 0.0, %v2164
        %v2166 = vpop.f32.mrf.mxu0
        %v2167 = vadd.f32 0.0, %v2166
        %2168 = vmatmul.bf16.gmra.mxu0 %v2007
        %v2169 = vpop.f32.mrf.mxu0
        %v2170 = vadd.f32 0.0, %v2169
        %v2171 = vpop.f32.mrf.mxu0
        %v2172 = vadd.f32 0.0, %v2171
        %2173 = vmatmul.bf16.gmra.mxu0 %v2009
        %v2174 = vpop.f32.mrf.mxu0
        %v2175 = vadd.f32 0.0, %v2174
        %v2176 = vpop.f32.mrf.mxu0
        %v2177 = vadd.f32 0.0, %v2176
        %2178 = vmatmul.bf16.gmra.mxu0 %v2011
        %v2179 = vpop.f32.mrf.mxu0
        %v2180 = vadd.f32 0.0, %v2179
        %v2181 = vpop.f32.mrf.mxu0
        %v2182 = vadd.f32 0.0, %v2181
        %2183 = vmatmul.bf16.gmra.mxu0 %v2013
        %v2184 = vpop.f32.mrf.mxu0
        %v2185 = vadd.f32 0.0, %v2184
        %v2186 = vpop.f32.mrf.mxu0
        %v2187 = vadd.f32 0.0, %v2186
        %2188 = vmatmul.bf16.gmra.mxu0 %v2015
        %v2189 = vpop.f32.mrf.mxu0
        %v2190 = vadd.f32 0.0, %v2189
        %v2191 = vpop.f32.mrf.mxu0
        %v2192 = vadd.f32 0.0, %v2191
        %2193 = vmatmul.bf16.gmra.mxu0 %v2014
        %v2194 = vpop.f32.mrf.mxu0
        %v2195 = vadd.f32 0.0, %v2194
        %v2196 = vpop.f32.mrf.mxu0
        %2197 = vdwg.mxu0
        %v2198 = vadd.f32 %v1912, %v2095
        %v2199 = vadd.f32 %v1913, %v2097
        %v2200 = vadd.f32 %v1914, %v2100
        %v2201 = vadd.f32 %v1915, %v2102
        %v2202 = vadd.f32 %v1916, %v2105
        %v2203 = vadd.f32 %v1917, %v2107
        %v2204 = vadd.f32 %v1918, %v2110
        %v2205 = vadd.f32 %v1919, %v2112
        %v2206 = vadd.f32 %v1920, %v2115
        %v2207 = vadd.f32 %v1921, %v2117
        %v2208 = vadd.f32 %v1922, %v2120
        %v2209 = vadd.f32 %v1923, %v2122
        %v2210 = vadd.f32 %v1924, %v2125
        %v2211 = vadd.f32 %v1925, %v2127
        %v2212 = vadd.f32 %v1926, %v2130
        %v2213 = vadd.f32 %v1927, %v2132
        %v2214 = vadd.f32 %v1928, %v2135
        %v2215 = vadd.f32 %v1929, %v2137
        %v2216 = vadd.f32 %v1930, %v2140
        %v2217 = vadd.f32 %v1931, %v2142
        %v2218 = vadd.f32 %v1932, %v2145
        %v2219 = vadd.f32 %v1933, %v2147
        %v2220 = vadd.f32 %v1934, %v2150
        %v2221 = vadd.f32 %v1935, %v2152
        %v2222 = vadd.f32 %v1936, %v2155
        %v2223 = vadd.f32 %v1937, %v2157
        %v2224 = vadd.f32 %v1938, %v2160
        %v2225 = vadd.f32 %v1939, %v2162
        %v2226 = vadd.f32 %v1940, %v2165
        %v2227 = vadd.f32 %v1941, %v2167
        %v2228 = vadd.f32 %v1942, %v2170
        %v2229 = vadd.f32 %v1943, %v2172
        %v2230 = vadd.f32 %v1944, %v2175
        %v2231 = vadd.f32 %v1945, %v2177
        %v2232 = vadd.f32 %v1946, %v2180
        %v2233 = vadd.f32 %v1947, %v2182
        %v2234 = vadd.f32 %v1948, %v2185
        %v2235 = vadd.f32 %v1949, %v2187
        %v2236 = vadd.f32 %v1950, %v2190
        %v2237 = vadd.f32 %v1951, %v2192
        %v2238 = vadd.f32 %v1952, %v2195
        %v2239 = vld [vmem:[%s204 + $0xac] sm:$0xf]
        %s2240 = scalar_lea.vmem [#allocation5], 320
        %v2241 = vld [vmem:[%s2240] sm:$0xf]
        %v2242 = vld [vmem:[%s2240 + $0x4] sm:$0xf]
        %v2243 = vld [vmem:[%s2240 + $0x8] sm:$0xf]
        %v2244 = vld [vmem:[%s2240 + $0xc] sm:$0xf]
        %v2245 = vld [vmem:[%s2240 + $0x10] sm:$0xf]
        %v2246 = vld [vmem:[%s2240 + $0x14] sm:$0xf]
        %v2247 = vld [vmem:[%s2240 + $0x18] sm:$0xf]
        %v2248 = vld [vmem:[%s2240 + $0x1c] sm:$0xf]
        %v2249 = vld [vmem:[%s2240 + $0x20] sm:$0xf]
        %v2250 = vld [vmem:[%s2240 + $0x24] sm:$0xf]
        %v2251 = vld [vmem:[%s2240 + $0x28] sm:$0xf]
        %v2252 = vld [vmem:[%s2240 + $0x2c] sm:$0xf]
        %v2253 = vld [vmem:[%s2240 + $0x30] sm:$0xf]
        %v2254 = vld [vmem:[%s2240 + $0x34] sm:$0xf]
        %v2255 = vld [vmem:[%s2240 + $0x38] sm:$0xf]
        %v2256 = vld [vmem:[%s2240 + $0x3c] sm:$0xf]
        %v2258 = vunpack.c.l.b16 %v2239
        %v2259 = vpack.c.b16 %v2258, %v2258
        %vm2260 = vsmask.f32 6400
        %v2262 = vshrl.u32 %v1973, 16
        %v2264 = vrot.slane %v2262, 1
        %v2265 = vshll.u32 %v1973, 16
        %v2267 = vrot.slane %v2265, 2
        %v2268 = vor.u32 %v2264, %v2267
        %v2269 = vrot.slane %v1575, 1
        %v2270 = vrot.slane %v1571, 2
        %v2271 = vor.u32 %v2269, %v2270
        %v2272 = vsel %vm2260, %v2268, %v2271
        %v2273 = vrot.slane %v1583, 1
        %v2274 = vrot.slane %v1579, 2
        %v2275 = vor.u32 %v2273, %v2274
        %v2276 = vsel %vm2260, %v2271, %v2275
        %v2277 = vrot.slane %v1591, 1
        %v2278 = vrot.slane %v1587, 2
        %v2279 = vor.u32 %v2277, %v2278
        %v2280 = vsel %vm2260, %v2275, %v2279
        %v2281 = vrot.slane %v1599, 1
        %v2282 = vrot.slane %v1595, 2
        %v2283 = vor.u32 %v2281, %v2282
        %v2284 = vsel %vm2260, %v2279, %v2283
        %v2285 = vrot.slane %v1607, 1
        %v2286 = vrot.slane %v1603, 2
        %v2287 = vor.u32 %v2285, %v2286
        %v2288 = vsel %vm2260, %v2283, %v2287
        %v2289 = vrot.slane %v1615, 1
        %v2290 = vrot.slane %v1611, 2
        %v2291 = vor.u32 %v2289, %v2290
        %v2292 = vsel %vm2260, %v2287, %v2291
        %v2293 = vrot.slane %v1623, 1
        %v2294 = vrot.slane %v1619, 2
        %v2295 = vor.u32 %v2293, %v2294
        %v2296 = vsel %vm2260, %v2291, %v2295
        %v2297 = vrot.slane %v1631, 1
        %v2298 = vrot.slane %v1627, 2
        %v2299 = vor.u32 %v2297, %v2298
        %v2300 = vsel %vm2260, %v2295, %v2299
        %v2301 = vrot.slane %v1639, 1
        %v2302 = vrot.slane %v1635, 2
        %v2303 = vor.u32 %v2301, %v2302
        %v2304 = vsel %vm2260, %v2299, %v2303
        %v2305 = vrot.slane %v1647, 1
        %v2306 = vrot.slane %v1643, 2
        %v2307 = vor.u32 %v2305, %v2306
        %v2308 = vsel %vm2260, %v2303, %v2307
        %v2309 = vrot.slane %v1655, 1
        %v2310 = vrot.slane %v1651, 2
        %v2311 = vor.u32 %v2309, %v2310
        %v2312 = vsel %vm2260, %v2307, %v2311
        %v2313 = vrot.slane %v1663, 1
        %v2314 = vrot.slane %v1659, 2
        %v2315 = vor.u32 %v2313, %v2314
        %v2316 = vsel %vm2260, %v2311, %v2315
        %v2317 = vrot.slane %v1671, 1
        %v2318 = vrot.slane %v1667, 2
        %v2319 = vor.u32 %v2317, %v2318
        %v2320 = vsel %vm2260, %v2315, %v2319
        %v2321 = vrot.slane %v1679, 1
        %v2322 = vrot.slane %v1675, 2
        %v2323 = vor.u32 %v2321, %v2322
        %v2324 = vsel %vm2260, %v2319, %v2323
        %v2325 = vrot.slane %v1687, 1
        %v2326 = vrot.slane %v1683, 2
        %v2327 = vor.u32 %v2325, %v2326
        %v2328 = vsel %vm2260, %v2323, %v2327
        %v2329 = vrot.slane %v1695, 1
        %v2330 = vrot.slane %v1691, 2
        %v2331 = vor.u32 %v2329, %v2330
        %v2332 = vsel %vm2260, %v2327, %v2331
        %v2333 = vrot.slane %v1703, 1
        %v2334 = vrot.slane %v1699, 2
        %v2335 = vor.u32 %v2333, %v2334
        %v2336 = vsel %vm2260, %v2331, %v2335
        %v2337 = vrot.slane %v1711, 1
        %v2338 = vrot.slane %v1707, 2
        %v2339 = vor.u32 %v2337, %v2338
        %v2340 = vsel %vm2260, %v2335, %v2339
        %v2341 = vrot.slane %v1719, 1
        %v2342 = vrot.slane %v1715, 2
        %v2343 = vor.u32 %v2341, %v2342
        %v2344 = vsel %vm2260, %v2339, %v2343
        %v2346 = vshrl.u32 %v2259, 16
        %v2348 = vrot.slane %v2346, 1
        %v2349 = vshll.u32 %v2259, 16
        %v2351 = vrot.slane %v2349, 2
        %v2352 = vor.u32 %v2348, %v2351
        %v2353 = vsel %vm2260, %v2343, %v2352
        %v2391 = vunpack.c.l.b16 %v2241
        %v2392 = vunpack.c.l.b16 %v2242
        %v2393 = vunpack.c.l.b16 %v2243
        %v2394 = vunpack.c.l.b16 %v2244
        %v2395 = vunpack.c.l.b16 %v2245
        %v2396 = vunpack.c.l.b16 %v2246
        %v2397 = vunpack.c.l.b16 %v2247
        %v2398 = vunpack.c.l.b16 %v2248
        %v2399 = vunpack.c.l.b16 %v2249
        %v2400 = vunpack.c.l.b16 %v2250
        %v2401 = vunpack.c.l.b16 %v2251
        %v2402 = vunpack.c.l.b16 %v2252
        %v2403 = vunpack.c.l.b16 %v2253
        %v2404 = vunpack.c.l.b16 %v2254
        %v2405 = vunpack.c.l.b16 %v2255
        %v2406 = vunpack.c.l.b16 %v2256
        %v2407 = vpack.c.b16 %v2392, %v2391
        %v2408 = vpack.c.b16 %v2394, %v2393
        %v2409 = vpack.c.b16 %v2396, %v2395
        %v2410 = vpack.c.b16 %v2398, %v2397
        %v2411 = vpack.c.b16 %v2400, %v2399
        %v2412 = vpack.c.b16 %v2402, %v2401
        %v2413 = vpack.c.b16 %v2404, %v2403
        %v2414 = vpack.c.b16 %v2406, %v2405
        %2423 = vmatpush.bf16.msra.mxu0 %v2414
        %2424 = vmatpush.bf16.msra.mxu0 %v2413
        %2425 = vmatpush.bf16.msra.mxu0 %v2412
        %2426 = vmatpush.bf16.msra.mxu0 %v2411
        %2427 = vmatpush.bf16.msra.mxu0 %v2410
        %2428 = vmatpush.bf16.msra.mxu0 %v2409
        %2429 = vmatpush.bf16.msra.mxu0 %v2408
        %2430 = vmatpush.bf16.msra.mxu0 %v2407
        %2431 = vmatmul.bf16.gmra.mxu0 %v2272
        %v2432 = vpop.f32.mrf.mxu0
        %v2433 = vadd.f32 0.0, %v2432
        %v2434 = vpop.f32.mrf.mxu0
        %v2435 = vadd.f32 0.0, %v2434
        %2436 = vmatmul.bf16.gmra.mxu0 %v2276
        %v2437 = vpop.f32.mrf.mxu0
        %v2438 = vadd.f32 0.0, %v2437
        %v2439 = vpop.f32.mrf.mxu0
        %v2440 = vadd.f32 0.0, %v2439
        %2441 = vmatmul.bf16.gmra.mxu0 %v2280
        %v2442 = vpop.f32.mrf.mxu0
        %v2443 = vadd.f32 0.0, %v2442
        %v2444 = vpop.f32.mrf.mxu0
        %v2445 = vadd.f32 0.0, %v2444
        %2446 = vmatmul.bf16.gmra.mxu0 %v2284
        %v2447 = vpop.f32.mrf.mxu0
        %v2448 = vadd.f32 0.0, %v2447
        %v2449 = vpop.f32.mrf.mxu0
        %v2450 = vadd.f32 0.0, %v2449
        %2451 = vmatmul.bf16.gmra.mxu0 %v2288
        %v2452 = vpop.f32.mrf.mxu0
        %v2453 = vadd.f32 0.0, %v2452
        %v2454 = vpop.f32.mrf.mxu0
        %v2455 = vadd.f32 0.0, %v2454
        %2456 = vmatmul.bf16.gmra.mxu0 %v2292
        %v2457 = vpop.f32.mrf.mxu0
        %v2458 = vadd.f32 0.0, %v2457
        %v2459 = vpop.f32.mrf.mxu0
        %v2460 = vadd.f32 0.0, %v2459
        %2461 = vmatmul.bf16.gmra.mxu0 %v2296
        %v2462 = vpop.f32.mrf.mxu0
        %v2463 = vadd.f32 0.0, %v2462
        %v2464 = vpop.f32.mrf.mxu0
        %v2465 = vadd.f32 0.0, %v2464
        %2466 = vmatmul.bf16.gmra.mxu0 %v2300
        %v2467 = vpop.f32.mrf.mxu0
        %v2468 = vadd.f32 0.0, %v2467
        %v2469 = vpop.f32.mrf.mxu0
        %v2470 = vadd.f32 0.0, %v2469
        %2471 = vmatmul.bf16.gmra.mxu0 %v2304
        %v2472 = vpop.f32.mrf.mxu0
        %v2473 = vadd.f32 0.0, %v2472
        %v2474 = vpop.f32.mrf.mxu0
        %v2475 = vadd.f32 0.0, %v2474
        %2476 = vmatmul.bf16.gmra.mxu0 %v2308
        %v2477 = vpop.f32.mrf.mxu0
        %v2478 = vadd.f32 0.0, %v2477
        %v2479 = vpop.f32.mrf.mxu0
        %v2480 = vadd.f32 0.0, %v2479
        %2481 = vmatmul.bf16.gmra.mxu0 %v2312
        %v2482 = vpop.f32.mrf.mxu0
        %v2483 = vadd.f32 0.0, %v2482
        %v2484 = vpop.f32.mrf.mxu0
        %v2485 = vadd.f32 0.0, %v2484
        %2486 = vmatmul.bf16.gmra.mxu0 %v2316
        %v2487 = vpop.f32.mrf.mxu0
        %v2488 = vadd.f32 0.0, %v2487
        %v2489 = vpop.f32.mrf.mxu0
        %v2490 = vadd.f32 0.0, %v2489
        %2491 = vmatmul.bf16.gmra.mxu0 %v2320
        %v2492 = vpop.f32.mrf.mxu0
        %v2493 = vadd.f32 0.0, %v2492
        %v2494 = vpop.f32.mrf.mxu0
        %v2495 = vadd.f32 0.0, %v2494
        %2496 = vmatmul.bf16.gmra.mxu0 %v2324
        %v2497 = vpop.f32.mrf.mxu0
        %v2498 = vadd.f32 0.0, %v2497
        %v2499 = vpop.f32.mrf.mxu0
        %v2500 = vadd.f32 0.0, %v2499
        %2501 = vmatmul.bf16.gmra.mxu0 %v2328
        %v2502 = vpop.f32.mrf.mxu0
        %v2503 = vadd.f32 0.0, %v2502
        %v2504 = vpop.f32.mrf.mxu0
        %v2505 = vadd.f32 0.0, %v2504
        %2506 = vmatmul.bf16.gmra.mxu0 %v2332
        %v2507 = vpop.f32.mrf.mxu0
        %v2508 = vadd.f32 0.0, %v2507
        %v2509 = vpop.f32.mrf.mxu0
        %v2510 = vadd.f32 0.0, %v2509
        %2511 = vmatmul.bf16.gmra.mxu0 %v2336
        %v2512 = vpop.f32.mrf.mxu0
        %v2513 = vadd.f32 0.0, %v2512
        %v2514 = vpop.f32.mrf.mxu0
        %v2515 = vadd.f32 0.0, %v2514
        %2516 = vmatmul.bf16.gmra.mxu0 %v2340
        %v2517 = vpop.f32.mrf.mxu0
        %v2518 = vadd.f32 0.0, %v2517
        %v2519 = vpop.f32.mrf.mxu0
        %v2520 = vadd.f32 0.0, %v2519
        %2521 = vmatmul.bf16.gmra.mxu0 %v2344
        %v2522 = vpop.f32.mrf.mxu0
        %v2523 = vadd.f32 0.0, %v2522
        %v2524 = vpop.f32.mrf.mxu0
        %v2525 = vadd.f32 0.0, %v2524
        %2526 = vmatmul.bf16.gmra.mxu0 %v2353
        %v2527 = vpop.f32.mrf.mxu0
        %v2528 = vadd.f32 0.0, %v2527
        %v2529 = vpop.f32.mrf.mxu0
        %v2530 = vadd.f32 0.0, %v2529
        %2531 = vmatmul.bf16.gmra.mxu0 %v2352
        %v2532 = vpop.f32.mrf.mxu0
        %v2533 = vadd.f32 0.0, %v2532
        %v2534 = vpop.f32.mrf.mxu0
        %2535 = vdwg.mxu0
        %v2536 = vadd.f32 %v2198, %v2433
        %v2537 = vadd.f32 %v2199, %v2435
        %v2538 = vadd.f32 %v2200, %v2438
        %v2539 = vadd.f32 %v2201, %v2440
        %v2540 = vadd.f32 %v2202, %v2443
        %v2541 = vadd.f32 %v2203, %v2445
        %v2542 = vadd.f32 %v2204, %v2448
        %v2543 = vadd.f32 %v2205, %v2450
        %v2544 = vadd.f32 %v2206, %v2453
        %v2545 = vadd.f32 %v2207, %v2455
        %v2546 = vadd.f32 %v2208, %v2458
        %v2547 = vadd.f32 %v2209, %v2460
        %v2548 = vadd.f32 %v2210, %v2463
        %v2549 = vadd.f32 %v2211, %v2465
        %v2550 = vadd.f32 %v2212, %v2468
        %v2551 = vadd.f32 %v2213, %v2470
        %v2552 = vadd.f32 %v2214, %v2473
        %v2553 = vadd.f32 %v2215, %v2475
        %v2554 = vadd.f32 %v2216, %v2478
        %v2555 = vadd.f32 %v2217, %v2480
        %v2556 = vadd.f32 %v2218, %v2483
        %v2557 = vadd.f32 %v2219, %v2485
        %v2558 = vadd.f32 %v2220, %v2488
        %v2559 = vadd.f32 %v2221, %v2490
        %v2560 = vadd.f32 %v2222, %v2493
        %v2561 = vadd.f32 %v2223, %v2495
        %v2562 = vadd.f32 %v2224, %v2498
        %v2563 = vadd.f32 %v2225, %v2500
        %v2564 = vadd.f32 %v2226, %v2503
        %v2565 = vadd.f32 %v2227, %v2505
        %v2566 = vadd.f32 %v2228, %v2508
        %v2567 = vadd.f32 %v2229, %v2510
        %v2568 = vadd.f32 %v2230, %v2513
        %v2569 = vadd.f32 %v2231, %v2515
        %v2570 = vadd.f32 %v2232, %v2518
        %v2571 = vadd.f32 %v2233, %v2520
        %v2572 = vadd.f32 %v2234, %v2523
        %v2573 = vadd.f32 %v2235, %v2525
        %v2574 = vadd.f32 %v2236, %v2528
        %v2575 = vadd.f32 %v2237, %v2530
        %v2576 = vadd.f32 %v2238, %v2533
        %v2577 = vld [vmem:[%s204 + $0x14] sm:$0xe]
        %v2578 = vld [vmem:[%s204 + $0x18] sm:$0xf]
        %v2579 = vld [vmem:[%s204 + $0x1c] sm:$0xf]
        %v2580 = vld [vmem:[%s204 + $0x20] sm:$0xf]
        %v2581 = vld [vmem:[%s204 + $0x24] sm:$0xf]
        %v2582 = vld [vmem:[%s204 + $0x28] sm:$0xf]
        %v2583 = vld [vmem:[%s204 + $0x2c] sm:$0xf]
        %v2584 = vld [vmem:[%s204 + $0x30] sm:$0xf]
        %v2585 = vld [vmem:[%s204 + $0x34] sm:$0xf]
        %v2586 = vld [vmem:[%s204 + $0x38] sm:$0xf]
        %v2587 = vld [vmem:[%s204 + $0x3c] sm:$0xf]
        %v2588 = vld [vmem:[%s204 + $0x40] sm:$0xf]
        %v2589 = vld [vmem:[%s204 + $0x44] sm:$0xf]
        %v2590 = vld [vmem:[%s204 + $0x48] sm:$0xf]
        %v2591 = vld [vmem:[%s204 + $0x4c] sm:$0xf]
        %v2592 = vld [vmem:[%s204 + $0x50] sm:$0xf]
        %v2593 = vld [vmem:[%s204 + $0x54] sm:$0xf]
        %v2594 = vld [vmem:[%s204 + $0x58] sm:$0xf]
        %v2595 = vld [vmem:[%s204 + $0x5c] sm:$0xf]
        %v2596 = vld [vmem:[%s204 + $0x60] sm:$0xf]
        %v2597 = vld [vmem:[%s204 + $0x64] sm:$0xf]
        %v2598 = vld [vmem:[%s204 + $0x68] sm:$0xf]
        %v2599 = vld [vmem:[%s204 + $0x6c] sm:$0xf]
        %v2600 = vld [vmem:[%s204 + $0x70] sm:$0xf]
        %v2601 = vld [vmem:[%s204 + $0x74] sm:$0xf]
        %v2602 = vld [vmem:[%s204 + $0x78] sm:$0xf]
        %v2603 = vld [vmem:[%s204 + $0x7c] sm:$0xf]
        %v2604 = vld [vmem:[%s204 + $0x80] sm:$0xf]
        %v2605 = vld [vmem:[%s204 + $0x84] sm:$0xf]
        %v2606 = vld [vmem:[%s204 + $0x88] sm:$0xf]
        %v2607 = vld [vmem:[%s204 + $0x8c] sm:$0xf]
        %v2608 = vld [vmem:[%s204 + $0x90] sm:$0xf]
        %v2609 = vld [vmem:[%s204 + $0x94] sm:$0xf]
        %v2610 = vld [vmem:[%s204 + $0x98] sm:$0xf]
        %v2611 = vld [vmem:[%s204 + $0x9c] sm:$0xf]
        %v2612 = vld [vmem:[%s204 + $0xa0] sm:$0xf]
        %v2613 = vld [vmem:[%s204 + $0xa4] sm:$0xf]
        %v2614 = vld [vmem:[%s204 + $0xa8] sm:$0xf]
        %v2615 = vld [vmem:[%s204 + $0xac] sm:$0xf]
        %v2616 = vld [vmem:[%s204 + $0xb0] sm:$0xf]
        %v2617 = vld [vmem:[%s204 + $0xb4] sm:$0xf]
        %s2618 = scalar_lea.vmem [#allocation5], 384
        %v2619 = vld [vmem:[%s2618] sm:$0xf]
        %v2620 = vld [vmem:[%s2618 + $0x4] sm:$0xf]
        %v2621 = vld [vmem:[%s2618 + $0x8] sm:$0xf]
        %v2622 = vld [vmem:[%s2618 + $0xc] sm:$0xf]
        %v2623 = vld [vmem:[%s2618 + $0x10] sm:$0xf]
        %v2624 = vld [vmem:[%s2618 + $0x14] sm:$0xf]
        %v2625 = vld [vmem:[%s2618 + $0x18] sm:$0xf]
        %v2626 = vld [vmem:[%s2618 + $0x1c] sm:$0xf]
        %v2627 = vld [vmem:[%s2618 + $0x20] sm:$0xf]
        %v2628 = vld [vmem:[%s2618 + $0x24] sm:$0xf]
        %v2629 = vld [vmem:[%s2618 + $0x28] sm:$0xf]
        %v2630 = vld [vmem:[%s2618 + $0x2c] sm:$0xf]
        %v2631 = vld [vmem:[%s2618 + $0x30] sm:$0xf]
        %v2632 = vld [vmem:[%s2618 + $0x34] sm:$0xf]
        %v2633 = vld [vmem:[%s2618 + $0x38] sm:$0xf]
        %v2634 = vld [vmem:[%s2618 + $0x3c] sm:$0xf]
        %v2676 = vunpack.c.l.b16 %v2577
        %v2677 = vunpack.c.l.b16 %v2578
        %v2678 = vunpack.c.l.b16 %v2579
        %v2679 = vunpack.c.l.b16 %v2580
        %v2680 = vunpack.c.l.b16 %v2581
        %v2681 = vunpack.c.l.b16 %v2582
        %v2682 = vunpack.c.l.b16 %v2583
        %v2683 = vunpack.c.l.b16 %v2584
        %v2684 = vunpack.c.l.b16 %v2585
        %v2685 = vunpack.c.l.b16 %v2586
        %v2686 = vunpack.c.l.b16 %v2587
        %v2687 = vunpack.c.l.b16 %v2588
        %v2688 = vunpack.c.l.b16 %v2589
        %v2689 = vunpack.c.l.b16 %v2590
        %v2690 = vunpack.c.l.b16 %v2591
        %v2691 = vunpack.c.l.b16 %v2592
        %v2692 = vunpack.c.l.b16 %v2593
        %v2693 = vunpack.c.l.b16 %v2594
        %v2694 = vunpack.c.l.b16 %v2595
        %v2695 = vunpack.c.l.b16 %v2596
        %v2696 = vunpack.c.l.b16 %v2597
        %v2697 = vunpack.c.l.b16 %v2598
        %v2698 = vunpack.c.l.b16 %v2599
        %v2699 = vunpack.c.l.b16 %v2600
        %v2700 = vunpack.c.l.b16 %v2601
        %v2701 = vunpack.c.l.b16 %v2602
        %v2702 = vunpack.c.l.b16 %v2603
        %v2703 = vunpack.c.l.b16 %v2604
        %v2704 = vunpack.c.l.b16 %v2605
        %v2705 = vunpack.c.l.b16 %v2606
        %v2706 = vunpack.c.l.b16 %v2607
        %v2707 = vunpack.c.l.b16 %v2608
        %v2708 = vunpack.c.l.b16 %v2609
        %v2709 = vunpack.c.l.b16 %v2610
        %v2710 = vunpack.c.l.b16 %v2611
        %v2711 = vunpack.c.l.b16 %v2612
        %v2712 = vunpack.c.l.b16 %v2613
        %v2713 = vunpack.c.l.b16 %v2614
        %v2714 = vunpack.c.l.b16 %v2615
        %v2715 = vunpack.c.l.b16 %v2616
        %v2716 = vunpack.c.l.b16 %v2617
        %v2717 = vpack.c.b16 %v2677, %v2676
        %v2718 = vpack.c.b16 %v2679, %v2678
        %v2719 = vpack.c.b16 %v2681, %v2680
        %v2720 = vpack.c.b16 %v2683, %v2682
        %v2721 = vpack.c.b16 %v2685, %v2684
        %v2722 = vpack.c.b16 %v2687, %v2686
        %v2723 = vpack.c.b16 %v2689, %v2688
        %v2724 = vpack.c.b16 %v2691, %v2690
        %v2725 = vpack.c.b16 %v2693, %v2692
        %v2726 = vpack.c.b16 %v2695, %v2694
        %v2727 = vpack.c.b16 %v2697, %v2696
        %v2728 = vpack.c.b16 %v2699, %v2698
        %v2729 = vpack.c.b16 %v2701, %v2700
        %v2730 = vpack.c.b16 %v2703, %v2702
        %v2731 = vpack.c.b16 %v2705, %v2704
        %v2732 = vpack.c.b16 %v2707, %v2706
        %v2733 = vpack.c.b16 %v2709, %v2708
        %v2734 = vpack.c.b16 %v2711, %v2710
        %v2735 = vpack.c.b16 %v2713, %v2712
        %v2736 = vpack.c.b16 %v2715, %v2714
        %v2737 = vpack.c.b16 %v2716, %v2716
        %v2739 = vshrl.u32 %v2717, 16
        %v2741 = vrot.slane %v2739, 1
        %v2742 = vshll.u32 %v2717, 16
        %v2744 = vrot.slane %v2742, 2
        %v2745 = vor.u32 %v2741, %v2744
        %v2747 = vshrl.u32 %v2718, 16
        %v2749 = vrot.slane %v2747, 1
        %v2750 = vshll.u32 %v2718, 16
        %v2752 = vrot.slane %v2750, 2
        %v2753 = vor.u32 %v2749, %v2752
        %v2754 = vsel %vm2260, %v2745, %v2753
        %v2756 = vshrl.u32 %v2719, 16
        %v2758 = vrot.slane %v2756, 1
        %v2759 = vshll.u32 %v2719, 16
        %v2761 = vrot.slane %v2759, 2
        %v2762 = vor.u32 %v2758, %v2761
        %v2763 = vsel %vm2260, %v2753, %v2762
        %v2765 = vshrl.u32 %v2720, 16
        %v2767 = vrot.slane %v2765, 1
        %v2768 = vshll.u32 %v2720, 16
        %v2770 = vrot.slane %v2768, 2
        %v2771 = vor.u32 %v2767, %v2770
        %v2772 = vsel %vm2260, %v2762, %v2771
        %v2774 = vshrl.u32 %v2721, 16
        %v2776 = vrot.slane %v2774, 1
        %v2777 = vshll.u32 %v2721, 16
        %v2779 = vrot.slane %v2777, 2
        %v2780 = vor.u32 %v2776, %v2779
        %v2781 = vsel %vm2260, %v2771, %v2780
        %v2783 = vshrl.u32 %v2722, 16
        %v2785 = vrot.slane %v2783, 1
        %v2786 = vshll.u32 %v2722, 16
        %v2788 = vrot.slane %v2786, 2
        %v2789 = vor.u32 %v2785, %v2788
        %v2790 = vsel %vm2260, %v2780, %v2789
        %v2792 = vshrl.u32 %v2723, 16
        %v2794 = vrot.slane %v2792, 1
        %v2795 = vshll.u32 %v2723, 16
        %v2797 = vrot.slane %v2795, 2
        %v2798 = vor.u32 %v2794, %v2797
        %v2799 = vsel %vm2260, %v2789, %v2798
        %v2801 = vshrl.u32 %v2724, 16
        %v2803 = vrot.slane %v2801, 1
        %v2804 = vshll.u32 %v2724, 16
        %v2806 = vrot.slane %v2804, 2
        %v2807 = vor.u32 %v2803, %v2806
        %v2808 = vsel %vm2260, %v2798, %v2807
        %v2810 = vshrl.u32 %v2725, 16
        %v2812 = vrot.slane %v2810, 1
        %v2813 = vshll.u32 %v2725, 16
        %v2815 = vrot.slane %v2813, 2
        %v2816 = vor.u32 %v2812, %v2815
        %v2817 = vsel %vm2260, %v2807, %v2816
        %v2819 = vshrl.u32 %v2726, 16
        %v2821 = vrot.slane %v2819, 1
        %v2822 = vshll.u32 %v2726, 16
        %v2824 = vrot.slane %v2822, 2
        %v2825 = vor.u32 %v2821, %v2824
        %v2826 = vsel %vm2260, %v2816, %v2825
        %v2828 = vshrl.u32 %v2727, 16
        %v2830 = vrot.slane %v2828, 1
        %v2831 = vshll.u32 %v2727, 16
        %v2833 = vrot.slane %v2831, 2
        %v2834 = vor.u32 %v2830, %v2833
        %v2835 = vsel %vm2260, %v2825, %v2834
        %v2837 = vshrl.u32 %v2728, 16
        %v2839 = vrot.slane %v2837, 1
        %v2840 = vshll.u32 %v2728, 16
        %v2842 = vrot.slane %v2840, 2
        %v2843 = vor.u32 %v2839, %v2842
        %v2844 = vsel %vm2260, %v2834, %v2843
        %v2846 = vshrl.u32 %v2729, 16
        %v2848 = vrot.slane %v2846, 1
        %v2849 = vshll.u32 %v2729, 16
        %v2851 = vrot.slane %v2849, 2
        %v2852 = vor.u32 %v2848, %v2851
        %v2853 = vsel %vm2260, %v2843, %v2852
        %v2855 = vshrl.u32 %v2730, 16
        %v2857 = vrot.slane %v2855, 1
        %v2858 = vshll.u32 %v2730, 16
        %v2860 = vrot.slane %v2858, 2
        %v2861 = vor.u32 %v2857, %v2860
        %v2862 = vsel %vm2260, %v2852, %v2861
        %v2864 = vshrl.u32 %v2731, 16
        %v2866 = vrot.slane %v2864, 1
        %v2867 = vshll.u32 %v2731, 16
        %v2869 = vrot.slane %v2867, 2
        %v2870 = vor.u32 %v2866, %v2869
        %v2871 = vsel %vm2260, %v2861, %v2870
        %v2873 = vshrl.u32 %v2732, 16
        %v2875 = vrot.slane %v2873, 1
        %v2876 = vshll.u32 %v2732, 16
        %v2878 = vrot.slane %v2876, 2
        %v2879 = vor.u32 %v2875, %v2878
        %v2880 = vsel %vm2260, %v2870, %v2879
        %v2882 = vshrl.u32 %v2733, 16
        %v2884 = vrot.slane %v2882, 1
        %v2885 = vshll.u32 %v2733, 16
        %v2887 = vrot.slane %v2885, 2
        %v2888 = vor.u32 %v2884, %v2887
        %v2889 = vsel %vm2260, %v2879, %v2888
        %v2891 = vshrl.u32 %v2734, 16
        %v2893 = vrot.slane %v2891, 1
        %v2894 = vshll.u32 %v2734, 16
        %v2896 = vrot.slane %v2894, 2
        %v2897 = vor.u32 %v2893, %v2896
        %v2898 = vsel %vm2260, %v2888, %v2897
        %v2900 = vshrl.u32 %v2735, 16
        %v2902 = vrot.slane %v2900, 1
        %v2903 = vshll.u32 %v2735, 16
        %v2905 = vrot.slane %v2903, 2
        %v2906 = vor.u32 %v2902, %v2905
        %v2907 = vsel %vm2260, %v2897, %v2906
        %v2909 = vshrl.u32 %v2736, 16
        %v2911 = vrot.slane %v2909, 1
        %v2912 = vshll.u32 %v2736, 16
        %v2914 = vrot.slane %v2912, 2
        %v2915 = vor.u32 %v2911, %v2914
        %v2916 = vsel %vm2260, %v2906, %v2915
        %v2918 = vshrl.u32 %v2737, 16
        %v2920 = vrot.slane %v2918, 1
        %v2921 = vshll.u32 %v2737, 16
        %v2923 = vrot.slane %v2921, 2
        %v2924 = vor.u32 %v2920, %v2923
        %v2925 = vsel %vm2260, %v2915, %v2924
        %v2963 = vunpack.c.l.b16 %v2619
        %v2964 = vunpack.c.l.b16 %v2620
        %v2965 = vunpack.c.l.b16 %v2621
        %v2966 = vunpack.c.l.b16 %v2622
        %v2967 = vunpack.c.l.b16 %v2623
        %v2968 = vunpack.c.l.b16 %v2624
        %v2969 = vunpack.c.l.b16 %v2625
        %v2970 = vunpack.c.l.b16 %v2626
        %v2971 = vunpack.c.l.b16 %v2627
        %v2972 = vunpack.c.l.b16 %v2628
        %v2973 = vunpack.c.l.b16 %v2629
        %v2974 = vunpack.c.l.b16 %v2630
        %v2975 = vunpack.c.l.b16 %v2631
        %v2976 = vunpack.c.l.b16 %v2632
        %v2977 = vunpack.c.l.b16 %v2633
        %v2978 = vunpack.c.l.b16 %v2634
        %v2979 = vpack.c.b16 %v2964, %v2963
        %v2980 = vpack.c.b16 %v2966, %v2965
        %v2981 = vpack.c.b16 %v2968, %v2967
        %v2982 = vpack.c.b16 %v2970, %v2969
        %v2983 = vpack.c.b16 %v2972, %v2971
        %v2984 = vpack.c.b16 %v2974, %v2973
        %v2985 = vpack.c.b16 %v2976, %v2975
        %v2986 = vpack.c.b16 %v2978, %v2977
        %2995 = vmatpush.bf16.msra.mxu0 %v2986
        %2996 = vmatpush.bf16.msra.mxu0 %v2985
        %2997 = vmatpush.bf16.msra.mxu0 %v2984
        %2998 = vmatpush.bf16.msra.mxu0 %v2983
        %2999 = vmatpush.bf16.msra.mxu0 %v2982
        %3000 = vmatpush.bf16.msra.mxu0 %v2981
        %3001 = vmatpush.bf16.msra.mxu0 %v2980
        %3002 = vmatpush.bf16.msra.mxu0 %v2979
        %3003 = vmatmul.bf16.gmra.mxu0 %v2754
        %v3004 = vpop.f32.mrf.mxu0
        %v3005 = vadd.f32 0.0, %v3004
        %v3006 = vpop.f32.mrf.mxu0
        %v3007 = vadd.f32 0.0, %v3006
        %3008 = vmatmul.bf16.gmra.mxu0 %v2763
        %v3009 = vpop.f32.mrf.mxu0
        %v3010 = vadd.f32 0.0, %v3009
        %v3011 = vpop.f32.mrf.mxu0
        %v3012 = vadd.f32 0.0, %v3011
        %3013 = vmatmul.bf16.gmra.mxu0 %v2772
        %v3014 = vpop.f32.mrf.mxu0
        %v3015 = vadd.f32 0.0, %v3014
        %v3016 = vpop.f32.mrf.mxu0
        %v3017 = vadd.f32 0.0, %v3016
        %3018 = vmatmul.bf16.gmra.mxu0 %v2781
        %v3019 = vpop.f32.mrf.mxu0
        %v3020 = vadd.f32 0.0, %v3019
        %v3021 = vpop.f32.mrf.mxu0
        %v3022 = vadd.f32 0.0, %v3021
        %3023 = vmatmul.bf16.gmra.mxu0 %v2790
        %v3024 = vpop.f32.mrf.mxu0
        %v3025 = vadd.f32 0.0, %v3024
        %v3026 = vpop.f32.mrf.mxu0
        %v3027 = vadd.f32 0.0, %v3026
        %3028 = vmatmul.bf16.gmra.mxu0 %v2799
        %v3029 = vpop.f32.mrf.mxu0
        %v3030 = vadd.f32 0.0, %v3029
        %v3031 = vpop.f32.mrf.mxu0
        %v3032 = vadd.f32 0.0, %v3031
        %3033 = vmatmul.bf16.gmra.mxu0 %v2808
        %v3034 = vpop.f32.mrf.mxu0
        %v3035 = vadd.f32 0.0, %v3034
        %v3036 = vpop.f32.mrf.mxu0
        %v3037 = vadd.f32 0.0, %v3036
        %3038 = vmatmul.bf16.gmra.mxu0 %v2817
        %v3039 = vpop.f32.mrf.mxu0
        %v3040 = vadd.f32 0.0, %v3039
        %v3041 = vpop.f32.mrf.mxu0
        %v3042 = vadd.f32 0.0, %v3041
        %3043 = vmatmul.bf16.gmra.mxu0 %v2826
        %v3044 = vpop.f32.mrf.mxu0
        %v3045 = vadd.f32 0.0, %v3044
        %v3046 = vpop.f32.mrf.mxu0
        %v3047 = vadd.f32 0.0, %v3046
        %3048 = vmatmul.bf16.gmra.mxu0 %v2835
        %v3049 = vpop.f32.mrf.mxu0
        %v3050 = vadd.f32 0.0, %v3049
        %v3051 = vpop.f32.mrf.mxu0
        %v3052 = vadd.f32 0.0, %v3051
        %3053 = vmatmul.bf16.gmra.mxu0 %v2844
        %v3054 = vpop.f32.mrf.mxu0
        %v3055 = vadd.f32 0.0, %v3054
        %v3056 = vpop.f32.mrf.mxu0
        %v3057 = vadd.f32 0.0, %v3056
        %3058 = vmatmul.bf16.gmra.mxu0 %v2853
        %v3059 = vpop.f32.mrf.mxu0
        %v3060 = vadd.f32 0.0, %v3059
        %v3061 = vpop.f32.mrf.mxu0
        %v3062 = vadd.f32 0.0, %v3061
        %3063 = vmatmul.bf16.gmra.mxu0 %v2862
        %v3064 = vpop.f32.mrf.mxu0
        %v3065 = vadd.f32 0.0, %v3064
        %v3066 = vpop.f32.mrf.mxu0
        %v3067 = vadd.f32 0.0, %v3066
        %3068 = vmatmul.bf16.gmra.mxu0 %v2871
        %v3069 = vpop.f32.mrf.mxu0
        %v3070 = vadd.f32 0.0, %v3069
        %v3071 = vpop.f32.mrf.mxu0
        %v3072 = vadd.f32 0.0, %v3071
        %3073 = vmatmul.bf16.gmra.mxu0 %v2880
        %v3074 = vpop.f32.mrf.mxu0
        %v3075 = vadd.f32 0.0, %v3074
        %v3076 = vpop.f32.mrf.mxu0
        %v3077 = vadd.f32 0.0, %v3076
        %3078 = vmatmul.bf16.gmra.mxu0 %v2889
        %v3079 = vpop.f32.mrf.mxu0
        %v3080 = vadd.f32 0.0, %v3079
        %v3081 = vpop.f32.mrf.mxu0
        %v3082 = vadd.f32 0.0, %v3081
        %3083 = vmatmul.bf16.gmra.mxu0 %v2898
        %v3084 = vpop.f32.mrf.mxu0
        %v3085 = vadd.f32 0.0, %v3084
        %v3086 = vpop.f32.mrf.mxu0
        %v3087 = vadd.f32 0.0, %v3086
        %3088 = vmatmul.bf16.gmra.mxu0 %v2907
        %v3089 = vpop.f32.mrf.mxu0
        %v3090 = vadd.f32 0.0, %v3089
        %v3091 = vpop.f32.mrf.mxu0
        %v3092 = vadd.f32 0.0, %v3091
        %3093 = vmatmul.bf16.gmra.mxu0 %v2916
        %v3094 = vpop.f32.mrf.mxu0
        %v3095 = vadd.f32 0.0, %v3094
        %v3096 = vpop.f32.mrf.mxu0
        %v3097 = vadd.f32 0.0, %v3096
        %3098 = vmatmul.bf16.gmra.mxu0 %v2925
        %v3099 = vpop.f32.mrf.mxu0
        %v3100 = vadd.f32 0.0, %v3099
        %v3101 = vpop.f32.mrf.mxu0
        %v3102 = vadd.f32 0.0, %v3101
        %3103 = vmatmul.bf16.gmra.mxu0 %v2924
        %v3104 = vpop.f32.mrf.mxu0
        %v3105 = vadd.f32 0.0, %v3104
        %v3106 = vpop.f32.mrf.mxu0
        %3107 = vdwg.mxu0
        %v3108 = vadd.f32 %v2536, %v3005
        %v3109 = vadd.f32 %v2537, %v3007
        %v3110 = vadd.f32 %v2538, %v3010
        %v3111 = vadd.f32 %v2539, %v3012
        %v3112 = vadd.f32 %v2540, %v3015
        %v3113 = vadd.f32 %v2541, %v3017
        %v3114 = vadd.f32 %v2542, %v3020
        %v3115 = vadd.f32 %v2543, %v3022
        %v3116 = vadd.f32 %v2544, %v3025
        %v3117 = vadd.f32 %v2545, %v3027
        %v3118 = vadd.f32 %v2546, %v3030
        %v3119 = vadd.f32 %v2547, %v3032
        %v3120 = vadd.f32 %v2548, %v3035
        %v3121 = vadd.f32 %v2549, %v3037
        %v3122 = vadd.f32 %v2550, %v3040
        %v3123 = vadd.f32 %v2551, %v3042
        %v3124 = vadd.f32 %v2552, %v3045
        %v3125 = vadd.f32 %v2553, %v3047
        %v3126 = vadd.f32 %v2554, %v3050
        %v3127 = vadd.f32 %v2555, %v3052
        %v3128 = vadd.f32 %v2556, %v3055
        %v3129 = vadd.f32 %v2557, %v3057
        %v3130 = vadd.f32 %v2558, %v3060
        %v3131 = vadd.f32 %v2559, %v3062
        %v3132 = vadd.f32 %v2560, %v3065
        %v3133 = vadd.f32 %v2561, %v3067
        %v3134 = vadd.f32 %v2562, %v3070
        %v3135 = vadd.f32 %v2563, %v3072
        %v3136 = vadd.f32 %v2564, %v3075
        %v3137 = vadd.f32 %v2565, %v3077
        %v3138 = vadd.f32 %v2566, %v3080
        %v3139 = vadd.f32 %v2567, %v3082
        %v3140 = vadd.f32 %v2568, %v3085
        %v3141 = vadd.f32 %v2569, %v3087
        %v3142 = vadd.f32 %v2570, %v3090
        %v3143 = vadd.f32 %v2571, %v3092
        %v3144 = vadd.f32 %v2572, %v3095
        %v3145 = vadd.f32 %v2573, %v3097
        %v3146 = vadd.f32 %v2574, %v3100
        %v3147 = vadd.f32 %v2575, %v3102
        %v3148 = vadd.f32 %v2576, %v3105
        %v3149 = vld [vmem:[%s204 + $0x14] sm:$0xc]
        %s3150 = scalar_lea.vmem [#allocation5], 448
        %v3151 = vld [vmem:[%s3150] sm:$0xf]
        %v3152 = vld [vmem:[%s3150 + $0x4] sm:$0xf]
        %v3153 = vld [vmem:[%s3150 + $0x8] sm:$0xf]
        %v3154 = vld [vmem:[%s3150 + $0xc] sm:$0xf]
        %v3155 = vld [vmem:[%s3150 + $0x10] sm:$0xf]
        %v3156 = vld [vmem:[%s3150 + $0x14] sm:$0xf]
        %v3157 = vld [vmem:[%s3150 + $0x18] sm:$0xf]
        %v3158 = vld [vmem:[%s3150 + $0x1c] sm:$0xf]
        %v3159 = vld [vmem:[%s3150 + $0x20] sm:$0xf]
        %v3160 = vld [vmem:[%s3150 + $0x24] sm:$0xf]
        %v3161 = vld [vmem:[%s3150 + $0x28] sm:$0xf]
        %v3162 = vld [vmem:[%s3150 + $0x2c] sm:$0xf]
        %v3163 = vld [vmem:[%s3150 + $0x30] sm:$0xf]
        %v3164 = vld [vmem:[%s3150 + $0x34] sm:$0xf]
        %v3165 = vld [vmem:[%s3150 + $0x38] sm:$0xf]
        %v3166 = vld [vmem:[%s3150 + $0x3c] sm:$0xf]
        %v3168 = vunpack.c.l.b16 %v3149
        %v3169 = vpack.c.b16 %v2677, %v3168
        %vm3170 = vcmask 1045504
        %v3171 = vrot.slane %v3169, 2
        %v3172 = vrot.slane %v2718, 2
        %v3173 = vsel %vm3170, %v3171, %v3172
        %v3174 = vrot.slane %v2719, 2
        %v3175 = vsel %vm3170, %v3172, %v3174
        %v3176 = vrot.slane %v2720, 2
        %v3177 = vsel %vm3170, %v3174, %v3176
        %v3178 = vrot.slane %v2721, 2
        %v3179 = vsel %vm3170, %v3176, %v3178
        %v3180 = vrot.slane %v2722, 2
        %v3181 = vsel %vm3170, %v3178, %v3180
        %v3182 = vrot.slane %v2723, 2
        %v3183 = vsel %vm3170, %v3180, %v3182
        %v3184 = vrot.slane %v2724, 2
        %v3185 = vsel %vm3170, %v3182, %v3184
        %v3186 = vrot.slane %v2725, 2
        %v3187 = vsel %vm3170, %v3184, %v3186
        %v3188 = vrot.slane %v2726, 2
        %v3189 = vsel %vm3170, %v3186, %v3188
        %v3190 = vrot.slane %v2727, 2
        %v3191 = vsel %vm3170, %v3188, %v3190
        %v3192 = vrot.slane %v2728, 2
        %v3193 = vsel %vm3170, %v3190, %v3192
        %v3194 = vrot.slane %v2729, 2
        %v3195 = vsel %vm3170, %v3192, %v3194
        %v3196 = vrot.slane %v2730, 2
        %v3197 = vsel %vm3170, %v3194, %v3196
        %v3198 = vrot.slane %v2731, 2
        %v3199 = vsel %vm3170, %v3196, %v3198
        %v3200 = vrot.slane %v2732, 2
        %v3201 = vsel %vm3170, %v3198, %v3200
        %v3202 = vrot.slane %v2733, 2
        %v3203 = vsel %vm3170, %v3200, %v3202
        %v3204 = vrot.slane %v2734, 2
        %v3205 = vsel %vm3170, %v3202, %v3204
        %v3206 = vrot.slane %v2735, 2
        %v3207 = vsel %vm3170, %v3204, %v3206
        %v3208 = vrot.slane %v2736, 2
        %v3209 = vsel %vm3170, %v3206, %v3208
        %v3210 = vrot.slane %v2737, 2
        %v3211 = vsel %vm3170, %v3208, %v3210
        %v3249 = vunpack.c.l.b16 %v3151
        %v3250 = vunpack.c.l.b16 %v3152
        %v3251 = vunpack.c.l.b16 %v3153
        %v3252 = vunpack.c.l.b16 %v3154
        %v3253 = vunpack.c.l.b16 %v3155
        %v3254 = vunpack.c.l.b16 %v3156
        %v3255 = vunpack.c.l.b16 %v3157
        %v3256 = vunpack.c.l.b16 %v3158
        %v3257 = vunpack.c.l.b16 %v3159
        %v3258 = vunpack.c.l.b16 %v3160
        %v3259 = vunpack.c.l.b16 %v3161
        %v3260 = vunpack.c.l.b16 %v3162
        %v3261 = vunpack.c.l.b16 %v3163
        %v3262 = vunpack.c.l.b16 %v3164
        %v3263 = vunpack.c.l.b16 %v3165
        %v3264 = vunpack.c.l.b16 %v3166
        %v3265 = vpack.c.b16 %v3250, %v3249
        %v3266 = vpack.c.b16 %v3252, %v3251
        %v3267 = vpack.c.b16 %v3254, %v3253
        %v3268 = vpack.c.b16 %v3256, %v3255
        %v3269 = vpack.c.b16 %v3258, %v3257
        %v3270 = vpack.c.b16 %v3260, %v3259
        %v3271 = vpack.c.b16 %v3262, %v3261
        %v3272 = vpack.c.b16 %v3264, %v3263
        %3281 = vmatpush.bf16.msra.mxu0 %v3272
        %3282 = vmatpush.bf16.msra.mxu0 %v3271
        %3283 = vmatpush.bf16.msra.mxu0 %v3270
        %3284 = vmatpush.bf16.msra.mxu0 %v3269
        %3285 = vmatpush.bf16.msra.mxu0 %v3268
        %3286 = vmatpush.bf16.msra.mxu0 %v3267
        %3287 = vmatpush.bf16.msra.mxu0 %v3266
        %3288 = vmatpush.bf16.msra.mxu0 %v3265
        %3289 = vmatmul.bf16.gmra.mxu0 %v3173
        %v3290 = vpop.f32.mrf.mxu0
        %v3291 = vadd.f32 0.0, %v3290
        %v3292 = vpop.f32.mrf.mxu0
        %v3293 = vadd.f32 0.0, %v3292
        %3294 = vmatmul.bf16.gmra.mxu0 %v3175
        %v3295 = vpop.f32.mrf.mxu0
        %v3296 = vadd.f32 0.0, %v3295
        %v3297 = vpop.f32.mrf.mxu0
        %v3298 = vadd.f32 0.0, %v3297
        %3299 = vmatmul.bf16.gmra.mxu0 %v3177
        %v3300 = vpop.f32.mrf.mxu0
        %v3301 = vadd.f32 0.0, %v3300
        %v3302 = vpop.f32.mrf.mxu0
        %v3303 = vadd.f32 0.0, %v3302
        %3304 = vmatmul.bf16.gmra.mxu0 %v3179
        %v3305 = vpop.f32.mrf.mxu0
        %v3306 = vadd.f32 0.0, %v3305
        %v3307 = vpop.f32.mrf.mxu0
        %v3308 = vadd.f32 0.0, %v3307
        %3309 = vmatmul.bf16.gmra.mxu0 %v3181
        %v3310 = vpop.f32.mrf.mxu0
        %v3311 = vadd.f32 0.0, %v3310
        %v3312 = vpop.f32.mrf.mxu0
        %v3313 = vadd.f32 0.0, %v3312
        %3314 = vmatmul.bf16.gmra.mxu0 %v3183
        %v3315 = vpop.f32.mrf.mxu0
        %v3316 = vadd.f32 0.0, %v3315
        %v3317 = vpop.f32.mrf.mxu0
        %v3318 = vadd.f32 0.0, %v3317
        %3319 = vmatmul.bf16.gmra.mxu0 %v3185
        %v3320 = vpop.f32.mrf.mxu0
        %v3321 = vadd.f32 0.0, %v3320
        %v3322 = vpop.f32.mrf.mxu0
        %v3323 = vadd.f32 0.0, %v3322
        %3324 = vmatmul.bf16.gmra.mxu0 %v3187
        %v3325 = vpop.f32.mrf.mxu0
        %v3326 = vadd.f32 0.0, %v3325
        %v3327 = vpop.f32.mrf.mxu0
        %v3328 = vadd.f32 0.0, %v3327
        %3329 = vmatmul.bf16.gmra.mxu0 %v3189
        %v3330 = vpop.f32.mrf.mxu0
        %v3331 = vadd.f32 0.0, %v3330
        %v3332 = vpop.f32.mrf.mxu0
        %v3333 = vadd.f32 0.0, %v3332
        %3334 = vmatmul.bf16.gmra.mxu0 %v3191
        %v3335 = vpop.f32.mrf.mxu0
        %v3336 = vadd.f32 0.0, %v3335
        %v3337 = vpop.f32.mrf.mxu0
        %v3338 = vadd.f32 0.0, %v3337
        %3339 = vmatmul.bf16.gmra.mxu0 %v3193
        %v3340 = vpop.f32.mrf.mxu0
        %v3341 = vadd.f32 0.0, %v3340
        %v3342 = vpop.f32.mrf.mxu0
        %v3343 = vadd.f32 0.0, %v3342
        %3344 = vmatmul.bf16.gmra.mxu0 %v3195
        %v3345 = vpop.f32.mrf.mxu0
        %v3346 = vadd.f32 0.0, %v3345
        %v3347 = vpop.f32.mrf.mxu0
        %v3348 = vadd.f32 0.0, %v3347
        %3349 = vmatmul.bf16.gmra.mxu0 %v3197
        %v3350 = vpop.f32.mrf.mxu0
        %v3351 = vadd.f32 0.0, %v3350
        %v3352 = vpop.f32.mrf.mxu0
        %v3353 = vadd.f32 0.0, %v3352
        %3354 = vmatmul.bf16.gmra.mxu0 %v3199
        %v3355 = vpop.f32.mrf.mxu0
        %v3356 = vadd.f32 0.0, %v3355
        %v3357 = vpop.f32.mrf.mxu0
        %v3358 = vadd.f32 0.0, %v3357
        %3359 = vmatmul.bf16.gmra.mxu0 %v3201
        %v3360 = vpop.f32.mrf.mxu0
        %v3361 = vadd.f32 0.0, %v3360
        %v3362 = vpop.f32.mrf.mxu0
        %v3363 = vadd.f32 0.0, %v3362
        %3364 = vmatmul.bf16.gmra.mxu0 %v3203
        %v3365 = vpop.f32.mrf.mxu0
        %v3366 = vadd.f32 0.0, %v3365
        %v3367 = vpop.f32.mrf.mxu0
        %v3368 = vadd.f32 0.0, %v3367
        %3369 = vmatmul.bf16.gmra.mxu0 %v3205
        %v3370 = vpop.f32.mrf.mxu0
        %v3371 = vadd.f32 0.0, %v3370
        %v3372 = vpop.f32.mrf.mxu0
        %v3373 = vadd.f32 0.0, %v3372
        %3374 = vmatmul.bf16.gmra.mxu0 %v3207
        %v3375 = vpop.f32.mrf.mxu0
        %v3376 = vadd.f32 0.0, %v3375
        %v3377 = vpop.f32.mrf.mxu0
        %v3378 = vadd.f32 0.0, %v3377
        %3379 = vmatmul.bf16.gmra.mxu0 %v3209
        %v3380 = vpop.f32.mrf.mxu0
        %v3381 = vadd.f32 0.0, %v3380
        %v3382 = vpop.f32.mrf.mxu0
        %v3383 = vadd.f32 0.0, %v3382
        %3384 = vmatmul.bf16.gmra.mxu0 %v3211
        %v3385 = vpop.f32.mrf.mxu0
        %v3386 = vadd.f32 0.0, %v3385
        %v3387 = vpop.f32.mrf.mxu0
        %v3388 = vadd.f32 0.0, %v3387
        %3389 = vmatmul.bf16.gmra.mxu0 %v3210
        %v3390 = vpop.f32.mrf.mxu0
        %v3391 = vadd.f32 0.0, %v3390
        %v3392 = vpop.f32.mrf.mxu0
        %3393 = vdwg.mxu0
        %v3394 = vadd.f32 %v3108, %v3291
        %v3395 = vadd.f32 %v3109, %v3293
        %v3396 = vadd.f32 %v3110, %v3296
        %v3397 = vadd.f32 %v3111, %v3298
        %v3398 = vadd.f32 %v3112, %v3301
        %v3399 = vadd.f32 %v3113, %v3303
        %v3400 = vadd.f32 %v3114, %v3306
        %v3401 = vadd.f32 %v3115, %v3308
        %v3402 = vadd.f32 %v3116, %v3311
        %v3403 = vadd.f32 %v3117, %v3313
        %v3404 = vadd.f32 %v3118, %v3316
        %v3405 = vadd.f32 %v3119, %v3318
        %v3406 = vadd.f32 %v3120, %v3321
        %v3407 = vadd.f32 %v3121, %v3323
        %v3408 = vadd.f32 %v3122, %v3326
        %v3409 = vadd.f32 %v3123, %v3328
        %v3410 = vadd.f32 %v3124, %v3331
        %v3411 = vadd.f32 %v3125, %v3333
        %v3412 = vadd.f32 %v3126, %v3336
        %v3413 = vadd.f32 %v3127, %v3338
        %v3414 = vadd.f32 %v3128, %v3341
        %v3415 = vadd.f32 %v3129, %v3343
        %v3416 = vadd.f32 %v3130, %v3346
        %v3417 = vadd.f32 %v3131, %v3348
        %v3418 = vadd.f32 %v3132, %v3351
        %v3419 = vadd.f32 %v3133, %v3353
        %v3420 = vadd.f32 %v3134, %v3356
        %v3421 = vadd.f32 %v3135, %v3358
        %v3422 = vadd.f32 %v3136, %v3361
        %v3423 = vadd.f32 %v3137, %v3363
        %v3424 = vadd.f32 %v3138, %v3366
        %v3425 = vadd.f32 %v3139, %v3368
        %v3426 = vadd.f32 %v3140, %v3371
        %v3427 = vadd.f32 %v3141, %v3373
        %v3428 = vadd.f32 %v3142, %v3376
        %v3429 = vadd.f32 %v3143, %v3378
        %v3430 = vadd.f32 %v3144, %v3381
        %v3431 = vadd.f32 %v3145, %v3383
        %v3432 = vadd.f32 %v3146, %v3386
        %v3433 = vadd.f32 %v3147, %v3388
        %v3434 = vadd.f32 %v3148, %v3391
        %v3435 = vld [vmem:[%s204 + $0x14] sm:$0xc]
        %v3436 = vld [vmem:[%s204 + $0x18] sm:$0xf]
        %v3437 = vld [vmem:[%s204 + $0x1c] sm:$0xf]
        %v3438 = vld [vmem:[%s204 + $0x20] sm:$0xf]
        %v3439 = vld [vmem:[%s204 + $0x24] sm:$0xf]
        %v3440 = vld [vmem:[%s204 + $0x28] sm:$0xf]
        %v3441 = vld [vmem:[%s204 + $0x2c] sm:$0xf]
        %v3442 = vld [vmem:[%s204 + $0x30] sm:$0xf]
        %v3443 = vld [vmem:[%s204 + $0x34] sm:$0xf]
        %v3444 = vld [vmem:[%s204 + $0x38] sm:$0xf]
        %v3445 = vld [vmem:[%s204 + $0x3c] sm:$0xf]
        %v3446 = vld [vmem:[%s204 + $0x40] sm:$0xf]
        %v3447 = vld [vmem:[%s204 + $0x44] sm:$0xf]
        %v3448 = vld [vmem:[%s204 + $0x48] sm:$0xf]
        %v3449 = vld [vmem:[%s204 + $0x4c] sm:$0xf]
        %v3450 = vld [vmem:[%s204 + $0x50] sm:$0xf]
        %v3451 = vld [vmem:[%s204 + $0x54] sm:$0xf]
        %v3452 = vld [vmem:[%s204 + $0x58] sm:$0xf]
        %v3453 = vld [vmem:[%s204 + $0x5c] sm:$0xf]
        %v3454 = vld [vmem:[%s204 + $0x60] sm:$0xf]
        %v3455 = vld [vmem:[%s204 + $0x64] sm:$0xf]
        %v3456 = vld [vmem:[%s204 + $0x68] sm:$0xf]
        %v3457 = vld [vmem:[%s204 + $0x6c] sm:$0xf]
        %v3458 = vld [vmem:[%s204 + $0x70] sm:$0xf]
        %v3459 = vld [vmem:[%s204 + $0x74] sm:$0xf]
        %v3460 = vld [vmem:[%s204 + $0x78] sm:$0xf]
        %v3461 = vld [vmem:[%s204 + $0x7c] sm:$0xf]
        %v3462 = vld [vmem:[%s204 + $0x80] sm:$0xf]
        %v3463 = vld [vmem:[%s204 + $0x84] sm:$0xf]
        %v3464 = vld [vmem:[%s204 + $0x88] sm:$0xf]
        %v3465 = vld [vmem:[%s204 + $0x8c] sm:$0xf]
        %v3466 = vld [vmem:[%s204 + $0x90] sm:$0xf]
        %v3467 = vld [vmem:[%s204 + $0x94] sm:$0xf]
        %v3468 = vld [vmem:[%s204 + $0x98] sm:$0xf]
        %v3469 = vld [vmem:[%s204 + $0x9c] sm:$0xf]
        %v3470 = vld [vmem:[%s204 + $0xa0] sm:$0xf]
        %v3471 = vld [vmem:[%s204 + $0xa4] sm:$0xf]
        %v3472 = vld [vmem:[%s204 + $0xa8] sm:$0xf]
        %v3473 = vld [vmem:[%s204 + $0xac] sm:$0xf]
        %v3474 = vld [vmem:[%s204 + $0xb0] sm:$0xf]
        %v3475 = vld [vmem:[%s204 + $0xb4] sm:$0xf]
        %v3476 = vld [vmem:[%s204 + $0xb8] sm:$0x1]
        %s3477 = scalar_lea.vmem [#allocation5], 512
        %v3478 = vld [vmem:[%s3477] sm:$0xf]
        %v3479 = vld [vmem:[%s3477 + $0x4] sm:$0xf]
        %v3480 = vld [vmem:[%s3477 + $0x8] sm:$0xf]
        %v3481 = vld [vmem:[%s3477 + $0xc] sm:$0xf]
        %v3482 = vld [vmem:[%s3477 + $0x10] sm:$0xf]
        %v3483 = vld [vmem:[%s3477 + $0x14] sm:$0xf]
        %v3484 = vld [vmem:[%s3477 + $0x18] sm:$0xf]
        %v3485 = vld [vmem:[%s3477 + $0x1c] sm:$0xf]
        %v3486 = vld [vmem:[%s3477 + $0x20] sm:$0xf]
        %v3487 = vld [vmem:[%s3477 + $0x24] sm:$0xf]
        %v3488 = vld [vmem:[%s3477 + $0x28] sm:$0xf]
        %v3489 = vld [vmem:[%s3477 + $0x2c] sm:$0xf]
        %v3490 = vld [vmem:[%s3477 + $0x30] sm:$0xf]
        %v3491 = vld [vmem:[%s3477 + $0x34] sm:$0xf]
        %v3492 = vld [vmem:[%s3477 + $0x38] sm:$0xf]
        %v3493 = vld [vmem:[%s3477 + $0x3c] sm:$0xf]
        %v3536 = vunpack.c.l.b16 %v3435
        %v3537 = vunpack.c.l.b16 %v3436
        %v3538 = vunpack.c.l.b16 %v3437
        %v3539 = vunpack.c.l.b16 %v3438
        %v3540 = vunpack.c.l.b16 %v3439
        %v3541 = vunpack.c.l.b16 %v3440
        %v3542 = vunpack.c.l.b16 %v3441
        %v3543 = vunpack.c.l.b16 %v3442
        %v3544 = vunpack.c.l.b16 %v3443
        %v3545 = vunpack.c.l.b16 %v3444
        %v3546 = vunpack.c.l.b16 %v3445
        %v3547 = vunpack.c.l.b16 %v3446
        %v3548 = vunpack.c.l.b16 %v3447
        %v3549 = vunpack.c.l.b16 %v3448
        %v3550 = vunpack.c.l.b16 %v3449
        %v3551 = vunpack.c.l.b16 %v3450
        %v3552 = vunpack.c.l.b16 %v3451
        %v3553 = vunpack.c.l.b16 %v3452
        %v3554 = vunpack.c.l.b16 %v3453
        %v3555 = vunpack.c.l.b16 %v3454
        %v3556 = vunpack.c.l.b16 %v3455
        %v3557 = vunpack.c.l.b16 %v3456
        %v3558 = vunpack.c.l.b16 %v3457
        %v3559 = vunpack.c.l.b16 %v3458
        %v3560 = vunpack.c.l.b16 %v3459
        %v3561 = vunpack.c.l.b16 %v3460
        %v3562 = vunpack.c.l.b16 %v3461
        %v3563 = vunpack.c.l.b16 %v3462
        %v3564 = vunpack.c.l.b16 %v3463
        %v3565 = vunpack.c.l.b16 %v3464
        %v3566 = vunpack.c.l.b16 %v3465
        %v3567 = vunpack.c.l.b16 %v3466
        %v3568 = vunpack.c.l.b16 %v3467
        %v3569 = vunpack.c.l.b16 %v3468
        %v3570 = vunpack.c.l.b16 %v3469
        %v3571 = vunpack.c.l.b16 %v3470
        %v3572 = vunpack.c.l.b16 %v3471
        %v3573 = vunpack.c.l.b16 %v3472
        %v3574 = vunpack.c.l.b16 %v3473
        %v3575 = vunpack.c.l.b16 %v3474
        %v3576 = vunpack.c.l.b16 %v3475
        %v3577 = vunpack.c.l.b16 %v3476
        %v3578 = vpack.c.b16 %v3537, %v3536
        %v3579 = vpack.c.b16 %v3539, %v3538
        %v3580 = vpack.c.b16 %v3541, %v3540
        %v3581 = vpack.c.b16 %v3543, %v3542
        %v3582 = vpack.c.b16 %v3545, %v3544
        %v3583 = vpack.c.b16 %v3547, %v3546
        %v3584 = vpack.c.b16 %v3549, %v3548
        %v3585 = vpack.c.b16 %v3551, %v3550
        %v3586 = vpack.c.b16 %v3553, %v3552
        %v3587 = vpack.c.b16 %v3555, %v3554
        %v3588 = vpack.c.b16 %v3557, %v3556
        %v3589 = vpack.c.b16 %v3559, %v3558
        %v3590 = vpack.c.b16 %v3561, %v3560
        %v3591 = vpack.c.b16 %v3563, %v3562
        %v3592 = vpack.c.b16 %v3565, %v3564
        %v3593 = vpack.c.b16 %v3567, %v3566
        %v3594 = vpack.c.b16 %v3569, %v3568
        %v3595 = vpack.c.b16 %v3571, %v3570
        %v3596 = vpack.c.b16 %v3573, %v3572
        %v3597 = vpack.c.b16 %v3575, %v3574
        %v3598 = vpack.c.b16 %v3577, %v3576
        %vm3599 = vsmask.f32 5376
        %v3601 = vshrl.u32 %v3578, 16
        %v3603 = vrot.slane %v3601, 2
        %v3604 = vshll.u32 %v3578, 16
        %v3606 = vrot.slane %v3604, 3
        %v3607 = vor.u32 %v3603, %v3606
        %v3609 = vshrl.u32 %v3579, 16
        %v3611 = vrot.slane %v3609, 2
        %v3612 = vshll.u32 %v3579, 16
        %v3614 = vrot.slane %v3612, 3
        %v3615 = vor.u32 %v3611, %v3614
        %v3616 = vsel %vm3599, %v3607, %v3615
        %v3618 = vshrl.u32 %v3580, 16
        %v3620 = vrot.slane %v3618, 2
        %v3621 = vshll.u32 %v3580, 16
        %v3623 = vrot.slane %v3621, 3
        %v3624 = vor.u32 %v3620, %v3623
        %v3625 = vsel %vm3599, %v3615, %v3624
        %v3627 = vshrl.u32 %v3581, 16
        %v3629 = vrot.slane %v3627, 2
        %v3630 = vshll.u32 %v3581, 16
        %v3632 = vrot.slane %v3630, 3
        %v3633 = vor.u32 %v3629, %v3632
        %v3634 = vsel %vm3599, %v3624, %v3633
        %v3636 = vshrl.u32 %v3582, 16
        %v3638 = vrot.slane %v3636, 2
        %v3639 = vshll.u32 %v3582, 16
        %v3641 = vrot.slane %v3639, 3
        %v3642 = vor.u32 %v3638, %v3641
        %v3643 = vsel %vm3599, %v3633, %v3642
        %v3645 = vshrl.u32 %v3583, 16
        %v3647 = vrot.slane %v3645, 2
        %v3648 = vshll.u32 %v3583, 16
        %v3650 = vrot.slane %v3648, 3
        %v3651 = vor.u32 %v3647, %v3650
        %v3652 = vsel %vm3599, %v3642, %v3651
        %v3654 = vshrl.u32 %v3584, 16
        %v3656 = vrot.slane %v3654, 2
        %v3657 = vshll.u32 %v3584, 16
        %v3659 = vrot.slane %v3657, 3
        %v3660 = vor.u32 %v3656, %v3659
        %v3661 = vsel %vm3599, %v3651, %v3660
        %v3663 = vshrl.u32 %v3585, 16
        %v3665 = vrot.slane %v3663, 2
        %v3666 = vshll.u32 %v3585, 16
        %v3668 = vrot.slane %v3666, 3
        %v3669 = vor.u32 %v3665, %v3668
        %v3670 = vsel %vm3599, %v3660, %v3669
        %v3672 = vshrl.u32 %v3586, 16
        %v3674 = vrot.slane %v3672, 2
        %v3675 = vshll.u32 %v3586, 16
        %v3677 = vrot.slane %v3675, 3
        %v3678 = vor.u32 %v3674, %v3677
        %v3679 = vsel %vm3599, %v3669, %v3678
        %v3681 = vshrl.u32 %v3587, 16
        %v3683 = vrot.slane %v3681, 2
        %v3684 = vshll.u32 %v3587, 16
        %v3686 = vrot.slane %v3684, 3
        %v3687 = vor.u32 %v3683, %v3686
        %v3688 = vsel %vm3599, %v3678, %v3687
        %v3690 = vshrl.u32 %v3588, 16
        %v3692 = vrot.slane %v3690, 2
        %v3693 = vshll.u32 %v3588, 16
        %v3695 = vrot.slane %v3693, 3
        %v3696 = vor.u32 %v3692, %v3695
        %v3697 = vsel %vm3599, %v3687, %v3696
        %v3699 = vshrl.u32 %v3589, 16
        %v3701 = vrot.slane %v3699, 2
        %v3702 = vshll.u32 %v3589, 16
        %v3704 = vrot.slane %v3702, 3
        %v3705 = vor.u32 %v3701, %v3704
        %v3706 = vsel %vm3599, %v3696, %v3705
        %v3708 = vshrl.u32 %v3590, 16
        %v3710 = vrot.slane %v3708, 2
        %v3711 = vshll.u32 %v3590, 16
        %v3713 = vrot.slane %v3711, 3
        %v3714 = vor.u32 %v3710, %v3713
        %v3715 = vsel %vm3599, %v3705, %v3714
        %v3717 = vshrl.u32 %v3591, 16
        %v3719 = vrot.slane %v3717, 2
        %v3720 = vshll.u32 %v3591, 16
        %v3722 = vrot.slane %v3720, 3
        %v3723 = vor.u32 %v3719, %v3722
        %v3724 = vsel %vm3599, %v3714, %v3723
        %v3726 = vshrl.u32 %v3592, 16
        %v3728 = vrot.slane %v3726, 2
        %v3729 = vshll.u32 %v3592, 16
        %v3731 = vrot.slane %v3729, 3
        %v3732 = vor.u32 %v3728, %v3731
        %v3733 = vsel %vm3599, %v3723, %v3732
        %v3735 = vshrl.u32 %v3593, 16
        %v3737 = vrot.slane %v3735, 2
        %v3738 = vshll.u32 %v3593, 16
        %v3740 = vrot.slane %v3738, 3
        %v3741 = vor.u32 %v3737, %v3740
        %v3742 = vsel %vm3599, %v3732, %v3741
        %v3744 = vshrl.u32 %v3594, 16
        %v3746 = vrot.slane %v3744, 2
        %v3747 = vshll.u32 %v3594, 16
        %v3749 = vrot.slane %v3747, 3
        %v3750 = vor.u32 %v3746, %v3749
        %v3751 = vsel %vm3599, %v3741, %v3750
        %v3753 = vshrl.u32 %v3595, 16
        %v3755 = vrot.slane %v3753, 2
        %v3756 = vshll.u32 %v3595, 16
        %v3758 = vrot.slane %v3756, 3
        %v3759 = vor.u32 %v3755, %v3758
        %v3760 = vsel %vm3599, %v3750, %v3759
        %v3762 = vshrl.u32 %v3596, 16
        %v3764 = vrot.slane %v3762, 2
        %v3765 = vshll.u32 %v3596, 16
        %v3767 = vrot.slane %v3765, 3
        %v3768 = vor.u32 %v3764, %v3767
        %v3769 = vsel %vm3599, %v3759, %v3768
        %v3771 = vshrl.u32 %v3597, 16
        %v3773 = vrot.slane %v3771, 2
        %v3774 = vshll.u32 %v3597, 16
        %v3776 = vrot.slane %v3774, 3
        %v3777 = vor.u32 %v3773, %v3776
        %v3778 = vsel %vm3599, %v3768, %v3777
        %v3780 = vshrl.u32 %v3598, 16
        %v3782 = vrot.slane %v3780, 2
        %v3783 = vshll.u32 %v3598, 16
        %v3785 = vrot.slane %v3783, 3
        %v3786 = vor.u32 %v3782, %v3785
        %v3787 = vsel %vm3599, %v3777, %v3786
        %v3825 = vunpack.c.l.b16 %v3478
        %v3826 = vunpack.c.l.b16 %v3479
        %v3827 = vunpack.c.l.b16 %v3480
        %v3828 = vunpack.c.l.b16 %v3481
        %v3829 = vunpack.c.l.b16 %v3482
        %v3830 = vunpack.c.l.b16 %v3483
        %v3831 = vunpack.c.l.b16 %v3484
        %v3832 = vunpack.c.l.b16 %v3485
        %v3833 = vunpack.c.l.b16 %v3486
        %v3834 = vunpack.c.l.b16 %v3487
        %v3835 = vunpack.c.l.b16 %v3488
        %v3836 = vunpack.c.l.b16 %v3489
        %v3837 = vunpack.c.l.b16 %v3490
        %v3838 = vunpack.c.l.b16 %v3491
        %v3839 = vunpack.c.l.b16 %v3492
        %v3840 = vunpack.c.l.b16 %v3493
        %v3841 = vpack.c.b16 %v3826, %v3825
        %v3842 = vpack.c.b16 %v3828, %v3827
        %v3843 = vpack.c.b16 %v3830, %v3829
        %v3844 = vpack.c.b16 %v3832, %v3831
        %v3845 = vpack.c.b16 %v3834, %v3833
        %v3846 = vpack.c.b16 %v3836, %v3835
        %v3847 = vpack.c.b16 %v3838, %v3837
        %v3848 = vpack.c.b16 %v3840, %v3839
        %3857 = vmatpush.bf16.msra.mxu0 %v3848
        %3858 = vmatpush.bf16.msra.mxu0 %v3847
        %3859 = vmatpush.bf16.msra.mxu0 %v3846
        %3860 = vmatpush.bf16.msra.mxu0 %v3845
        %3861 = vmatpush.bf16.msra.mxu0 %v3844
        %3862 = vmatpush.bf16.msra.mxu0 %v3843
        %3863 = vmatpush.bf16.msra.mxu0 %v3842
        %3864 = vmatpush.bf16.msra.mxu0 %v3841
        %3865 = vmatmul.bf16.gmra.mxu0 %v3616
        %v3866 = vpop.f32.mrf.mxu0
        %v3867 = vadd.f32 0.0, %v3866
        %v3868 = vpop.f32.mrf.mxu0
        %v3869 = vadd.f32 0.0, %v3868
        %3870 = vmatmul.bf16.gmra.mxu0 %v3625
        %v3871 = vpop.f32.mrf.mxu0
        %v3872 = vadd.f32 0.0, %v3871
        %v3873 = vpop.f32.mrf.mxu0
        %v3874 = vadd.f32 0.0, %v3873
        %3875 = vmatmul.bf16.gmra.mxu0 %v3634
        %v3876 = vpop.f32.mrf.mxu0
        %v3877 = vadd.f32 0.0, %v3876
        %v3878 = vpop.f32.mrf.mxu0
        %v3879 = vadd.f32 0.0, %v3878
        %3880 = vmatmul.bf16.gmra.mxu0 %v3643
        %v3881 = vpop.f32.mrf.mxu0
        %v3882 = vadd.f32 0.0, %v3881
        %v3883 = vpop.f32.mrf.mxu0
        %v3884 = vadd.f32 0.0, %v3883
        %3885 = vmatmul.bf16.gmra.mxu0 %v3652
        %v3886 = vpop.f32.mrf.mxu0
        %v3887 = vadd.f32 0.0, %v3886
        %v3888 = vpop.f32.mrf.mxu0
        %v3889 = vadd.f32 0.0, %v3888
        %3890 = vmatmul.bf16.gmra.mxu0 %v3661
        %v3891 = vpop.f32.mrf.mxu0
        %v3892 = vadd.f32 0.0, %v3891
        %v3893 = vpop.f32.mrf.mxu0
        %v3894 = vadd.f32 0.0, %v3893
        %3895 = vmatmul.bf16.gmra.mxu0 %v3670
        %v3896 = vpop.f32.mrf.mxu0
        %v3897 = vadd.f32 0.0, %v3896
        %v3898 = vpop.f32.mrf.mxu0
        %v3899 = vadd.f32 0.0, %v3898
        %3900 = vmatmul.bf16.gmra.mxu0 %v3679
        %v3901 = vpop.f32.mrf.mxu0
        %v3902 = vadd.f32 0.0, %v3901
        %v3903 = vpop.f32.mrf.mxu0
        %v3904 = vadd.f32 0.0, %v3903
        %3905 = vmatmul.bf16.gmra.mxu0 %v3688
        %v3906 = vpop.f32.mrf.mxu0
        %v3907 = vadd.f32 0.0, %v3906
        %v3908 = vpop.f32.mrf.mxu0
        %v3909 = vadd.f32 0.0, %v3908
        %3910 = vmatmul.bf16.gmra.mxu0 %v3697
        %v3911 = vpop.f32.mrf.mxu0
        %v3912 = vadd.f32 0.0, %v3911
        %v3913 = vpop.f32.mrf.mxu0
        %v3914 = vadd.f32 0.0, %v3913
        %3915 = vmatmul.bf16.gmra.mxu0 %v3706
        %v3916 = vpop.f32.mrf.mxu0
        %v3917 = vadd.f32 0.0, %v3916
        %v3918 = vpop.f32.mrf.mxu0
        %v3919 = vadd.f32 0.0, %v3918
        %3920 = vmatmul.bf16.gmra.mxu0 %v3715
        %v3921 = vpop.f32.mrf.mxu0
        %v3922 = vadd.f32 0.0, %v3921
        %v3923 = vpop.f32.mrf.mxu0
        %v3924 = vadd.f32 0.0, %v3923
        %3925 = vmatmul.bf16.gmra.mxu0 %v3724
        %v3926 = vpop.f32.mrf.mxu0
        %v3927 = vadd.f32 0.0, %v3926
        %v3928 = vpop.f32.mrf.mxu0
        %v3929 = vadd.f32 0.0, %v3928
        %3930 = vmatmul.bf16.gmra.mxu0 %v3733
        %v3931 = vpop.f32.mrf.mxu0
        %v3932 = vadd.f32 0.0, %v3931
        %v3933 = vpop.f32.mrf.mxu0
        %v3934 = vadd.f32 0.0, %v3933
        %3935 = vmatmul.bf16.gmra.mxu0 %v3742
        %v3936 = vpop.f32.mrf.mxu0
        %v3937 = vadd.f32 0.0, %v3936
        %v3938 = vpop.f32.mrf.mxu0
        %v3939 = vadd.f32 0.0, %v3938
        %3940 = vmatmul.bf16.gmra.mxu0 %v3751
        %v3941 = vpop.f32.mrf.mxu0
        %v3942 = vadd.f32 0.0, %v3941
        %v3943 = vpop.f32.mrf.mxu0
        %v3944 = vadd.f32 0.0, %v3943
        %3945 = vmatmul.bf16.gmra.mxu0 %v3760
        %v3946 = vpop.f32.mrf.mxu0
        %v3947 = vadd.f32 0.0, %v3946
        %v3948 = vpop.f32.mrf.mxu0
        %v3949 = vadd.f32 0.0, %v3948
        %3950 = vmatmul.bf16.gmra.mxu0 %v3769
        %v3951 = vpop.f32.mrf.mxu0
        %v3952 = vadd.f32 0.0, %v3951
        %v3953 = vpop.f32.mrf.mxu0
        %v3954 = vadd.f32 0.0, %v3953
        %3955 = vmatmul.bf16.gmra.mxu0 %v3778
        %v3956 = vpop.f32.mrf.mxu0
        %v3957 = vadd.f32 0.0, %v3956
        %v3958 = vpop.f32.mrf.mxu0
        %v3959 = vadd.f32 0.0, %v3958
        %3960 = vmatmul.bf16.gmra.mxu0 %v3787
        %v3961 = vpop.f32.mrf.mxu0
        %v3962 = vadd.f32 0.0, %v3961
        %v3963 = vpop.f32.mrf.mxu0
        %v3964 = vadd.f32 0.0, %v3963
        %3965 = vmatmul.bf16.gmra.mxu0 %v3786
        %v3966 = vpop.f32.mrf.mxu0
        %v3967 = vadd.f32 0.0, %v3966
        %v3968 = vpop.f32.mrf.mxu0
        %3969 = vdwg.mxu0
        %v3970 = vadd.f32 %v3394, %v3867
        %v3971 = vadd.f32 %v3395, %v3869
        %v3972 = vadd.f32 %v3396, %v3872
        %v3973 = vadd.f32 %v3397, %v3874
        %v3974 = vadd.f32 %v3398, %v3877
        %v3975 = vadd.f32 %v3399, %v3879
        %v3976 = vadd.f32 %v3400, %v3882
        %v3977 = vadd.f32 %v3401, %v3884
        %v3978 = vadd.f32 %v3402, %v3887
        %v3979 = vadd.f32 %v3403, %v3889
        %v3980 = vadd.f32 %v3404, %v3892
        %v3981 = vadd.f32 %v3405, %v3894
        %v3982 = vadd.f32 %v3406, %v3897
        %v3983 = vadd.f32 %v3407, %v3899
        %v3984 = vadd.f32 %v3408, %v3902
        %v3985 = vadd.f32 %v3409, %v3904
        %v3986 = vadd.f32 %v3410, %v3907
        %v3987 = vadd.f32 %v3411, %v3909
        %v3988 = vadd.f32 %v3412, %v3912
        %v3989 = vadd.f32 %v3413, %v3914
        %v3990 = vadd.f32 %v3414, %v3917
        %v3991 = vadd.f32 %v3415, %v3919
        %v3992 = vadd.f32 %v3416, %v3922
        %v3993 = vadd.f32 %v3417, %v3924
        %v3994 = vadd.f32 %v3418, %v3927
        %v3995 = vadd.f32 %v3419, %v3929
        %v3996 = vadd.f32 %v3420, %v3932
        %v3997 = vadd.f32 %v3421, %v3934
        %v3998 = vadd.f32 %v3422, %v3937
        %v3999 = vadd.f32 %v3423, %v3939
        %v4000 = vadd.f32 %v3424, %v3942
        %v4001 = vadd.f32 %v3425, %v3944
        %v4002 = vadd.f32 %v3426, %v3947
        %v4003 = vadd.f32 %v3427, %v3949
        %v4004 = vadd.f32 %v3428, %v3952
        %v4005 = vadd.f32 %v3429, %v3954
        %v4006 = vadd.f32 %v3430, %v3957
        %v4007 = vadd.f32 %v3431, %v3959
        %v4008 = vadd.f32 %v3432, %v3962
        %v4009 = vadd.f32 %v3433, %v3964
        %v4010 = vadd.f32 %v3434, %v3967
        %v4011 = vld [vmem:[%s2] sm:$0x1]
        %v4013 = vperm.slane %v4011, 0
        %v4015 = vadd.f32 %v3970, %v4013
        %v4016 = vadd.f32 %v3971, %v4013
        %v4017 = vadd.f32 %v3972, %v4013
        %v4018 = vadd.f32 %v3973, %v4013
        %v4019 = vadd.f32 %v3974, %v4013
        %v4020 = vadd.f32 %v3975, %v4013
        %v4021 = vadd.f32 %v3976, %v4013
        %v4022 = vadd.f32 %v3977, %v4013
        %v4023 = vadd.f32 %v3978, %v4013
        %v4024 = vadd.f32 %v3979, %v4013
        %v4025 = vadd.f32 %v3980, %v4013
        %v4026 = vadd.f32 %v3981, %v4013
        %v4027 = vadd.f32 %v3982, %v4013
        %v4028 = vadd.f32 %v3983, %v4013
        %v4029 = vadd.f32 %v3984, %v4013
        %v4030 = vadd.f32 %v3985, %v4013
        %v4031 = vadd.f32 %v3986, %v4013
        %v4032 = vadd.f32 %v3987, %v4013
        %v4033 = vadd.f32 %v3988, %v4013
        %v4034 = vadd.f32 %v3989, %v4013
        %v4035 = vadd.f32 %v3990, %v4013
        %v4036 = vadd.f32 %v3991, %v4013
        %v4037 = vadd.f32 %v3992, %v4013
        %v4038 = vadd.f32 %v3993, %v4013
        %v4039 = vadd.f32 %v3994, %v4013
        %v4040 = vadd.f32 %v3995, %v4013
        %v4041 = vadd.f32 %v3996, %v4013
        %v4042 = vadd.f32 %v3997, %v4013
        %v4043 = vadd.f32 %v3998, %v4013
        %v4044 = vadd.f32 %v3999, %v4013
        %v4045 = vadd.f32 %v4000, %v4013
        %v4046 = vadd.f32 %v4001, %v4013
        %v4047 = vadd.f32 %v4002, %v4013
        %v4048 = vadd.f32 %v4003, %v4013
        %v4049 = vadd.f32 %v4004, %v4013
        %v4050 = vadd.f32 %v4005, %v4013
        %v4051 = vadd.f32 %v4006, %v4013
        %v4052 = vadd.f32 %v4007, %v4013
        %v4053 = vadd.f32 %v4008, %v4013
        %v4054 = vadd.f32 %v4009, %v4013
        %v4055 = vadd.f32 %v4010, %v4013
        %v4056 = vmax.f32 %v4015, 0.0
        %v4057 = vmax.f32 %v4016, 0.0
        %v4058 = vmax.f32 %v4017, 0.0
        %v4059 = vmax.f32 %v4018, 0.0
        %v4060 = vmax.f32 %v4019, 0.0
        %v4061 = vmax.f32 %v4020, 0.0
        %v4062 = vmax.f32 %v4021, 0.0
        %v4063 = vmax.f32 %v4022, 0.0
        %v4064 = vmax.f32 %v4023, 0.0
        %v4065 = vmax.f32 %v4024, 0.0
        %v4066 = vmax.f32 %v4025, 0.0
        %v4067 = vmax.f32 %v4026, 0.0
        %v4068 = vmax.f32 %v4027, 0.0
        %v4069 = vmax.f32 %v4028, 0.0
        %v4070 = vmax.f32 %v4029, 0.0
        %v4071 = vmax.f32 %v4030, 0.0
        %v4072 = vmax.f32 %v4031, 0.0
        %v4073 = vmax.f32 %v4032, 0.0
        %v4074 = vmax.f32 %v4033, 0.0
        %v4075 = vmax.f32 %v4034, 0.0
        %v4076 = vmax.f32 %v4035, 0.0
        %v4077 = vmax.f32 %v4036, 0.0
        %v4078 = vmax.f32 %v4037, 0.0
        %v4079 = vmax.f32 %v4038, 0.0
        %v4080 = vmax.f32 %v4039, 0.0
        %v4081 = vmax.f32 %v4040, 0.0
        %v4082 = vmax.f32 %v4041, 0.0
        %v4083 = vmax.f32 %v4042, 0.0
        %v4084 = vmax.f32 %v4043, 0.0
        %v4085 = vmax.f32 %v4044, 0.0
        %v4086 = vmax.f32 %v4045, 0.0
        %v4087 = vmax.f32 %v4046, 0.0
        %v4088 = vmax.f32 %v4047, 0.0
        %v4089 = vmax.f32 %v4048, 0.0
        %v4090 = vmax.f32 %v4049, 0.0
        %v4091 = vmax.f32 %v4050, 0.0
        %v4092 = vmax.f32 %v4051, 0.0
        %v4093 = vmax.f32 %v4052, 0.0
        %v4094 = vmax.f32 %v4053, 0.0
        %v4095 = vmax.f32 %v4054, 0.0
        %v4096 = vmax.f32 %v4055, 0.0
        %v4097 = vld [vmem:[%s3] sm:$0xff]
        %v4098 = vld [vmem:[%s3 + $0x8] sm:$0xff]
        %v4099 = vld [vmem:[%s3 + $0x10] sm:$0xff]
        %v4100 = vld [vmem:[%s3 + $0x18] sm:$0xff]
        %v4101 = vld [vmem:[%s3 + $0x20] sm:$0xff]
        %v4102 = vld [vmem:[%s3 + $0x28] sm:$0xff]
        %v4103 = vld [vmem:[%s3 + $0x30] sm:$0xff]
        %v4104 = vld [vmem:[%s3 + $0x38] sm:$0xff]
        %v4105 = vld [vmem:[%s3 + $0x40] sm:$0xff]
        %v4106 = vld [vmem:[%s3 + $0x48] sm:$0xff]
        %v4107 = vld [vmem:[%s3 + $0x50] sm:$0xff]
        %v4108 = vld [vmem:[%s3 + $0x58] sm:$0xff]
        %v4109 = vld [vmem:[%s3 + $0x60] sm:$0xff]
        %v4110 = vld [vmem:[%s3 + $0x68] sm:$0xff]
        %v4111 = vld [vmem:[%s3 + $0x70] sm:$0xff]
        %v4112 = vld [vmem:[%s3 + $0x78] sm:$0xff]
        %v4113 = vld [vmem:[%s3 + $0x80] sm:$0xff]
        %v4114 = vld [vmem:[%s3 + $0x88] sm:$0xff]
        %v4115 = vld [vmem:[%s3 + $0x90] sm:$0xff]
        %v4116 = vld [vmem:[%s3 + $0x98] sm:$0xff]
        %v4117 = vld [vmem:[%s3 + $0xa0] sm:$0xff]
        %v4118 = vld [vmem:[%s3 + $0xa8] sm:$0xff]
        %v4119 = vld [vmem:[%s3 + $0xb0] sm:$0xff]
        %v4120 = vld [vmem:[%s3 + $0xb8] sm:$0xff]
        %v4121 = vld [vmem:[%s3 + $0xc0] sm:$0xff]
        %v4122 = vld [vmem:[%s3 + $0xc8] sm:$0xff]
        %v4123 = vld [vmem:[%s3 + $0xd0] sm:$0xff]
        %v4124 = vld [vmem:[%s3 + $0xd8] sm:$0xff]
        %v4125 = vld [vmem:[%s3 + $0xe0] sm:$0xff]
        %v4126 = vld [vmem:[%s3 + $0xe8] sm:$0xff]
        %v4127 = vld [vmem:[%s3 + $0xf0] sm:$0xff]
        %v4128 = vld [vmem:[%s3 + $0xf8] sm:$0xff]
        %v4129 = vld [vmem:[%s3 + $0x100] sm:$0xff]
        %v4130 = vld [vmem:[%s3 + $0x108] sm:$0xff]
        %v4131 = vld [vmem:[%s3 + $0x110] sm:$0xff]
        %v4132 = vld [vmem:[%s3 + $0x118] sm:$0xff]
        %v4133 = vld [vmem:[%s3 + $0x120] sm:$0xff]
        %v4134 = vld [vmem:[%s3 + $0x128] sm:$0xff]
        %v4135 = vld [vmem:[%s3 + $0x130] sm:$0xff]
        %v4136 = vld [vmem:[%s3 + $0x138] sm:$0xff]
        %v4137 = vld [vmem:[%s3 + $0x140] sm:$0xf]
        %4139 = vset.pattern.permute.xlu0 0
        %4140 = vperm.xlu0 %4139, %v4097
        %v4141 = vpop.permute.xlu0 %4140
        %4144 = vset.pattern.permute.xlu0 0
        %4145 = vperm.xlu0 %4144, %v4098
        %v4146 = vpop.permute.xlu0 %4145
        %4149 = vset.pattern.permute.xlu0 0
        %4150 = vperm.xlu0 %4149, %v4099
        %v4151 = vpop.permute.xlu0 %4150
        %4154 = vset.pattern.permute.xlu0 0
        %4155 = vperm.xlu0 %4154, %v4100
        %v4156 = vpop.permute.xlu0 %4155
        %4159 = vset.pattern.permute.xlu0 0
        %4160 = vperm.xlu0 %4159, %v4101
        %v4161 = vpop.permute.xlu0 %4160
        %4164 = vset.pattern.permute.xlu0 0
        %4165 = vperm.xlu0 %4164, %v4102
        %v4166 = vpop.permute.xlu0 %4165
        %4169 = vset.pattern.permute.xlu0 0
        %4170 = vperm.xlu0 %4169, %v4103
        %v4171 = vpop.permute.xlu0 %4170
        %4174 = vset.pattern.permute.xlu0 0
        %4175 = vperm.xlu0 %4174, %v4104
        %v4176 = vpop.permute.xlu0 %4175
        %4179 = vset.pattern.permute.xlu0 0
        %4180 = vperm.xlu0 %4179, %v4105
        %v4181 = vpop.permute.xlu0 %4180
        %4184 = vset.pattern.permute.xlu0 0
        %4185 = vperm.xlu0 %4184, %v4106
        %v4186 = vpop.permute.xlu0 %4185
        %4189 = vset.pattern.permute.xlu0 0
        %4190 = vperm.xlu0 %4189, %v4107
        %v4191 = vpop.permute.xlu0 %4190
        %4194 = vset.pattern.permute.xlu0 0
        %4195 = vperm.xlu0 %4194, %v4108
        %v4196 = vpop.permute.xlu0 %4195
        %4199 = vset.pattern.permute.xlu0 0
        %4200 = vperm.xlu0 %4199, %v4109
        %v4201 = vpop.permute.xlu0 %4200
        %4204 = vset.pattern.permute.xlu0 0
        %4205 = vperm.xlu0 %4204, %v4110
        %v4206 = vpop.permute.xlu0 %4205
        %4209 = vset.pattern.permute.xlu0 0
        %4210 = vperm.xlu0 %4209, %v4111
        %v4211 = vpop.permute.xlu0 %4210
        %4214 = vset.pattern.permute.xlu0 0
        %4215 = vperm.xlu0 %4214, %v4112
        %v4216 = vpop.permute.xlu0 %4215
        %4219 = vset.pattern.permute.xlu0 0
        %4220 = vperm.xlu0 %4219, %v4113
        %v4221 = vpop.permute.xlu0 %4220
        %4224 = vset.pattern.permute.xlu0 0
        %4225 = vperm.xlu0 %4224, %v4114
        %v4226 = vpop.permute.xlu0 %4225
        %4229 = vset.pattern.permute.xlu0 0
        %4230 = vperm.xlu0 %4229, %v4115
        %v4231 = vpop.permute.xlu0 %4230
        %4234 = vset.pattern.permute.xlu0 0
        %4235 = vperm.xlu0 %4234, %v4116
        %v4236 = vpop.permute.xlu0 %4235
        %4239 = vset.pattern.permute.xlu0 0
        %4240 = vperm.xlu0 %4239, %v4117
        %v4241 = vpop.permute.xlu0 %4240
        %4244 = vset.pattern.permute.xlu0 0
        %4245 = vperm.xlu0 %4244, %v4118
        %v4246 = vpop.permute.xlu0 %4245
        %4249 = vset.pattern.permute.xlu0 0
        %4250 = vperm.xlu0 %4249, %v4119
        %v4251 = vpop.permute.xlu0 %4250
        %4254 = vset.pattern.permute.xlu0 0
        %4255 = vperm.xlu0 %4254, %v4120
        %v4256 = vpop.permute.xlu0 %4255
        %4259 = vset.pattern.permute.xlu0 0
        %4260 = vperm.xlu0 %4259, %v4121
        %v4261 = vpop.permute.xlu0 %4260
        %4264 = vset.pattern.permute.xlu0 0
        %4265 = vperm.xlu0 %4264, %v4122
        %v4266 = vpop.permute.xlu0 %4265
        %4269 = vset.pattern.permute.xlu0 0
        %4270 = vperm.xlu0 %4269, %v4123
        %v4271 = vpop.permute.xlu0 %4270
        %4274 = vset.pattern.permute.xlu0 0
        %4275 = vperm.xlu0 %4274, %v4124
        %v4276 = vpop.permute.xlu0 %4275
        %4279 = vset.pattern.permute.xlu0 0
        %4280 = vperm.xlu0 %4279, %v4125
        %v4281 = vpop.permute.xlu0 %4280
        %4284 = vset.pattern.permute.xlu0 0
        %4285 = vperm.xlu0 %4284, %v4126
        %v4286 = vpop.permute.xlu0 %4285
        %4289 = vset.pattern.permute.xlu0 0
        %4290 = vperm.xlu0 %4289, %v4127
        %v4291 = vpop.permute.xlu0 %4290
        %4294 = vset.pattern.permute.xlu0 0
        %4295 = vperm.xlu0 %4294, %v4128
        %v4296 = vpop.permute.xlu0 %4295
        %4299 = vset.pattern.permute.xlu0 0
        %4300 = vperm.xlu0 %4299, %v4129
        %v4301 = vpop.permute.xlu0 %4300
        %4304 = vset.pattern.permute.xlu0 0
        %4305 = vperm.xlu0 %4304, %v4130
        %v4306 = vpop.permute.xlu0 %4305
        %4309 = vset.pattern.permute.xlu0 0
        %4310 = vperm.xlu0 %4309, %v4131
        %v4311 = vpop.permute.xlu0 %4310
        %4314 = vset.pattern.permute.xlu0 0
        %4315 = vperm.xlu0 %4314, %v4132
        %v4316 = vpop.permute.xlu0 %4315
        %4319 = vset.pattern.permute.xlu0 0
        %4320 = vperm.xlu0 %4319, %v4133
        %v4321 = vpop.permute.xlu0 %4320
        %4324 = vset.pattern.permute.xlu0 0
        %4325 = vperm.xlu0 %4324, %v4134
        %v4326 = vpop.permute.xlu0 %4325
        %4329 = vset.pattern.permute.xlu0 0
        %4330 = vperm.xlu0 %4329, %v4135
        %v4331 = vpop.permute.xlu0 %4330
        %4334 = vset.pattern.permute.xlu0 0
        %4335 = vperm.xlu0 %4334, %v4136
        %v4336 = vpop.permute.xlu0 %4335
        %4339 = vset.pattern.permute.xlu0 0
        %4340 = vperm.xlu0 %4339, %v4137
        %v4341 = vpop.permute.xlu0 %4340
        %v4343 = vmul.f32 %v4056, %v4141
        %v4344 = vmul.f32 %v4057, %v4146
        %v4345 = vmul.f32 %v4058, %v4151
        %v4346 = vmul.f32 %v4059, %v4156
        %v4347 = vmul.f32 %v4060, %v4161
        %v4348 = vmul.f32 %v4061, %v4166
        %v4349 = vmul.f32 %v4062, %v4171
        %v4350 = vmul.f32 %v4063, %v4176
        %v4351 = vmul.f32 %v4064, %v4181
        %v4352 = vmul.f32 %v4065, %v4186
        %v4353 = vmul.f32 %v4066, %v4191
        %v4354 = vmul.f32 %v4067, %v4196
        %v4355 = vmul.f32 %v4068, %v4201
        %v4356 = vmul.f32 %v4069, %v4206
        %v4357 = vmul.f32 %v4070, %v4211
        %v4358 = vmul.f32 %v4071, %v4216
        %v4359 = vmul.f32 %v4072, %v4221
        %v4360 = vmul.f32 %v4073, %v4226
        %v4361 = vmul.f32 %v4074, %v4231
        %v4362 = vmul.f32 %v4075, %v4236
        %v4363 = vmul.f32 %v4076, %v4241
        %v4364 = vmul.f32 %v4077, %v4246
        %v4365 = vmul.f32 %v4078, %v4251
        %v4366 = vmul.f32 %v4079, %v4256
        %v4367 = vmul.f32 %v4080, %v4261
        %v4368 = vmul.f32 %v4081, %v4266
        %v4369 = vmul.f32 %v4082, %v4271
        %v4370 = vmul.f32 %v4083, %v4276
        %v4371 = vmul.f32 %v4084, %v4281
        %v4372 = vmul.f32 %v4085, %v4286
        %v4373 = vmul.f32 %v4086, %v4291
        %v4374 = vmul.f32 %v4087, %v4296
        %v4375 = vmul.f32 %v4088, %v4301
        %v4376 = vmul.f32 %v4089, %v4306
        %v4377 = vmul.f32 %v4090, %v4311
        %v4378 = vmul.f32 %v4091, %v4316
        %v4379 = vmul.f32 %v4092, %v4321
        %v4380 = vmul.f32 %v4093, %v4326
        %v4381 = vmul.f32 %v4094, %v4331
        %v4382 = vmul.f32 %v4095, %v4336
        %v4383 = vmul.f32 %v4096, %v4341
        %4384 = vst [vmem:[%s234] sm:$0xf] 0
        %4385 = vst [vmem:[%s234 + $0x4] sm:$0xf] 0
        %4386 = vst [vmem:[%s234 + $0x8] sm:$0xf] 0
        %4387 = vst [vmem:[%s234 + $0xc] sm:$0x1] 0
        %v4388 = vpack.c.bf16 %v4343, %v4343
        %v4389 = vpack.c.bf16 %v4344, %v4344
        %v4390 = vpack.c.bf16 %v4345, %v4345
        %v4391 = vpack.c.bf16 %v4346, %v4346
        %v4392 = vpack.c.bf16 %v4347, %v4347
        %v4393 = vpack.c.bf16 %v4348, %v4348
        %v4394 = vpack.c.bf16 %v4349, %v4349
        %v4395 = vpack.c.bf16 %v4350, %v4350
        %v4396 = vpack.c.bf16 %v4351, %v4351
        %v4397 = vpack.c.bf16 %v4352, %v4352
        %v4398 = vpack.c.bf16 %v4353, %v4353
        %v4399 = vpack.c.bf16 %v4354, %v4354
        %v4400 = vpack.c.bf16 %v4355, %v4355
        %v4401 = vpack.c.bf16 %v4356, %v4356
        %v4402 = vpack.c.bf16 %v4357, %v4357
        %v4403 = vpack.c.bf16 %v4358, %v4358
        %v4404 = vpack.c.bf16 %v4359, %v4359
        %v4405 = vpack.c.bf16 %v4360, %v4360
        %v4406 = vpack.c.bf16 %v4361, %v4361
        %v4407 = vpack.c.bf16 %v4362, %v4362
        %v4408 = vpack.c.bf16 %v4363, %v4363
        %v4409 = vpack.c.bf16 %v4364, %v4364
        %v4410 = vpack.c.bf16 %v4365, %v4365
        %v4411 = vpack.c.bf16 %v4366, %v4366
        %v4412 = vpack.c.bf16 %v4367, %v4367
        %v4413 = vpack.c.bf16 %v4368, %v4368
        %v4414 = vpack.c.bf16 %v4369, %v4369
        %v4415 = vpack.c.bf16 %v4370, %v4370
        %v4416 = vpack.c.bf16 %v4371, %v4371
        %v4417 = vpack.c.bf16 %v4372, %v4372
        %v4418 = vpack.c.bf16 %v4373, %v4373
        %v4419 = vpack.c.bf16 %v4374, %v4374
        %v4420 = vpack.c.bf16 %v4375, %v4375
        %v4421 = vpack.c.bf16 %v4376, %v4376
        %v4422 = vpack.c.bf16 %v4377, %v4377
        %v4423 = vpack.c.bf16 %v4378, %v4378
        %v4424 = vpack.c.bf16 %v4379, %v4379
        %v4425 = vpack.c.bf16 %v4380, %v4380
        %v4426 = vpack.c.bf16 %v4381, %v4381
        %v4427 = vpack.c.bf16 %v4382, %v4382
        %v4428 = vpack.c.bf16 %v4383, %v4383
        %vm4470 = vcmask 1040384
        %vm4471 = vcmask 1044484
        %vm4472 = vmor %vm4470, %vm4471
        %v4473 = vrot.slane %v4388, 7
        %v4474 = vrot.slane %v4473, 4
        %v4475 = vrot.slane %v4389, 7
        %v4476 = vsel %vm4472, %v4474, %v4475
        %v4477 = vrot.slane %v4475, 4
        %v4478 = vrot.slane %v4390, 7
        %v4479 = vsel %vm4472, %v4477, %v4478
        %v4480 = vrot.slane %v4478, 4
        %v4481 = vrot.slane %v4391, 7
        %v4482 = vsel %vm4472, %v4480, %v4481
        %v4483 = vrot.slane %v4481, 4
        %v4484 = vrot.slane %v4392, 7
        %v4485 = vsel %vm4472, %v4483, %v4484
        %v4486 = vrot.slane %v4484, 4
        %v4487 = vrot.slane %v4393, 7
        %v4488 = vsel %vm4472, %v4486, %v4487
        %v4489 = vrot.slane %v4487, 4
        %v4490 = vrot.slane %v4394, 7
        %v4491 = vsel %vm4472, %v4489, %v4490
        %v4492 = vrot.slane %v4490, 4
        %v4493 = vrot.slane %v4395, 7
        %v4494 = vsel %vm4472, %v4492, %v4493
        %v4495 = vrot.slane %v4493, 4
        %v4496 = vrot.slane %v4396, 7
        %v4497 = vsel %vm4472, %v4495, %v4496
        %v4498 = vrot.slane %v4496, 4
        %v4499 = vrot.slane %v4397, 7
        %v4500 = vsel %vm4472, %v4498, %v4499
        %v4501 = vrot.slane %v4499, 4
        %v4502 = vrot.slane %v4398, 7
        %v4503 = vsel %vm4472, %v4501, %v4502
        %v4504 = vrot.slane %v4502, 4
        %v4505 = vrot.slane %v4399, 7
        %v4506 = vsel %vm4472, %v4504, %v4505
        %v4507 = vrot.slane %v4505, 4
        %v4508 = vrot.slane %v4400, 7
        %v4509 = vsel %vm4472, %v4507, %v4508
        %v4510 = vrot.slane %v4508, 4
        %v4511 = vrot.slane %v4401, 7
        %v4512 = vsel %vm4472, %v4510, %v4511
        %v4513 = vrot.slane %v4511, 4
        %v4514 = vrot.slane %v4402, 7
        %v4515 = vsel %vm4472, %v4513, %v4514
        %v4516 = vrot.slane %v4514, 4
        %v4517 = vrot.slane %v4403, 7
        %v4518 = vsel %vm4472, %v4516, %v4517
        %v4519 = vrot.slane %v4517, 4
        %v4520 = vrot.slane %v4404, 7
        %v4521 = vsel %vm4472, %v4519, %v4520
        %v4522 = vrot.slane %v4520, 4
        %v4523 = vrot.slane %v4405, 7
        %v4524 = vsel %vm4472, %v4522, %v4523
        %v4525 = vrot.slane %v4523, 4
        %v4526 = vrot.slane %v4406, 7
        %v4527 = vsel %vm4472, %v4525, %v4526
        %v4528 = vrot.slane %v4526, 4
        %v4529 = vrot.slane %v4407, 7
        %v4530 = vsel %vm4472, %v4528, %v4529
        %v4531 = vrot.slane %v4529, 4
        %v4532 = vrot.slane %v4408, 7
        %v4533 = vsel %vm4472, %v4531, %v4532
        %v4534 = vrot.slane %v4532, 4
        %v4535 = vrot.slane %v4409, 7
        %v4536 = vsel %vm4472, %v4534, %v4535
        %v4537 = vrot.slane %v4535, 4
        %v4538 = vrot.slane %v4410, 7
        %v4539 = vsel %vm4472, %v4537, %v4538
        %v4540 = vrot.slane %v4538, 4
        %v4541 = vrot.slane %v4411, 7
        %v4542 = vsel %vm4472, %v4540, %v4541
        %v4543 = vrot.slane %v4541, 4
        %v4544 = vrot.slane %v4412, 7
        %v4545 = vsel %vm4472, %v4543, %v4544
        %v4546 = vrot.slane %v4544, 4
        %v4547 = vrot.slane %v4413, 7
        %v4548 = vsel %vm4472, %v4546, %v4547
        %v4549 = vrot.slane %v4547, 4
        %v4550 = vrot.slane %v4414, 7
        %v4551 = vsel %vm4472, %v4549, %v4550
        %v4552 = vrot.slane %v4550, 4
        %v4553 = vrot.slane %v4415, 7
        %v4554 = vsel %vm4472, %v4552, %v4553
        %v4555 = vrot.slane %v4553, 4
        %v4556 = vrot.slane %v4416, 7
        %v4557 = vsel %vm4472, %v4555, %v4556
        %v4558 = vrot.slane %v4556, 4
        %v4559 = vrot.slane %v4417, 7
        %v4560 = vsel %vm4472, %v4558, %v4559
        %v4561 = vrot.slane %v4559, 4
        %v4562 = vrot.slane %v4418, 7
        %v4563 = vsel %vm4472, %v4561, %v4562
        %v4564 = vrot.slane %v4562, 4
        %v4565 = vrot.slane %v4419, 7
        %v4566 = vsel %vm4472, %v4564, %v4565
        %v4567 = vrot.slane %v4565, 4
        %v4568 = vrot.slane %v4420, 7
        %v4569 = vsel %vm4472, %v4567, %v4568
        %v4570 = vrot.slane %v4568, 4
        %v4571 = vrot.slane %v4421, 7
        %v4572 = vsel %vm4472, %v4570, %v4571
        %v4573 = vrot.slane %v4571, 4
        %v4574 = vrot.slane %v4422, 7
        %v4575 = vsel %vm4472, %v4573, %v4574
        %v4576 = vrot.slane %v4574, 4
        %v4577 = vrot.slane %v4423, 7
        %v4578 = vsel %vm4472, %v4576, %v4577
        %v4579 = vrot.slane %v4577, 4
        %v4580 = vrot.slane %v4424, 7
        %v4581 = vsel %vm4472, %v4579, %v4580
        %v4582 = vrot.slane %v4580, 4
        %v4583 = vrot.slane %v4425, 7
        %v4584 = vsel %vm4472, %v4582, %v4583
        %v4585 = vrot.slane %v4583, 4
        %v4586 = vrot.slane %v4426, 7
        %v4587 = vsel %vm4472, %v4585, %v4586
        %v4588 = vrot.slane %v4586, 4
        %v4589 = vrot.slane %v4427, 7
        %v4590 = vsel %vm4472, %v4588, %v4589
        %v4591 = vrot.slane %v4589, 4
        %v4592 = vrot.slane %v4428, 7
        %v4593 = vsel %vm4472, %v4591, %v4592
        %4635 = vst [vmem:[%s234 + $0xc] sm:$0xe] %v4473
        %4636 = vst [vmem:[%s234 + $0x10] sm:$0xf] %v4476
        %4637 = vst [vmem:[%s234 + $0x14] sm:$0xf] %v4479
        %4638 = vst [vmem:[%s234 + $0x18] sm:$0xf] %v4482
        %4639 = vst [vmem:[%s234 + $0x1c] sm:$0xf] %v4485
        %4640 = vst [vmem:[%s234 + $0x20] sm:$0xf] %v4488
        %4641 = vst [vmem:[%s234 + $0x24] sm:$0xf] %v4491
        %4642 = vst [vmem:[%s234 + $0x28] sm:$0xf] %v4494
        %4643 = vst [vmem:[%s234 + $0x2c] sm:$0xf] %v4497
        %4644 = vst [vmem:[%s234 + $0x30] sm:$0xf] %v4500
        %4645 = vst [vmem:[%s234 + $0x34] sm:$0xf] %v4503
        %4646 = vst [vmem:[%s234 + $0x38] sm:$0xf] %v4506
        %4647 = vst [vmem:[%s234 + $0x3c] sm:$0xf] %v4509
        %4648 = vst [vmem:[%s234 + $0x40] sm:$0xf] %v4512
        %4649 = vst [vmem:[%s234 + $0x44] sm:$0xf] %v4515
        %4650 = vst [vmem:[%s234 + $0x48] sm:$0xf] %v4518
        %4651 = vst [vmem:[%s234 + $0x4c] sm:$0xf] %v4521
        %4652 = vst [vmem:[%s234 + $0x50] sm:$0xf] %v4524
        %4653 = vst [vmem:[%s234 + $0x54] sm:$0xf] %v4527
        %4654 = vst [vmem:[%s234 + $0x58] sm:$0xf] %v4530
        %4655 = vst [vmem:[%s234 + $0x5c] sm:$0xf] %v4533
        %4656 = vst [vmem:[%s234 + $0x60] sm:$0xf] %v4536
        %4657 = vst [vmem:[%s234 + $0x64] sm:$0xf] %v4539
        %4658 = vst [vmem:[%s234 + $0x68] sm:$0xf] %v4542
        %4659 = vst [vmem:[%s234 + $0x6c] sm:$0xf] %v4545
        %4660 = vst [vmem:[%s234 + $0x70] sm:$0xf] %v4548
        %4661 = vst [vmem:[%s234 + $0x74] sm:$0xf] %v4551
        %4662 = vst [vmem:[%s234 + $0x78] sm:$0xf] %v4554
        %4663 = vst [vmem:[%s234 + $0x7c] sm:$0xf] %v4557
        %4664 = vst [vmem:[%s234 + $0x80] sm:$0xf] %v4560
        %4665 = vst [vmem:[%s234 + $0x84] sm:$0xf] %v4563
        %4666 = vst [vmem:[%s234 + $0x88] sm:$0xf] %v4566
        %4667 = vst [vmem:[%s234 + $0x8c] sm:$0xf] %v4569
        %4668 = vst [vmem:[%s234 + $0x90] sm:$0xf] %v4572
        %4669 = vst [vmem:[%s234 + $0x94] sm:$0xf] %v4575
        %4670 = vst [vmem:[%s234 + $0x98] sm:$0xf] %v4578
        %4671 = vst [vmem:[%s234 + $0x9c] sm:$0xf] %v4581
        %4672 = vst [vmem:[%s234 + $0xa0] sm:$0xf] %v4584
        %4673 = vst [vmem:[%s234 + $0xa4] sm:$0xf] %v4587
        %4674 = vst [vmem:[%s234 + $0xa8] sm:$0xf] %v4590
        %4675 = vst [vmem:[%s234 + $0xac] sm:$0x7] %v4593
        %4676 = vst [vmem:[%s234 + $0xac] sm:$0x8] 0
        %4677 = vst [vmem:[%s234 + $0xb0] sm:$0xf] 0
        %4678 = vst [vmem:[%s234 + $0xb4] sm:$0xf] 0
        %4679 = vst [vmem:[%s234 + $0xb8] sm:$0xf] 0
        %s4680 = sand.u32 %s119, 1
        %s4681 = scalar_lea.sflag [#allocation4], %s4680
        %s4682 = sand.u32 %s119, 1
        %s4683 = smul.addr %s4682, 188
        %s4684 = scalar_lea.vmem [#allocation7], %s4683
        // Predicated region
        $region45: #{tpu_custom_call.1} parent=35 // pred_check
          %p4685 = pneg %p129
        $region46: #{tpu_custom_call.1} parent=35 // pred_check_branch
          %4687 = sbr.rel (%p4685) target = $region48
        $region47: #{tpu_custom_call.1} parent=35 // pred_region
          %4689 = vsyncadd %s4681, 0
          %s4690 = smul.addr %s22, 47
          %s4691 = smul.addr %s4690, 4
          %s4692 = scalar_lea.hbm %s4, %s4691
          %s4693 = sshll.u32 %s4684, 4
          %s4694 = int_to_ptr.vmem [resolvable:$true] %s4693
          %s4695 = sshll.u32 %s4692, 4
          %s4696 = int_to_ptr.hbm [resolvable:$true] %s4695
          %4701 = dma.vmem_to_hbm [thread:$0]  %s4694, 3008, %s4696, %s4681, 64, 64, 4
        $region48: #{tpu_custom_call.1} parent=35 // pred_fallthru
          _
      $region36: #{tpu_custom_call.1} parent=5 // pred_fallthru
        _
      %p4702 = scmp.le.s32.totalorder 2, %s17
      // Predicated region
      $region49: #{tpu_custom_call.1} parent=5 // pred_check
        %p4703 = pneg %p4702
      $region50: #{tpu_custom_call.1} parent=5 // pred_check_branch
        %4705 = sbr.rel (%p4703) target = $region52
      $region51: #{tpu_custom_call.1} parent=5 // pred_region
        %s4706 = ssub.s32 %s17, 2
        // Predicated region
        $region53: #{tpu_custom_call.1} parent=51 // pred_check
          %p4707 = pneg %p135
        $region54: #{tpu_custom_call.1} parent=51 // pred_check_branch
          %4709 = sbr.rel (%p4707) target = $region56
        $region55: #{tpu_custom_call.1} parent=51 // pred_region
          %s4710 = sand.u32 %s120, 1
          %s4711 = scalar_lea.sflag [#allocation4], %s4710
          %s4712 = sand.u32 %s120, 1
          %s4713 = smul.addr %s4712, 188
          %s4714 = scalar_lea.vmem [#allocation7], %s4713
          %4716 = dma.done %s4711, 3008
        $region56: #{tpu_custom_call.1} parent=51 // pred_fallthru
          _
      $region52: #{tpu_custom_call.1} parent=5 // pred_fallthru
        _
    $region6: #{tpu_custom_call.1} parent=1 // loop_footer
      %s21 = sadd.s32 1, %s17
    $region7: #{tpu_custom_call.1} parent=1 // loop_footer_branch
      %16 = sbr.rel target = $region3
    $region8: #{tpu_custom_call.1} parent=1 // loop_exit
      _
    %4717 = vsyncpa [#allocation3], 1
    %s4718 = scalar_lea.sflag [#allocation3], 1
    %4719 = vsyncpa %s4718, 1
    %4720 = vsyncpa [#allocation6], 1
    %4721 = vsyncpa [#allocation4], 1
    %s4722 = scalar_lea.sflag [#allocation4], 1
    %4723 = vsyncpa %s4722, 1

</llo_original>
